<compile_context>
chip_gen: v7x
topology: tpu7x:2x2x1
jax: 0.10.0
libtpu: 0.0.40
codegen_flags: <defaults>
</compile_context>

<pallas_src>
import math

import jax
import jax.numpy as jnp
from jax.experimental import pallas as pl
from jax.experimental.pallas import tpu as pltpu

P_MAX = 4                      # max dilation of the in-block dilated convs
DILATIONS = (1, 2, 4)
VMEM_LIMIT = 32 * 1024 * 1024  # safe on v5e/v6e (128 MiB) and v7x (64 MiB physical)


def _fold_w(w):
    """(Cout, Cin, K) -> (Cout, K*Cin) matching im2col rows laid out as [k*Cin + c]."""
    cout, cin, k = w.shape
    return jnp.transpose(w, (0, 2, 1)).reshape(cout, k * cin)


# ----------------------------------------------------------------------------
# Pallas kernel 1: fused ConvBlock (optional mixer, optional rate-change, 3 dilated
# residual convs) — intermediates live in VMEM, one MXU contraction per conv stage.
# ----------------------------------------------------------------------------
def _make_block_kernel(n_in, scale, has_rc, k2, t_r):
    def kernel(*refs):
        refs = list(refs)
        x_refs = [refs.pop(0) for _ in range(n_in)]
        if has_rc:
            wrc_ref = refs.pop(0)
            brc_ref = refs.pop(0)
        conv_wb = [(refs.pop(0), refs.pop(0)) for _ in range(3)]
        alpha_ref = refs.pop(0)
        o_ref = refs.pop(0)
        buf_ref = refs.pop(0)                                    # im2col scratch

        alphas = alpha_ref[...]                                  # (n_alpha, 1)
        a_base = 0
        if has_rc:
            # rate-change conv (stride folded by glue-level space-to-depth, K2 taps)
            a = x_refs[0][...]                                   # (Cin*s, Tps)
            a = jnp.where(a >= 0.0, a, a * alphas[0:1, :])       # PReLU applied once
            cin_s = a.shape[0]
            for k in range(k2):                                  # fold taps -> rows
                buf_ref[k * cin_s:(k + 1) * cin_s, 0:t_r] = a[:, k:k + t_r]
            cols = buf_ref[0:k2 * cin_s, 0:t_r]                  # (K2*Cin*s, T)
            cur = (jnp.dot(wrc_ref[...], cols, preferred_element_type=jnp.float32)
                   + brc_ref[...])
            a_base = 1
        else:
            # fused mixer: cur = (sum of inputs) * scale
            cur = x_refs[0][...]
            for xr in x_refs[1:]:
                cur = cur + xr[...]
            if scale != 1.0:
                cur = cur * scale

        c2 = cur.shape[0]
        for si, (d, (w_ref, b_ref)) in enumerate(zip(DILATIONS, conv_wb)):
            act = jnp.where(cur >= 0.0, cur,
                            cur * alphas[a_base + si:a_base + si + 1, :])  # PReLU once
            # im2col: row-block k holds act shifted by (k-1)*d; zero the two border
            # strips of the read window that the shifted stores leave uncovered.
            for k in range(3):
                off = P_MAX - (k - 1) * d
                buf_ref[k * c2:(k + 1) * c2, off:off + t_r] = act
            buf_ref[0:c2, P_MAX:P_MAX + d] = jnp.zeros((c2, d), jnp.float32)
            buf_ref[2 * c2:3 * c2, P_MAX + t_r - d:P_MAX + t_r] = \
                jnp.zeros((c2, d), jnp.float32)
            cols = buf_ref[0:3 * c2, P_MAX:P_MAX + t_r]          # (3*C, T)
            cur = cur + (jnp.dot(w_ref[...], cols, preferred_element_type=jnp.float32)
                         + b_ref[...])
        o_ref[...] = cur.astype(o_ref.dtype)
    return kernel


def conv_block_call(params, inputs, *, scale=1.0, r=None, mode=None):
    """One fused ConvBlock. inputs: list of (B, C, T) arrays (summed+scaled when
    mode is None; exactly one input when mode == 'down')."""
    B = inputs[0].shape[0]
    in_arrays, in_specs, alphas = [], [], []
    has_rc = (mode == "down")

    if has_rc:
        x = inputs[0]
        C, T = x.shape[1], x.shape[2]
        p_rc = params["rate_change"]
        w, b = p_rc["w"], p_rc["b"]
        cout, _, K = w.shape
        assert K % r == 0
        pad = r // 2
        t_r = (T + 2 * pad - K) // r + 1                         # PyTorch conv length
        # zero-pad (PReLU(0)=0 so padding commutes), then space-to-depth the stride
        rpad = pad + ((-(T + 2 * pad)) % r)
        xp = jnp.pad(x, ((0, 0), (0, 0), (pad, rpad)))
        tps = xp.shape[-1] // r
        xs = xp.reshape(B, C, tps, r).transpose(0, 1, 3, 2).reshape(B, C * r, tps)
        k2 = K // r
        ws = w.reshape(cout, C, k2, r).transpose(0, 1, 3, 2).reshape(cout, C * r, k2)
        wrc = _fold_w(ws)                                        # (Cout, K2*C*r)
        cin_s = C * r
        in_arrays += [xs, wrc, b.reshape(cout, 1)]
        in_specs += [pl.BlockSpec((None, cin_s, tps), lambda i: (i, 0, 0)),
                     pl.BlockSpec(wrc.shape, lambda i: (0, 0)),
                     pl.BlockSpec((cout, 1), lambda i: (0, 0))]
        alphas.append(p_rc["alpha"])
        c2 = cout
        n_in = 1
        rc_rows = k2 * cin_s
    else:
        c2, t_r = inputs[0].shape[1], inputs[0].shape[2]
        k2 = 0
        rc_rows = 0
        n_in = len(inputs)
        for xin in inputs:
            in_arrays.append(xin)
            in_specs.append(pl.BlockSpec((None, c2, t_r), lambda i: (i, 0, 0)))

    for p in params["convs"]:
        wf = _fold_w(p["w"])                                     # (C, 3*C)
        in_arrays += [wf, p["b"].reshape(c2, 1)]
        in_specs += [pl.BlockSpec(wf.shape, lambda i: (0, 0)),
                     pl.BlockSpec((c2, 1), lambda i: (0, 0))]
        alphas.append(p["alpha"])

    alpha_arr = jnp.asarray(alphas, jnp.float32).reshape(-1, 1)
    in_arrays.append(alpha_arr)
    in_specs.append(pl.BlockSpec(alpha_arr.shape, lambda i: (0, 0)))

    rows = max(3 * c2, rc_rows)
    return pl.pallas_call(
        _make_block_kernel(n_in, float(scale), has_rc, k2, t_r),
        out_shape=jax.ShapeDtypeStruct((B, c2, t_r), jnp.float32),
        grid=(B,),
        in_specs=in_specs,
        out_specs=pl.BlockSpec((None, c2, t_r), lambda i: (i, 0, 0)),
        scratch_shapes=[pltpu.VMEM((rows, t_r + 2 * P_MAX), jnp.float32)],
        compiler_params=pltpu.CompilerParams(dimension_semantics=("parallel",),
                                             vmem_limit_bytes=VMEM_LIMIT),
    )(*in_arrays)


# ----------------------------------------------------------------------------
# Pallas kernel 2: st_conv = PReLU_Conv with kernel_size == stride (one MXU dot
# after glue-level space-to-depth makes it pointwise over Cin*rate channels).
# ----------------------------------------------------------------------------
def _make_st_kernel(t_r):
    def kernel(x_ref, w_ref, b_ref, a_ref, o_ref):
        a = x_ref[...]
        a = jnp.where(a >= 0.0, a, a * a_ref[...])               # PReLU, (1,1) slope
        o_ref[...] = (jnp.dot(w_ref[...], a[:, 0:t_r],
                              preferred_element_type=jnp.float32)
                      + b_ref[...]).astype(o_ref.dtype)
    return kernel


def st_conv_call(p, x, rate):
    B, C, T = x.shape
    w, b = p["w"], p["b"]
    cout = w.shape[0]
    t_r = (T - rate) // rate + 1
    extra = (-T) % rate
    xp = jnp.pad(x, ((0, 0), (0, 0), (0, extra))) if extra else x
    tps = xp.shape[-1] // rate
    xs = xp.reshape(B, C, tps, rate).transpose(0, 1, 3, 2).reshape(B, C * rate, tps)
    ws = w.reshape(cout, C, 1, rate).transpose(0, 1, 3, 2).reshape(cout, C * rate)
    alpha = jnp.reshape(jnp.asarray(p["alpha"], jnp.float32), (1, 1))
    return pl.pallas_call(
        _make_st_kernel(t_r),
        out_shape=jax.ShapeDtypeStruct((B, cout, t_r), jnp.float32),
        grid=(B,),
        in_specs=[pl.BlockSpec((None, C * rate, tps), lambda i: (i, 0, 0)),
                  pl.BlockSpec(ws.shape, lambda i: (0, 0)),
                  pl.BlockSpec((cout, 1), lambda i: (0, 0)),
                  pl.BlockSpec((1, 1), lambda i: (0, 0))],
        out_specs=pl.BlockSpec((None, cout, t_r), lambda i: (i, 0, 0)),
        compiler_params=pltpu.CompilerParams(dimension_semantics=("parallel",),
                                             vmem_limit_bytes=VMEM_LIMIT),
    )(xs, ws, b.reshape(cout, 1), alpha)


# ----------------------------------------------------------------------------
# Pallas kernel 3: bidirectional GRU layer (PyTorch gate order r, z, n).
# Input projections are precomputed outside; both directions share one fori_loop.
# ----------------------------------------------------------------------------
def _make_bigru_kernel(T, H):
    def kernel(gif_ref, gib_ref, whf_ref, whb_ref, bhnf_ref, bhnb_ref, o_ref):
        whf = whf_ref[...]                                       # (H, 3H), hoisted
        whb = whb_ref[...]
        bhnf = bhnf_ref[...]                                     # (1, H)
        bhnb = bhnb_ref[...]
        B = gif_ref.shape[1]

        def step(i, carry):
            h_f, h_b = carry
            tb = T - 1 - i
            gf = gif_ref[i]                                      # (B, 3H) = r|z|n
            gb = gib_ref[tb]
            hf = jnp.dot(h_f, whf, preferred_element_type=jnp.float32)
            hb = jnp.dot(h_b, whb, preferred_element_type=jnp.float32)
            rf = jax.nn.sigmoid(gf[:, 0:H] + hf[:, 0:H])
            zf = jax.nn.sigmoid(gf[:, H:2 * H] + hf[:, H:2 * H])
            nf = jnp.tanh(gf[:, 2 * H:3 * H] + rf * (hf[:, 2 * H:3 * H] + bhnf))
            h_f = (1.0 - zf) * nf + zf * h_f
            rb = jax.nn.sigmoid(gb[:, 0:H] + hb[:, 0:H])
            zb = jax.nn.sigmoid(gb[:, H:2 * H] + hb[:, H:2 * H])
            nb = jnp.tanh(gb[:, 2 * H:3 * H] + rb * (hb[:, 2 * H:3 * H] + bhnb))
            h_b = (1.0 - zb) * nb + zb * h_b
            o_ref[i, :, 0:H] = h_f
            o_ref[tb, :, H:2 * H] = h_b
            return (h_f, h_b)

        h0 = jnp.zeros((B, H), jnp.float32)
        jax.lax.fori_loop(0, T, step, (h0, h0))
    return kernel


def _bigru_layer(x_tbd, layer_params, H):
    T, B, _ = x_tbd.shape
    gis, whs, bhns = [], [], []
    for (w_ih, w_hh, b_ih, b_hh) in layer_params:                # [fwd, bwd]
        # hoist input projections (and r/z biases) into one big matmul outside the loop
        bias = b_ih + jnp.concatenate([b_hh[:2 * H], jnp.zeros((H,), jnp.float32)])
        gis.append(jnp.einsum("tbd,gd->tbg", x_tbd, w_ih) + bias)   # (T, B, 3H)
        whs.append(w_hh.T)                                          # (H, 3H)
        bhns.append(b_hh[2 * H:3 * H].reshape(1, H))
    vmem = pl.BlockSpec(memory_space=pltpu.MemorySpace.VMEM)
    return pl.pallas_call(
        _make_bigru_kernel(T, H),
        out_shape=jax.ShapeDtypeStruct((T, B, 2 * H), jnp.float32),
        in_specs=[vmem] * 6,
        out_specs=vmem,
        compiler_params=pltpu.CompilerParams(vmem_limit_bytes=VMEM_LIMIT),
    )(gis[0], gis[1], whs[0], whs[1], bhns[0], bhns[1])


def gru_forward(params, x_btd, H):
    """2-layer bidirectional GRU, batch_first, zero initial hidden state."""
    x = jnp.transpose(x_btd, (1, 0, 2))                          # (T, B, D)
    for layer_p in params:
        x = _bigru_layer(x, layer_p, H)
    return jnp.transpose(x, (1, 0, 2))                           # (B, T, 2H)


# ----------------------------------------------------------------------------
# Parameter init (deterministic, synthetic)
# ----------------------------------------------------------------------------
def init_prelu_conv(key, cin, cout, k):
    k1, k2 = jax.random.split(key)
    scale = 1.0 / math.sqrt(cin * k)
    return {"w": jax.random.uniform(k1, (cout, cin, k), jnp.float32, -scale, scale),
            "b": jax.random.uniform(k2, (cout,), jnp.float32, -scale, scale),
            "alpha": jnp.float32(0.25)}            # torch.nn.PReLU default


def init_conv_block(key, c, r=None, mode=None):
    keys = jax.random.split(key, 4)
    p = {}
    if mode == "down":
        p["rate_change"] = init_prelu_conv(keys[0], c, 2 * c, 2 * r)
        cout = 2 * c
    else:
        cout = c
    p["convs"] = [init_prelu_conv(keys[i + 1], cout, cout, 3) for i in range(3)]
    return p


def init_gru(key, input_size, hidden, num_layers=2):
    params = []
    k = 1.0 / math.sqrt(hidden)
    keys = iter(jax.random.split(key, num_layers * 2 * 4))
    for layer in range(num_layers):
        in_sz = input_size if layer == 0 else 2 * hidden
        dirs = []
        for _ in range(2):
            w_ih = jax.random.uniform(next(keys), (3 * hidden, in_sz), jnp.float32, -k, k)
            w_hh = jax.random.uniform(next(keys), (3 * hidden, hidden), jnp.float32, -k, k)
            b_ih = jax.random.uniform(next(keys), (3 * hidden,), jnp.float32, -k, k)
            b_hh = jax.random.uniform(next(keys), (3 * hidden,), jnp.float32, -k, k)
            dirs.append((w_ih, w_hh, b_ih, b_hh))
        params.append(dirs)
    return params


# ----------------------------------------------------------------------------
# ConditionerEncoder
# ----------------------------------------------------------------------------
class ConditionerEncoderPallas:
    def __init__(self, ds_factors, input_channels, key,
                 with_gru_residual=False, with_extra_conv_block=False):
        self.with_gru_residual = with_gru_residual
        self.extra_conv_block = with_extra_conv_block
        c = input_channels
        L = len(ds_factors)
        ki = iter(jax.random.split(key, 3 * L + 8))

        self.ds_blocks = [
            dict(params=init_conv_block(next(ki), c * 2 ** i, r=r, mode="down"),
                 r=r, mode="down")
            for i, r in enumerate(ds_factors)]

        # make_st_convs(ds_factors, input_channels, num_layers=L-1)
        rates = [ds_factors[-1]]
        for r in ds_factors[-2::-1]:
            rates.append(rates[-1] * r)
        rates = rates[::-1]
        num_layers = L - 1
        self.st_convs = []
        for i in range(L):
            if i >= num_layers:
                self.st_convs.append(None)
            else:
                i_chan = input_channels * 2 ** i
                o_chan = input_channels * 2 ** L
                self.st_convs.append(dict(
                    params=init_prelu_conv(next(ki), i_chan, o_chan, rates[i]),
                    stride=rates[i]))

        if self.extra_conv_block:
            self.ds_blocks.append(
                dict(params=init_conv_block(next(ki), c * 2 ** L), r=None, mode=None))
            self.st_convs.append(None)

        oc = input_channels * 2 ** L
        self.oc = oc
        self.hidden = oc // 2
        self.gru_params = init_gru(next(ki), oc, self.hidden, num_layers=2)
        self.cb1 = init_conv_block(next(ki), oc)
        self.cb2 = init_conv_block(next(ki), oc)

        # one jitted forward: all pallas_calls + glue ops compile into one XLA program
        self._forward = jax.jit(self._forward_impl)

    def _forward_impl(self, x, x_mel):
        outputs = []
        for idx, blk in enumerate(self.ds_blocks):
            res = x                                  # residual tap at block input
            x = conv_block_call(blk["params"], [x], r=blk["r"], mode=blk["mode"])
            st = self.st_convs[idx]
            if st is not None:
                outputs.append(st_conv_call(st["params"], res, st["stride"]))
        outputs.append(x)

        norm_factor = 1.0 / math.sqrt(len(outputs) + 1)
        # mixer ((x_mel + sum outputs) * norm) is fused into the cb1 kernel
        out = conv_block_call(self.cb1, [x_mel] + outputs, scale=norm_factor)

        if self.with_gru_residual:
            res = out
        out = gru_forward(self.gru_params, jnp.transpose(out, (0, 2, 1)), self.hidden)
        out = jnp.transpose(out, (0, 2, 1))
        if self.with_gru_residual:
            out = conv_block_call(self.cb2, [out, res], scale=1.0 / math.sqrt(2))
        else:
            out = conv_block_call(self.cb2, [out])
        return out

    def __call__(self, x, x_mel):
        lengths = []
        L = x.shape[-1]
        for blk in self.ds_blocks:
            lengths.append(L)
            if blk["mode"] == "down":
                r = blk["r"]
                L = (L + 2 * (r // 2) - 2 * r) // r + 1
        out = self._forward(x, x_mel)
        return out, lengths[::-1]


if __name__ == "__main__":
    key = jax.random.PRNGKey(0)
    k_param, k_x, k_mel = jax.random.split(key, 3)

    ds_factors = [2, 2]
    input_channels = 4
    B, T = 2, 32
    oc = input_channels * 2 ** len(ds_factors)          # 16
    T_out = T // math.prod(ds_factors)                   # 8

    enc = ConditionerEncoderPallas(ds_factors, input_channels, k_param)

    x = jax.random.normal(k_x, (B, input_channels, T), jnp.float32)
    x_mel = jax.random.normal(k_mel, (B, oc, T_out), jnp.float32)

    out, lengths = enc(x, x_mel)
    out = jax.block_until_ready(out)

    assert out.shape == (B, oc, T_out), out.shape
    assert lengths == [T // ds_factors[0], T], lengths
    assert bool(jnp.all(jnp.isfinite(out)))
    print("KERNEL_OK")
</pallas_src>

<mosaic_0001>
module attributes {stable_mosaic.version = 11 : i64} {
  func.func @kernel(%arg0: i32, %arg1: memref<1x8x17xf32, #tpu.memory_space<vmem>>, %arg2: memref<8x16xf32, #tpu.memory_space<vmem>>, %arg3: memref<8x1xf32, #tpu.memory_space<vmem>>, %arg4: memref<8x24xf32, #tpu.memory_space<vmem>>, %arg5: memref<8x1xf32, #tpu.memory_space<vmem>>, %arg6: memref<8x24xf32, #tpu.memory_space<vmem>>, %arg7: memref<8x1xf32, #tpu.memory_space<vmem>>, %arg8: memref<8x24xf32, #tpu.memory_space<vmem>>, %arg9: memref<8x1xf32, #tpu.memory_space<vmem>>, %arg10: memref<4x1xf32, #tpu.memory_space<vmem>>, %arg11: memref<1x8x16xf32, #tpu.memory_space<vmem>>, %arg12: memref<24x24xf32, #tpu.memory_space<vmem>>) attributes {dimension_semantics = [#tpu.dimension_semantics<parallel>], iteration_bounds = array<i64: 2>, scalar_prefetch = 0 : i64, scratch_operands = 1 : i64, tpu.core_type = #tpu.core_type<tc>, window_params = [{transform_indices = @transform_0, window_bounds = array<i64: 1, 8, 17>}, {pipeline_mode = #tpu.pipeline_mode<synchronous>, transform_indices = @transform_1, window_bounds = array<i64: 8, 16>}, {pipeline_mode = #tpu.pipeline_mode<synchronous>, transform_indices = @transform_2, window_bounds = array<i64: 8, 1>}, {pipeline_mode = #tpu.pipeline_mode<synchronous>, transform_indices = @transform_3, window_bounds = array<i64: 8, 24>}, {pipeline_mode = #tpu.pipeline_mode<synchronous>, transform_indices = @transform_4, window_bounds = array<i64: 8, 1>}, {pipeline_mode = #tpu.pipeline_mode<synchronous>, transform_indices = @transform_5, window_bounds = array<i64: 8, 24>}, {pipeline_mode = #tpu.pipeline_mode<synchronous>, transform_indices = @transform_6, window_bounds = array<i64: 8, 1>}, {pipeline_mode = #tpu.pipeline_mode<synchronous>, transform_indices = @transform_7, window_bounds = array<i64: 8, 24>}, {pipeline_mode = #tpu.pipeline_mode<synchronous>, transform_indices = @transform_8, window_bounds = array<i64: 8, 1>}, {pipeline_mode = #tpu.pipeline_mode<synchronous>, transform_indices = @transform_9, window_bounds = array<i64: 4, 1>}, {transform_indices = @transform_10, window_bounds = array<i64: 1, 8, 16>}]} {
    %c0 = arith.constant 0 : index
    %c0_0 = arith.constant 0 : index
    %0 = vector.load %arg10[%c0, %c0_0] : memref<4x1xf32, #tpu.memory_space<vmem>>, vector<4x1xf32>
    %c0_1 = arith.constant 0 : index
    %c0_2 = arith.constant 0 : index
    %c0_3 = arith.constant 0 : index
    %1 = vector.load %arg1[%c0_1, %c0_2, %c0_3] : memref<1x8x17xf32, #tpu.memory_space<vmem>>, vector<1x8x17xf32>
    %2 = vector.shape_cast %1 : vector<1x8x17xf32> to vector<8x17xf32>
    %cst = arith.constant 0.000000e+00 : f32
    %3 = vector.broadcast %cst : f32 to vector<8x17xf32>
    %4 = arith.cmpf oge, %2, %3 : vector<8x17xf32>
    %5 = vector.extract_strided_slice %0 {offsets = [0, 0], sizes = [1, 1], strides = [1, 1]} : vector<4x1xf32> to vector<1x1xf32>
    %6 = vector.broadcast %5 : vector<1x1xf32> to vector<8x17xf32>
    %7 = arith.mulf %2, %6 : vector<8x17xf32>
    %8 = arith.select %4, %2, %7 : vector<8x17xi1>, vector<8x17xf32>
    %9 = vector.extract_strided_slice %8 {offsets = [0, 0], sizes = [8, 16], strides = [1, 1]} : vector<8x17xf32> to vector<8x16xf32>
    %c0_4 = arith.constant 0 : index
    %c0_5 = arith.constant 0 : index
    %10 = vector.load %arg12[%c0_4, %c0_5] : memref<24x24xf32, #tpu.memory_space<vmem>>, vector<8x16xf32>
    tpu.vector_store %arg12[%c0_4, %c0_5], %9 {strides = array<i32>} : memref<24x24xf32, #tpu.memory_space<vmem>>, vector<8x16xf32>,
    %11 = vector.extract_strided_slice %8 {offsets = [0, 1], sizes = [8, 16], strides = [1, 1]} : vector<8x17xf32> to vector<8x16xf32>
    %c8 = arith.constant 8 : index
    %c0_6 = arith.constant 0 : index
    %12 = vector.load %arg12[%c8, %c0_6] : memref<24x24xf32, #tpu.memory_space<vmem>>, vector<8x16xf32>
    tpu.vector_store %arg12[%c8, %c0_6], %11 {strides = array<i32>} : memref<24x24xf32, #tpu.memory_space<vmem>>, vector<8x16xf32>,
    %c0_7 = arith.constant 0 : index
    %c0_8 = arith.constant 0 : index
    %13 = vector.load %arg12[%c0_7, %c0_8] : memref<24x24xf32, #tpu.memory_space<vmem>>, vector<16x16xf32>
    %c0_9 = arith.constant 0 : index
    %c0_10 = arith.constant 0 : index
    %14 = vector.load %arg2[%c0_9, %c0_10] : memref<8x16xf32, #tpu.memory_space<vmem>>, vector<8x16xf32>
    %cst_11 = arith.constant dense<0.000000e+00> : vector<8x16xf32>
    %15 = tpu.matmul %14, %13, %cst_11 {dimension_numbers = #tpu.dot_dimension_numbers<[1], [0], [0], [1], [0, 0, 1, 1], [], []>} : vector<8x16xf32>, vector<16x16xf32>, vector<8x16xf32> -> vector<8x16xf32>
    %c0_12 = arith.constant 0 : index
    %c0_13 = arith.constant 0 : index
    %16 = vector.load %arg3[%c0_12, %c0_13] : memref<8x1xf32, #tpu.memory_space<vmem>>, vector<8x1xf32>
    %17 = vector.broadcast %16 : vector<8x1xf32> to vector<8x16xf32>
    %18 = arith.addf %15, %17 : vector<8x16xf32>
    %cst_14 = arith.constant 0.000000e+00 : f32
    %19 = vector.broadcast %cst_14 : f32 to vector<8x16xf32>
    %20 = arith.cmpf oge, %18, %19 : vector<8x16xf32>
    %21 = vector.extract_strided_slice %0 {offsets = [1, 0], sizes = [1, 1], strides = [1, 1]} : vector<4x1xf32> to vector<1x1xf32>
    %22 = vector.broadcast %21 : vector<1x1xf32> to vector<8x16xf32>
    %23 = arith.mulf %18, %22 : vector<8x16xf32>
    %24 = arith.select %20, %18, %23 : vector<8x16xi1>, vector<8x16xf32>
    %c0_15 = arith.constant 0 : index
    %c5 = arith.constant 5 : index
    %25 = vector.load %arg12[%c0_15, %c5] : memref<24x24xf32, #tpu.memory_space<vmem>>, vector<8x16xf32>
    tpu.vector_store %arg12[%c0_15, %c5], %24 {strides = array<i32>} : memref<24x24xf32, #tpu.memory_space<vmem>>, vector<8x16xf32>,
    %c8_16 = arith.constant 8 : index
    %c4 = arith.constant 4 : index
    %26 = vector.load %arg12[%c8_16, %c4] : memref<24x24xf32, #tpu.memory_space<vmem>>, vector<8x16xf32>
    tpu.vector_store %arg12[%c8_16, %c4], %24 {strides = array<i32>} : memref<24x24xf32, #tpu.memory_space<vmem>>, vector<8x16xf32>,
    %c16 = arith.constant 16 : index
    %c3 = arith.constant 3 : index
    %27 = vector.load %arg12[%c16, %c3] : memref<24x24xf32, #tpu.memory_space<vmem>>, vector<8x16xf32>
    tpu.vector_store %arg12[%c16, %c3], %24 {strides = array<i32>} : memref<24x24xf32, #tpu.memory_space<vmem>>, vector<8x16xf32>,
    %cst_17 = arith.constant 0.000000e+00 : f32
    %28 = vector.broadcast %cst_17 : f32 to vector<8x1xf32>
    %c0_18 = arith.constant 0 : index
    %c4_19 = arith.constant 4 : index
    %29 = vector.load %arg12[%c0_18, %c4_19] : memref<24x24xf32, #tpu.memory_space<vmem>>, vector<8x1xf32>
    tpu.vector_store %arg12[%c0_18, %c4_19], %28 {strides = array<i32>} : memref<24x24xf32, #tpu.memory_space<vmem>>, vector<8x1xf32>,
    %cst_20 = arith.constant 0.000000e+00 : f32
    %30 = vector.broadcast %cst_20 : f32 to vector<8x1xf32>
    %c16_21 = arith.constant 16 : index
    %c19 = arith.constant 19 : index
    %31 = vector.load %arg12[%c16_21, %c19] : memref<24x24xf32, #tpu.memory_space<vmem>>, vector<8x1xf32>
    tpu.vector_store %arg12[%c16_21, %c19], %30 {strides = array<i32>} : memref<24x24xf32, #tpu.memory_space<vmem>>, vector<8x1xf32>,
    %c0_22 = arith.constant 0 : index
    %c4_23 = arith.constant 4 : index
    %32 = vector.load %arg12[%c0_22, %c4_23] : memref<24x24xf32, #tpu.memory_space<vmem>>, vector<24x16xf32>
    %c0_24 = arith.constant 0 : index
    %c0_25 = arith.constant 0 : index
    %33 = vector.load %arg4[%c0_24, %c0_25] : memref<8x24xf32, #tpu.memory_space<vmem>>, vector<8x24xf32>
    %cst_26 = arith.constant dense<0.000000e+00> : vector<8x16xf32>
    %34 = tpu.matmul %33, %32, %cst_26 {dimension_numbers = #tpu.dot_dimension_numbers<[1], [0], [0], [1], [0, 0, 1, 1], [], []>} : vector<8x24xf32>, vector<24x16xf32>, vector<8x16xf32> -> vector<8x16xf32>
    %c0_27 = arith.constant 0 : index
    %c0_28 = arith.constant 0 : index
    %35 = vector.load %arg5[%c0_27, %c0_28] : memref<8x1xf32, #tpu.memory_space<vmem>>, vector<8x1xf32>
    %36 = vector.broadcast %35 : vector<8x1xf32> to vector<8x16xf32>
    %37 = arith.addf %34, %36 : vector<8x16xf32>
    %38 = arith.addf %18, %37 : vector<8x16xf32>
    %cst_29 = arith.constant 0.000000e+00 : f32
    %39 = vector.broadcast %cst_29 : f32 to vector<8x16xf32>
    %40 = arith.cmpf oge, %38, %39 : vector<8x16xf32>
    %41 = vector.extract_strided_slice %0 {offsets = [2, 0], sizes = [1, 1], strides = [1, 1]} : vector<4x1xf32> to vector<1x1xf32>
    %42 = vector.broadcast %41 : vector<1x1xf32> to vector<8x16xf32>
    %43 = arith.mulf %38, %42 : vector<8x16xf32>
    %44 = arith.select %40, %38, %43 : vector<8x16xi1>, vector<8x16xf32>
    %c0_30 = arith.constant 0 : index
    %c6 = arith.constant 6 : index
    %45 = vector.load %arg12[%c0_30, %c6] : memref<24x24xf32, #tpu.memory_space<vmem>>, vector<8x16xf32>
    tpu.vector_store %arg12[%c0_30, %c6], %44 {strides = array<i32>} : memref<24x24xf32, #tpu.memory_space<vmem>>, vector<8x16xf32>,
    %c8_31 = arith.constant 8 : index
    %c4_32 = arith.constant 4 : index
    %46 = vector.load %arg12[%c8_31, %c4_32] : memref<24x24xf32, #tpu.memory_space<vmem>>, vector<8x16xf32>
    tpu.vector_store %arg12[%c8_31, %c4_32], %44 {strides = array<i32>} : memref<24x24xf32, #tpu.memory_space<vmem>>, vector<8x16xf32>,
    %c16_33 = arith.constant 16 : index
    %c2 = arith.constant 2 : index
    %47 = vector.load %arg12[%c16_33, %c2] : memref<24x24xf32, #tpu.memory_space<vmem>>, vector<8x16xf32>
    tpu.vector_store %arg12[%c16_33, %c2], %44 {strides = array<i32>} : memref<24x24xf32, #tpu.memory_space<vmem>>, vector<8x16xf32>,
    %cst_34 = arith.constant 0.000000e+00 : f32
    %48 = vector.broadcast %cst_34 : f32 to vector<8x2xf32>
    %c0_35 = arith.constant 0 : index
    %c4_36 = arith.constant 4 : index
    %49 = vector.load %arg12[%c0_35, %c4_36] : memref<24x24xf32, #tpu.memory_space<vmem>>, vector<8x2xf32>
    tpu.vector_store %arg12[%c0_35, %c4_36], %48 {strides = array<i32>} : memref<24x24xf32, #tpu.memory_space<vmem>>, vector<8x2xf32>,
    %cst_37 = arith.constant 0.000000e+00 : f32
    %50 = vector.broadcast %cst_37 : f32 to vector<8x2xf32>
    %c16_38 = arith.constant 16 : index
    %c18 = arith.constant 18 : index
    %51 = vector.load %arg12[%c16_38, %c18] : memref<24x24xf32, #tpu.memory_space<vmem>>, vector<8x2xf32>
    tpu.vector_store %arg12[%c16_38, %c18], %50 {strides = array<i32>} : memref<24x24xf32, #tpu.memory_space<vmem>>, vector<8x2xf32>,
    %c0_39 = arith.constant 0 : index
    %c4_40 = arith.constant 4 : index
    %52 = vector.load %arg12[%c0_39, %c4_40] : memref<24x24xf32, #tpu.memory_space<vmem>>, vector<24x16xf32>
    %c0_41 = arith.constant 0 : index
    %c0_42 = arith.constant 0 : index
    %53 = vector.load %arg6[%c0_41, %c0_42] : memref<8x24xf32, #tpu.memory_space<vmem>>, vector<8x24xf32>
    %cst_43 = arith.constant dense<0.000000e+00> : vector<8x16xf32>
    %54 = tpu.matmul %53, %52, %cst_43 {dimension_numbers = #tpu.dot_dimension_numbers<[1], [0], [0], [1], [0, 0, 1, 1], [], []>} : vector<8x24xf32>, vector<24x16xf32>, vector<8x16xf32> -> vector<8x16xf32>
    %c0_44 = arith.constant 0 : index
    %c0_45 = arith.constant 0 : index
    %55 = vector.load %arg7[%c0_44, %c0_45] : memref<8x1xf32, #tpu.memory_space<vmem>>, vector<8x1xf32>
    %56 = vector.broadcast %55 : vector<8x1xf32> to vector<8x16xf32>
    %57 = arith.addf %54, %56 : vector<8x16xf32>
    %58 = arith.addf %38, %57 : vector<8x16xf32>
    %cst_46 = arith.constant 0.000000e+00 : f32
    %59 = vector.broadcast %cst_46 : f32 to vector<8x16xf32>
    %60 = arith.cmpf oge, %58, %59 : vector<8x16xf32>
    %61 = vector.extract_strided_slice %0 {offsets = [3, 0], sizes = [1, 1], strides = [1, 1]} : vector<4x1xf32> to vector<1x1xf32>
    %62 = vector.broadcast %61 : vector<1x1xf32> to vector<8x16xf32>
    %63 = arith.mulf %58, %62 : vector<8x16xf32>
    %64 = arith.select %60, %58, %63 : vector<8x16xi1>, vector<8x16xf32>
    %c0_47 = arith.constant 0 : index
    %c8_48 = arith.constant 8 : index
    %65 = vector.load %arg12[%c0_47, %c8_48] : memref<24x24xf32, #tpu.memory_space<vmem>>, vector<8x16xf32>
    tpu.vector_store %arg12[%c0_47, %c8_48], %64 {strides = array<i32>} : memref<24x24xf32, #tpu.memory_space<vmem>>, vector<8x16xf32>,
    %c8_49 = arith.constant 8 : index
    %c4_50 = arith.constant 4 : index
    %66 = vector.load %arg12[%c8_49, %c4_50] : memref<24x24xf32, #tpu.memory_space<vmem>>, vector<8x16xf32>
    tpu.vector_store %arg12[%c8_49, %c4_50], %64 {strides = array<i32>} : memref<24x24xf32, #tpu.memory_space<vmem>>, vector<8x16xf32>,
    %c16_51 = arith.constant 16 : index
    %c0_52 = arith.constant 0 : index
    %67 = vector.load %arg12[%c16_51, %c0_52] : memref<24x24xf32, #tpu.memory_space<vmem>>, vector<8x16xf32>
    tpu.vector_store %arg12[%c16_51, %c0_52], %64 {strides = array<i32>} : memref<24x24xf32, #tpu.memory_space<vmem>>, vector<8x16xf32>,
    %cst_53 = arith.constant 0.000000e+00 : f32
    %68 = vector.broadcast %cst_53 : f32 to vector<8x4xf32>
    %c0_54 = arith.constant 0 : index
    %c4_55 = arith.constant 4 : index
    %69 = vector.load %arg12[%c0_54, %c4_55] : memref<24x24xf32, #tpu.memory_space<vmem>>, vector<8x4xf32>
    tpu.vector_store %arg12[%c0_54, %c4_55], %68 {strides = array<i32>} : memref<24x24xf32, #tpu.memory_space<vmem>>, vector<8x4xf32>,
    %cst_56 = arith.constant 0.000000e+00 : f32
    %70 = vector.broadcast %cst_56 : f32 to vector<8x4xf32>
    %c16_57 = arith.constant 16 : index
    %c16_58 = arith.constant 16 : index
    %71 = vector.load %arg12[%c16_57, %c16_58] : memref<24x24xf32, #tpu.memory_space<vmem>>, vector<8x4xf32>
    tpu.vector_store %arg12[%c16_57, %c16_58], %70 {strides = array<i32>} : memref<24x24xf32, #tpu.memory_space<vmem>>, vector<8x4xf32>,
    %c0_59 = arith.constant 0 : index
    %c4_60 = arith.constant 4 : index
    %72 = vector.load %arg12[%c0_59, %c4_60] : memref<24x24xf32, #tpu.memory_space<vmem>>, vector<24x16xf32>
    %c0_61 = arith.constant 0 : index
    %c0_62 = arith.constant 0 : index
    %73 = vector.load %arg8[%c0_61, %c0_62] : memref<8x24xf32, #tpu.memory_space<vmem>>, vector<8x24xf32>
    %cst_63 = arith.constant dense<0.000000e+00> : vector<8x16xf32>
    %74 = tpu.matmul %73, %72, %cst_63 {dimension_numbers = #tpu.dot_dimension_numbers<[1], [0], [0], [1], [0, 0, 1, 1], [], []>} : vector<8x24xf32>, vector<24x16xf32>, vector<8x16xf32> -> vector<8x16xf32>
    %c0_64 = arith.constant 0 : index
    %c0_65 = arith.constant 0 : index
    %75 = vector.load %arg9[%c0_64, %c0_65] : memref<8x1xf32, #tpu.memory_space<vmem>>, vector<8x1xf32>
    %76 = vector.broadcast %75 : vector<8x1xf32> to vector<8x16xf32>
    %77 = arith.addf %74, %76 : vector<8x16xf32>
    %78 = arith.addf %58, %77 : vector<8x16xf32>
    %c0_66 = arith.constant 0 : index
    %c0_67 = arith.constant 0 : index
    %c0_68 = arith.constant 0 : index
    %79 = vector.load %arg11[%c0_66, %c0_67, %c0_68] : memref<1x8x16xf32, #tpu.memory_space<vmem>>, vector<1x8x16xf32>
    %80 = vector.shape_cast %79 : vector<1x8x16xf32> to vector<8x16xf32>
    %81 = vector.shape_cast %78 : vector<8x16xf32> to vector<1x8x16xf32>
    tpu.vector_store %arg11[%c0_66, %c0_67, %c0_68], %81 {strides = array<i32>} : memref<1x8x16xf32, #tpu.memory_space<vmem>>, vector<1x8x16xf32>,
    return
  }
  func.func @transform_0(%arg0: i32) -> (i32, i32, i32) {
    %c0_i32 = arith.constant 0 : i32
    %c0_i32_0 = arith.constant 0 : i32
    %c0_i32_1 = arith.constant 0 : i32
    return %arg0, %c0_i32, %c0_i32_0 : i32, i32, i32
  }
  func.func @transform_1(%arg0: i32) -> (i32, i32) {
    %c0_i32 = arith.constant 0 : i32
    %c0_i32_0 = arith.constant 0 : i32
    %c0_i32_1 = arith.constant 0 : i32
    return %c0_i32, %c0_i32_0 : i32, i32
  }
  func.func @transform_2(%arg0: i32) -> (i32, i32) {
    %c0_i32 = arith.constant 0 : i32
    %c0_i32_0 = arith.constant 0 : i32
    %c0_i32_1 = arith.constant 0 : i32
    return %c0_i32, %c0_i32_0 : i32, i32
  }
  func.func @transform_3(%arg0: i32) -> (i32, i32) {
    %c0_i32 = arith.constant 0 : i32
    %c0_i32_0 = arith.constant 0 : i32
    %c0_i32_1 = arith.constant 0 : i32
    return %c0_i32, %c0_i32_0 : i32, i32
  }
  func.func @transform_4(%arg0: i32) -> (i32, i32) {
    %c0_i32 = arith.constant 0 : i32
    %c0_i32_0 = arith.constant 0 : i32
    %c0_i32_1 = arith.constant 0 : i32
    return %c0_i32, %c0_i32_0 : i32, i32
  }
  func.func @transform_5(%arg0: i32) -> (i32, i32) {
    %c0_i32 = arith.constant 0 : i32
    %c0_i32_0 = arith.constant 0 : i32
    %c0_i32_1 = arith.constant 0 : i32
    return %c0_i32, %c0_i32_0 : i32, i32
  }
  func.func @transform_6(%arg0: i32) -> (i32, i32) {
    %c0_i32 = arith.constant 0 : i32
    %c0_i32_0 = arith.constant 0 : i32
    %c0_i32_1 = arith.constant 0 : i32
    return %c0_i32, %c0_i32_0 : i32, i32
  }
  func.func @transform_7(%arg0: i32) -> (i32, i32) {
    %c0_i32 = arith.constant 0 : i32
    %c0_i32_0 = arith.constant 0 : i32
    %c0_i32_1 = arith.constant 0 : i32
    return %c0_i32, %c0_i32_0 : i32, i32
  }
  func.func @transform_8(%arg0: i32) -> (i32, i32) {
    %c0_i32 = arith.constant 0 : i32
    %c0_i32_0 = arith.constant 0 : i32
    %c0_i32_1 = arith.constant 0 : i32
    return %c0_i32, %c0_i32_0 : i32, i32
  }
  func.func @transform_9(%arg0: i32) -> (i32, i32) {
    %c0_i32 = arith.constant 0 : i32
    %c0_i32_0 = arith.constant 0 : i32
    %c0_i32_1 = arith.constant 0 : i32
    return %c0_i32, %c0_i32_0 : i32, i32
  }
  func.func @transform_10(%arg0: i32) -> (i32, i32, i32) {
    %c0_i32 = arith.constant 0 : i32
    %c0_i32_0 = arith.constant 0 : i32
    %c0_i32_1 = arith.constant 0 : i32
    return %arg0, %c0_i32, %c0_i32_0 : i32, i32, i32
  }
}

module attributes {stable_mosaic.version = 11 : i64} {
  func.func @kernel(%arg0: i32, %arg1: memref<1x16x9xf32, #tpu.memory_space<vmem>>, %arg2: memref<16x32xf32, #tpu.memory_space<vmem>>, %arg3: memref<16x1xf32, #tpu.memory_space<vmem>>, %arg4: memref<16x48xf32, #tpu.memory_space<vmem>>, %arg5: memref<16x1xf32, #tpu.memory_space<vmem>>, %arg6: memref<16x48xf32, #tpu.memory_space<vmem>>, %arg7: memref<16x1xf32, #tpu.memory_space<vmem>>, %arg8: memref<16x48xf32, #tpu.memory_space<vmem>>, %arg9: memref<16x1xf32, #tpu.memory_space<vmem>>, %arg10: memref<4x1xf32, #tpu.memory_space<vmem>>, %arg11: memref<1x16x8xf32, #tpu.memory_space<vmem>>, %arg12: memref<48x16xf32, #tpu.memory_space<vmem>>) attributes {dimension_semantics = [#tpu.dimension_semantics<parallel>], iteration_bounds = array<i64: 2>, scalar_prefetch = 0 : i64, scratch_operands = 1 : i64, tpu.core_type = #tpu.core_type<tc>, window_params = [{transform_indices = @transform_0, window_bounds = array<i64: 1, 16, 9>}, {pipeline_mode = #tpu.pipeline_mode<synchronous>, transform_indices = @transform_1, window_bounds = array<i64: 16, 32>}, {pipeline_mode = #tpu.pipeline_mode<synchronous>, transform_indices = @transform_2, window_bounds = array<i64: 16, 1>}, {pipeline_mode = #tpu.pipeline_mode<synchronous>, transform_indices = @transform_3, window_bounds = array<i64: 16, 48>}, {pipeline_mode = #tpu.pipeline_mode<synchronous>, transform_indices = @transform_4, window_bounds = array<i64: 16, 1>}, {pipeline_mode = #tpu.pipeline_mode<synchronous>, transform_indices = @transform_5, window_bounds = array<i64: 16, 48>}, {pipeline_mode = #tpu.pipeline_mode<synchronous>, transform_indices = @transform_6, window_bounds = array<i64: 16, 1>}, {pipeline_mode = #tpu.pipeline_mode<synchronous>, transform_indices = @transform_7, window_bounds = array<i64: 16, 48>}, {pipeline_mode = #tpu.pipeline_mode<synchronous>, transform_indices = @transform_8, window_bounds = array<i64: 16, 1>}, {pipeline_mode = #tpu.pipeline_mode<synchronous>, transform_indices = @transform_9, window_bounds = array<i64: 4, 1>}, {transform_indices = @transform_10, window_bounds = array<i64: 1, 16, 8>}]} {
    %c0 = arith.constant 0 : index
    %c0_0 = arith.constant 0 : index
    %0 = vector.load %arg10[%c0, %c0_0] : memref<4x1xf32, #tpu.memory_space<vmem>>, vector<4x1xf32>
    %c0_1 = arith.constant 0 : index
    %c0_2 = arith.constant 0 : index
    %c0_3 = arith.constant 0 : index
    %1 = vector.load %arg1[%c0_1, %c0_2, %c0_3] : memref<1x16x9xf32, #tpu.memory_space<vmem>>, vector<1x16x9xf32>
    %2 = vector.shape_cast %1 : vector<1x16x9xf32> to vector<16x9xf32>
    %cst = arith.constant 0.000000e+00 : f32
    %3 = vector.broadcast %cst : f32 to vector<16x9xf32>
    %4 = arith.cmpf oge, %2, %3 : vector<16x9xf32>
    %5 = vector.extract_strided_slice %0 {offsets = [0, 0], sizes = [1, 1], strides = [1, 1]} : vector<4x1xf32> to vector<1x1xf32>
    %6 = vector.broadcast %5 : vector<1x1xf32> to vector<16x9xf32>
    %7 = arith.mulf %2, %6 : vector<16x9xf32>
    %8 = arith.select %4, %2, %7 : vector<16x9xi1>, vector<16x9xf32>
    %9 = vector.extract_strided_slice %8 {offsets = [0, 0], sizes = [16, 8], strides = [1, 1]} : vector<16x9xf32> to vector<16x8xf32>
    %c0_4 = arith.constant 0 : index
    %c0_5 = arith.constant 0 : index
    %10 = vector.load %arg12[%c0_4, %c0_5] : memref<48x16xf32, #tpu.memory_space<vmem>>, vector<16x8xf32>
    tpu.vector_store %arg12[%c0_4, %c0_5], %9 {strides = array<i32>} : memref<48x16xf32, #tpu.memory_space<vmem>>, vector<16x8xf32>,
    %11 = vector.extract_strided_slice %8 {offsets = [0, 1], sizes = [16, 8], strides = [1, 1]} : vector<16x9xf32> to vector<16x8xf32>
    %c16 = arith.constant 16 : index
    %c0_6 = arith.constant 0 : index
    %12 = vector.load %arg12[%c16, %c0_6] : memref<48x16xf32, #tpu.memory_space<vmem>>, vector<16x8xf32>
    tpu.vector_store %arg12[%c16, %c0_6], %11 {strides = array<i32>} : memref<48x16xf32, #tpu.memory_space<vmem>>, vector<16x8xf32>,
    %c0_7 = arith.constant 0 : index
    %c0_8 = arith.constant 0 : index
    %13 = vector.load %arg12[%c0_7, %c0_8] : memref<48x16xf32, #tpu.memory_space<vmem>>, vector<32x8xf32>
    %c0_9 = arith.constant 0 : index
    %c0_10 = arith.constant 0 : index
    %14 = vector.load %arg2[%c0_9, %c0_10] : memref<16x32xf32, #tpu.memory_space<vmem>>, vector<16x32xf32>
    %cst_11 = arith.constant dense<0.000000e+00> : vector<16x8xf32>
    %15 = tpu.matmul %14, %13, %cst_11 {dimension_numbers = #tpu.dot_dimension_numbers<[1], [0], [0], [1], [0, 0, 1, 1], [], []>} : vector<16x32xf32>, vector<32x8xf32>, vector<16x8xf32> -> vector<16x8xf32>
    %c0_12 = arith.constant 0 : index
    %c0_13 = arith.constant 0 : index
    %16 = vector.load %arg3[%c0_12, %c0_13] : memref<16x1xf32, #tpu.memory_space<vmem>>, vector<16x1xf32>
    %17 = vector.broadcast %16 : vector<16x1xf32> to vector<16x8xf32>
    %18 = arith.addf %15, %17 : vector<16x8xf32>
    %cst_14 = arith.constant 0.000000e+00 : f32
    %19 = vector.broadcast %cst_14 : f32 to vector<16x8xf32>
    %20 = arith.cmpf oge, %18, %19 : vector<16x8xf32>
    %21 = vector.extract_strided_slice %0 {offsets = [1, 0], sizes = [1, 1], strides = [1, 1]} : vector<4x1xf32> to vector<1x1xf32>
    %22 = vector.broadcast %21 : vector<1x1xf32> to vector<16x8xf32>
    %23 = arith.mulf %18, %22 : vector<16x8xf32>
    %24 = arith.select %20, %18, %23 : vector<16x8xi1>, vector<16x8xf32>
    %c0_15 = arith.constant 0 : index
    %c5 = arith.constant 5 : index
    %25 = vector.load %arg12[%c0_15, %c5] : memref<48x16xf32, #tpu.memory_space<vmem>>, vector<16x8xf32>
    tpu.vector_store %arg12[%c0_15, %c5], %24 {strides = array<i32>} : memref<48x16xf32, #tpu.memory_space<vmem>>, vector<16x8xf32>,
    %c16_16 = arith.constant 16 : index
    %c4 = arith.constant 4 : index
    %26 = vector.load %arg12[%c16_16, %c4] : memref<48x16xf32, #tpu.memory_space<vmem>>, vector<16x8xf32>
    tpu.vector_store %arg12[%c16_16, %c4], %24 {strides = array<i32>} : memref<48x16xf32, #tpu.memory_space<vmem>>, vector<16x8xf32>,
    %c32 = arith.constant 32 : index
    %c3 = arith.constant 3 : index
    %27 = vector.load %arg12[%c32, %c3] : memref<48x16xf32, #tpu.memory_space<vmem>>, vector<16x8xf32>
    tpu.vector_store %arg12[%c32, %c3], %24 {strides = array<i32>} : memref<48x16xf32, #tpu.memory_space<vmem>>, vector<16x8xf32>,
    %cst_17 = arith.constant 0.000000e+00 : f32
    %28 = vector.broadcast %cst_17 : f32 to vector<16x1xf32>
    %c0_18 = arith.constant 0 : index
    %c4_19 = arith.constant 4 : index
    %29 = vector.load %arg12[%c0_18, %c4_19] : memref<48x16xf32, #tpu.memory_space<vmem>>, vector<16x1xf32>
    tpu.vector_store %arg12[%c0_18, %c4_19], %28 {strides = array<i32>} : memref<48x16xf32, #tpu.memory_space<vmem>>, vector<16x1xf32>,
    %cst_20 = arith.constant 0.000000e+00 : f32
    %30 = vector.broadcast %cst_20 : f32 to vector<16x1xf32>
    %c32_21 = arith.constant 32 : index
    %c11 = arith.constant 11 : index
    %31 = vector.load %arg12[%c32_21, %c11] : memref<48x16xf32, #tpu.memory_space<vmem>>, vector<16x1xf32>
    tpu.vector_store %arg12[%c32_21, %c11], %30 {strides = array<i32>} : memref<48x16xf32, #tpu.memory_space<vmem>>, vector<16x1xf32>,
    %c0_22 = arith.constant 0 : index
    %c4_23 = arith.constant 4 : index
    %32 = vector.load %arg12[%c0_22, %c4_23] : memref<48x16xf32, #tpu.memory_space<vmem>>, vector<48x8xf32>
    %c0_24 = arith.constant 0 : index
    %c0_25 = arith.constant 0 : index
    %33 = vector.load %arg4[%c0_24, %c0_25] : memref<16x48xf32, #tpu.memory_space<vmem>>, vector<16x48xf32>
    %cst_26 = arith.constant dense<0.000000e+00> : vector<16x8xf32>
    %34 = tpu.matmul %33, %32, %cst_26 {dimension_numbers = #tpu.dot_dimension_numbers<[1], [0], [0], [1], [0, 0, 1, 1], [], []>} : vector<16x48xf32>, vector<48x8xf32>, vector<16x8xf32> -> vector<16x8xf32>
    %c0_27 = arith.constant 0 : index
    %c0_28 = arith.constant 0 : index
    %35 = vector.load %arg5[%c0_27, %c0_28] : memref<16x1xf32, #tpu.memory_space<vmem>>, vector<16x1xf32>
    %36 = vector.broadcast %35 : vector<16x1xf32> to vector<16x8xf32>
    %37 = arith.addf %34, %36 : vector<16x8xf32>
    %38 = arith.addf %18, %37 : vector<16x8xf32>
    %cst_29 = arith.constant 0.000000e+00 : f32
    %39 = vector.broadcast %cst_29 : f32 to vector<16x8xf32>
    %40 = arith.cmpf oge, %38, %39 : vector<16x8xf32>
    %41 = vector.extract_strided_slice %0 {offsets = [2, 0], sizes = [1, 1], strides = [1, 1]} : vector<4x1xf32> to vector<1x1xf32>
    %42 = vector.broadcast %41 : vector<1x1xf32> to vector<16x8xf32>
    %43 = arith.mulf %38, %42 : vector<16x8xf32>
    %44 = arith.select %40, %38, %43 : vector<16x8xi1>, vector<16x8xf32>
    %c0_30 = arith.constant 0 : index
    %c6 = arith.constant 6 : index
    %45 = vector.load %arg12[%c0_30, %c6] : memref<48x16xf32, #tpu.memory_space<vmem>>, vector<16x8xf32>
    tpu.vector_store %arg12[%c0_30, %c6], %44 {strides = array<i32>} : memref<48x16xf32, #tpu.memory_space<vmem>>, vector<16x8xf32>,
    %c16_31 = arith.constant 16 : index
    %c4_32 = arith.constant 4 : index
    %46 = vector.load %arg12[%c16_31, %c4_32] : memref<48x16xf32, #tpu.memory_space<vmem>>, vector<16x8xf32>
    tpu.vector_store %arg12[%c16_31, %c4_32], %44 {strides = array<i32>} : memref<48x16xf32, #tpu.memory_space<vmem>>, vector<16x8xf32>,
    %c32_33 = arith.constant 32 : index
    %c2 = arith.constant 2 : index
    %47 = vector.load %arg12[%c32_33, %c2] : memref<48x16xf32, #tpu.memory_space<vmem>>, vector<16x8xf32>
    tpu.vector_store %arg12[%c32_33, %c2], %44 {strides = array<i32>} : memref<48x16xf32, #tpu.memory_space<vmem>>, vector<16x8xf32>,
    %cst_34 = arith.constant 0.000000e+00 : f32
    %48 = vector.broadcast %cst_34 : f32 to vector<16x2xf32>
    %c0_35 = arith.constant 0 : index
    %c4_36 = arith.constant 4 : index
    %49 = vector.load %arg12[%c0_35, %c4_36] : memref<48x16xf32, #tpu.memory_space<vmem>>, vector<16x2xf32>
    tpu.vector_store %arg12[%c0_35, %c4_36], %48 {strides = array<i32>} : memref<48x16xf32, #tpu.memory_space<vmem>>, vector<16x2xf32>,
    %cst_37 = arith.constant 0.000000e+00 : f32
    %50 = vector.broadcast %cst_37 : f32 to vector<16x2xf32>
    %c32_38 = arith.constant 32 : index
    %c10 = arith.constant 10 : index
    %51 = vector.load %arg12[%c32_38, %c10] : memref<48x16xf32, #tpu.memory_space<vmem>>, vector<16x2xf32>
    tpu.vector_store %arg12[%c32_38, %c10], %50 {strides = array<i32>} : memref<48x16xf32, #tpu.memory_space<vmem>>, vector<16x2xf32>,
    %c0_39 = arith.constant 0 : index
    %c4_40 = arith.constant 4 : index
    %52 = vector.load %arg12[%c0_39, %c4_40] : memref<48x16xf32, #tpu.memory_space<vmem>>, vector<48x8xf32>
    %c0_41 = arith.constant 0 : index
    %c0_42 = arith.constant 0 : index
    %53 = vector.load %arg6[%c0_41, %c0_42] : memref<16x48xf32, #tpu.memory_space<vmem>>, vector<16x48xf32>
    %cst_43 = arith.constant dense<0.000000e+00> : vector<16x8xf32>
    %54 = tpu.matmul %53, %52, %cst_43 {dimension_numbers = #tpu.dot_dimension_numbers<[1], [0], [0], [1], [0, 0, 1, 1], [], []>} : vector<16x48xf32>, vector<48x8xf32>, vector<16x8xf32> -> vector<16x8xf32>
    %c0_44 = arith.constant 0 : index
    %c0_45 = arith.constant 0 : index
    %55 = vector.load %arg7[%c0_44, %c0_45] : memref<16x1xf32, #tpu.memory_space<vmem>>, vector<16x1xf32>
    %56 = vector.broadcast %55 : vector<16x1xf32> to vector<16x8xf32>
    %57 = arith.addf %54, %56 : vector<16x8xf32>
    %58 = arith.addf %38, %57 : vector<16x8xf32>
    %cst_46 = arith.constant 0.000000e+00 : f32
    %59 = vector.broadcast %cst_46 : f32 to vector<16x8xf32>
    %60 = arith.cmpf oge, %58, %59 : vector<16x8xf32>
    %61 = vector.extract_strided_slice %0 {offsets = [3, 0], sizes = [1, 1], strides = [1, 1]} : vector<4x1xf32> to vector<1x1xf32>
    %62 = vector.broadcast %61 : vector<1x1xf32> to vector<16x8xf32>
    %63 = arith.mulf %58, %62 : vector<16x8xf32>
    %64 = arith.select %60, %58, %63 : vector<16x8xi1>, vector<16x8xf32>
    %c0_47 = arith.constant 0 : index
    %c8 = arith.constant 8 : index
    %65 = vector.load %arg12[%c0_47, %c8] : memref<48x16xf32, #tpu.memory_space<vmem>>, vector<16x8xf32>
    tpu.vector_store %arg12[%c0_47, %c8], %64 {strides = array<i32>} : memref<48x16xf32, #tpu.memory_space<vmem>>, vector<16x8xf32>,
    %c16_48 = arith.constant 16 : index
    %c4_49 = arith.constant 4 : index
    %66 = vector.load %arg12[%c16_48, %c4_49] : memref<48x16xf32, #tpu.memory_space<vmem>>, vector<16x8xf32>
    tpu.vector_store %arg12[%c16_48, %c4_49], %64 {strides = array<i32>} : memref<48x16xf32, #tpu.memory_space<vmem>>, vector<16x8xf32>,
    %c32_50 = arith.constant 32 : index
    %c0_51 = arith.constant 0 : index
    %67 = vector.load %arg12[%c32_50, %c0_51] : memref<48x16xf32, #tpu.memory_space<vmem>>, vector<16x8xf32>
    tpu.vector_store %arg12[%c32_50, %c0_51], %64 {strides = array<i32>} : memref<48x16xf32, #tpu.memory_space<vmem>>, vector<16x8xf32>,
    %cst_52 = arith.constant 0.000000e+00 : f32
    %68 = vector.broadcast %cst_52 : f32 to vector<16x4xf32>
    %c0_53 = arith.constant 0 : index
    %c4_54 = arith.constant 4 : index
    %69 = vector.load %arg12[%c0_53, %c4_54] : memref<48x16xf32, #tpu.memory_space<vmem>>, vector<16x4xf32>
    tpu.vector_store %arg12[%c0_53, %c4_54], %68 {strides = array<i32>} : memref<48x16xf32, #tpu.memory_space<vmem>>, vector<16x4xf32>,
    %cst_55 = arith.constant 0.000000e+00 : f32
    %70 = vector.broadcast %cst_55 : f32 to vector<16x4xf32>
    %c32_56 = arith.constant 32 : index
    %c8_57 = arith.constant 8 : index
    %71 = vector.load %arg12[%c32_56, %c8_57] : memref<48x16xf32, #tpu.memory_space<vmem>>, vector<16x4xf32>
    tpu.vector_store %arg12[%c32_56, %c8_57], %70 {strides = array<i32>} : memref<48x16xf32, #tpu.memory_space<vmem>>, vector<16x4xf32>,
    %c0_58 = arith.constant 0 : index
    %c4_59 = arith.constant 4 : index
    %72 = vector.load %arg12[%c0_58, %c4_59] : memref<48x16xf32, #tpu.memory_space<vmem>>, vector<48x8xf32>
    %c0_60 = arith.constant 0 : index
    %c0_61 = arith.constant 0 : index
    %73 = vector.load %arg8[%c0_60, %c0_61] : memref<16x48xf32, #tpu.memory_space<vmem>>, vector<16x48xf32>
    %cst_62 = arith.constant dense<0.000000e+00> : vector<16x8xf32>
    %74 = tpu.matmul %73, %72, %cst_62 {dimension_numbers = #tpu.dot_dimension_numbers<[1], [0], [0], [1], [0, 0, 1, 1], [], []>} : vector<16x48xf32>, vector<48x8xf32>, vector<16x8xf32> -> vector<16x8xf32>
    %c0_63 = arith.constant 0 : index
    %c0_64 = arith.constant 0 : index
    %75 = vector.load %arg9[%c0_63, %c0_64] : memref<16x1xf32, #tpu.memory_space<vmem>>, vector<16x1xf32>
    %76 = vector.broadcast %75 : vector<16x1xf32> to vector<16x8xf32>
    %77 = arith.addf %74, %76 : vector<16x8xf32>
    %78 = arith.addf %58, %77 : vector<16x8xf32>
    %c0_65 = arith.constant 0 : index
    %c0_66 = arith.constant 0 : index
    %c0_67 = arith.constant 0 : index
    %79 = vector.load %arg11[%c0_65, %c0_66, %c0_67] : memref<1x16x8xf32, #tpu.memory_space<vmem>>, vector<1x16x8xf32>
    %80 = vector.shape_cast %79 : vector<1x16x8xf32> to vector<16x8xf32>
    %81 = vector.shape_cast %78 : vector<16x8xf32> to vector<1x16x8xf32>
    tpu.vector_store %arg11[%c0_65, %c0_66, %c0_67], %81 {strides = array<i32>} : memref<1x16x8xf32, #tpu.memory_space<vmem>>, vector<1x16x8xf32>,
    return
  }
  func.func @transform_0(%arg0: i32) -> (i32, i32, i32) {
    %c0_i32 = arith.constant 0 : i32
    %c0_i32_0 = arith.constant 0 : i32
    %c0_i32_1 = arith.constant 0 : i32
    return %arg0, %c0_i32, %c0_i32_0 : i32, i32, i32
  }
  func.func @transform_1(%arg0: i32) -> (i32, i32) {
    %c0_i32 = arith.constant 0 : i32
    %c0_i32_0 = arith.constant 0 : i32
    %c0_i32_1 = arith.constant 0 : i32
    return %c0_i32, %c0_i32_0 : i32, i32
  }
  func.func @transform_2(%arg0: i32) -> (i32, i32) {
    %c0_i32 = arith.constant 0 : i32
    %c0_i32_0 = arith.constant 0 : i32
    %c0_i32_1 = arith.constant 0 : i32
    return %c0_i32, %c0_i32_0 : i32, i32
  }
  func.func @transform_3(%arg0: i32) -> (i32, i32) {
    %c0_i32 = arith.constant 0 : i32
    %c0_i32_0 = arith.constant 0 : i32
    %c0_i32_1 = arith.constant 0 : i32
    return %c0_i32, %c0_i32_0 : i32, i32
  }
  func.func @transform_4(%arg0: i32) -> (i32, i32) {
    %c0_i32 = arith.constant 0 : i32
    %c0_i32_0 = arith.constant 0 : i32
    %c0_i32_1 = arith.constant 0 : i32
    return %c0_i32, %c0_i32_0 : i32, i32
  }
  func.func @transform_5(%arg0: i32) -> (i32, i32) {
    %c0_i32 = arith.constant 0 : i32
    %c0_i32_0 = arith.constant 0 : i32
    %c0_i32_1 = arith.constant 0 : i32
    return %c0_i32, %c0_i32_0 : i32, i32
  }
  func.func @transform_6(%arg0: i32) -> (i32, i32) {
    %c0_i32 = arith.constant 0 : i32
    %c0_i32_0 = arith.constant 0 : i32
    %c0_i32_1 = arith.constant 0 : i32
    return %c0_i32, %c0_i32_0 : i32, i32
  }
  func.func @transform_7(%arg0: i32) -> (i32, i32) {
    %c0_i32 = arith.constant 0 : i32
    %c0_i32_0 = arith.constant 0 : i32
    %c0_i32_1 = arith.constant 0 : i32
    return %c0_i32, %c0_i32_0 : i32, i32
  }
  func.func @transform_8(%arg0: i32) -> (i32, i32) {
    %c0_i32 = arith.constant 0 : i32
    %c0_i32_0 = arith.constant 0 : i32
    %c0_i32_1 = arith.constant 0 : i32
    return %c0_i32, %c0_i32_0 : i32, i32
  }
  func.func @transform_9(%arg0: i32) -> (i32, i32) {
    %c0_i32 = arith.constant 0 : i32
    %c0_i32_0 = arith.constant 0 : i32
    %c0_i32_1 = arith.constant 0 : i32
    return %c0_i32, %c0_i32_0 : i32, i32
  }
  func.func @transform_10(%arg0: i32) -> (i32, i32, i32) {
    %c0_i32 = arith.constant 0 : i32
    %c0_i32_0 = arith.constant 0 : i32
    %c0_i32_1 = arith.constant 0 : i32
    return %arg0, %c0_i32, %c0_i32_0 : i32, i32, i32
  }
}

module attributes {stable_mosaic.version = 11 : i64} {
  func.func @kernel(%arg0: i32, %arg1: memref<1x16x8xf32, #tpu.memory_space<vmem>>, %arg2: memref<16x16xf32, #tpu.memory_space<vmem>>, %arg3: memref<16x1xf32, #tpu.memory_space<vmem>>, %arg4: memref<1x1xf32, #tpu.memory_space<vmem>>, %arg5: memref<1x16x8xf32, #tpu.memory_space<vmem>>) attributes {dimension_semantics = [#tpu.dimension_semantics<parallel>], iteration_bounds = array<i64: 2>, scalar_prefetch = 0 : i64, scratch_operands = 0 : i64, tpu.core_type = #tpu.core_type<tc>, window_params = [{transform_indices = @transform_0, window_bounds = array<i64: 1, 16, 8>}, {pipeline_mode = #tpu.pipeline_mode<synchronous>, transform_indices = @transform_1, window_bounds = array<i64: 16, 16>}, {pipeline_mode = #tpu.pipeline_mode<synchronous>, transform_indices = @transform_2, window_bounds = array<i64: 16, 1>}, {pipeline_mode = #tpu.pipeline_mode<synchronous>, transform_indices = @transform_3, window_bounds = array<i64: 1, 1>}, {transform_indices = @transform_4, window_bounds = array<i64: 1, 16, 8>}]} {
    %c0 = arith.constant 0 : index
    %c0_0 = arith.constant 0 : index
    %c0_1 = arith.constant 0 : index
    %0 = vector.load %arg1[%c0, %c0_0, %c0_1] : memref<1x16x8xf32, #tpu.memory_space<vmem>>, vector<1x16x8xf32>
    %1 = vector.shape_cast %0 : vector<1x16x8xf32> to vector<16x8xf32>
    %cst = arith.constant 0.000000e+00 : f32
    %2 = vector.broadcast %cst : f32 to vector<16x8xf32>
    %3 = arith.cmpf oge, %1, %2 : vector<16x8xf32>
    %c0_2 = arith.constant 0 : index
    %c0_3 = arith.constant 0 : index
    %4 = vector.load %arg4[%c0_2, %c0_3] : memref<1x1xf32, #tpu.memory_space<vmem>>, vector<1x1xf32>
    %5 = vector.broadcast %4 : vector<1x1xf32> to vector<16x8xf32>
    %6 = arith.mulf %1, %5 : vector<16x8xf32>
    %7 = arith.select %3, %1, %6 : vector<16x8xi1>, vector<16x8xf32>
    %c0_4 = arith.constant 0 : index
    %c0_5 = arith.constant 0 : index
    %8 = vector.load %arg2[%c0_4, %c0_5] : memref<16x16xf32, #tpu.memory_space<vmem>>, vector<16x16xf32>
    %cst_6 = arith.constant dense<0.000000e+00> : vector<16x8xf32>
    %9 = tpu.matmul %8, %7, %cst_6 {dimension_numbers = #tpu.dot_dimension_numbers<[1], [0], [0], [1], [0, 0, 1, 1], [], []>} : vector<16x16xf32>, vector<16x8xf32>, vector<16x8xf32> -> vector<16x8xf32>
    %c0_7 = arith.constant 0 : index
    %c0_8 = arith.constant 0 : index
    %10 = vector.load %arg3[%c0_7, %c0_8] : memref<16x1xf32, #tpu.memory_space<vmem>>, vector<16x1xf32>
    %11 = vector.broadcast %10 : vector<16x1xf32> to vector<16x8xf32>
    %12 = arith.addf %9, %11 : vector<16x8xf32>
    %c0_9 = arith.constant 0 : index
    %c0_10 = arith.constant 0 : index
    %c0_11 = arith.constant 0 : index
    %13 = vector.load %arg5[%c0_9, %c0_10, %c0_11] : memref<1x16x8xf32, #tpu.memory_space<vmem>>, vector<1x16x8xf32>
    %14 = vector.shape_cast %13 : vector<1x16x8xf32> to vector<16x8xf32>
    %15 = vector.shape_cast %12 : vector<16x8xf32> to vector<1x16x8xf32>
    tpu.vector_store %arg5[%c0_9, %c0_10, %c0_11], %15 {strides = array<i32>} : memref<1x16x8xf32, #tpu.memory_space<vmem>>, vector<1x16x8xf32>,
    return
  }
  func.func @transform_0(%arg0: i32) -> (i32, i32, i32) {
    %c0_i32 = arith.constant 0 : i32
    %c0_i32_0 = arith.constant 0 : i32
    %c0_i32_1 = arith.constant 0 : i32
    return %arg0, %c0_i32, %c0_i32_0 : i32, i32, i32
  }
  func.func @transform_1(%arg0: i32) -> (i32, i32) {
    %c0_i32 = arith.constant 0 : i32
    %c0_i32_0 = arith.constant 0 : i32
    %c0_i32_1 = arith.constant 0 : i32
    return %c0_i32, %c0_i32_0 : i32, i32
  }
  func.func @transform_2(%arg0: i32) -> (i32, i32) {
    %c0_i32 = arith.constant 0 : i32
    %c0_i32_0 = arith.constant 0 : i32
    %c0_i32_1 = arith.constant 0 : i32
    return %c0_i32, %c0_i32_0 : i32, i32
  }
  func.func @transform_3(%arg0: i32) -> (i32, i32) {
    %c0_i32 = arith.constant 0 : i32
    %c0_i32_0 = arith.constant 0 : i32
    %c0_i32_1 = arith.constant 0 : i32
    return %c0_i32, %c0_i32_0 : i32, i32
  }
  func.func @transform_4(%arg0: i32) -> (i32, i32, i32) {
    %c0_i32 = arith.constant 0 : i32
    %c0_i32_0 = arith.constant 0 : i32
    %c0_i32_1 = arith.constant 0 : i32
    return %arg0, %c0_i32, %c0_i32_0 : i32, i32, i32
  }
}

module attributes {stable_mosaic.version = 11 : i64} {
  func.func @kernel(%arg0: i32, %arg1: memref<1x16x8xf32, #tpu.memory_space<vmem>>, %arg2: memref<1x16x8xf32, #tpu.memory_space<vmem>>, %arg3: memref<1x16x8xf32, #tpu.memory_space<vmem>>, %arg4: memref<16x48xf32, #tpu.memory_space<vmem>>, %arg5: memref<16x1xf32, #tpu.memory_space<vmem>>, %arg6: memref<16x48xf32, #tpu.memory_space<vmem>>, %arg7: memref<16x1xf32, #tpu.memory_space<vmem>>, %arg8: memref<16x48xf32, #tpu.memory_space<vmem>>, %arg9: memref<16x1xf32, #tpu.memory_space<vmem>>, %arg10: memref<3x1xf32, #tpu.memory_space<vmem>>, %arg11: memref<1x16x8xf32, #tpu.memory_space<vmem>>, %arg12: memref<48x16xf32, #tpu.memory_space<vmem>>) attributes {dimension_semantics = [#tpu.dimension_semantics<parallel>], iteration_bounds = array<i64: 2>, scalar_prefetch = 0 : i64, scratch_operands = 1 : i64, tpu.core_type = #tpu.core_type<tc>, window_params = [{transform_indices = @transform_0, window_bounds = array<i64: 1, 16, 8>}, {transform_indices = @transform_1, window_bounds = array<i64: 1, 16, 8>}, {transform_indices = @transform_2, window_bounds = array<i64: 1, 16, 8>}, {pipeline_mode = #tpu.pipeline_mode<synchronous>, transform_indices = @transform_3, window_bounds = array<i64: 16, 48>}, {pipeline_mode = #tpu.pipeline_mode<synchronous>, transform_indices = @transform_4, window_bounds = array<i64: 16, 1>}, {pipeline_mode = #tpu.pipeline_mode<synchronous>, transform_indices = @transform_5, window_bounds = array<i64: 16, 48>}, {pipeline_mode = #tpu.pipeline_mode<synchronous>, transform_indices = @transform_6, window_bounds = array<i64: 16, 1>}, {pipeline_mode = #tpu.pipeline_mode<synchronous>, transform_indices = @transform_7, window_bounds = array<i64: 16, 48>}, {pipeline_mode = #tpu.pipeline_mode<synchronous>, transform_indices = @transform_8, window_bounds = array<i64: 16, 1>}, {pipeline_mode = #tpu.pipeline_mode<synchronous>, transform_indices = @transform_9, window_bounds = array<i64: 3, 1>}, {transform_indices = @transform_10, window_bounds = array<i64: 1, 16, 8>}]} {
    %c0 = arith.constant 0 : index
    %c0_0 = arith.constant 0 : index
    %0 = vector.load %arg10[%c0, %c0_0] : memref<3x1xf32, #tpu.memory_space<vmem>>, vector<3x1xf32>
    %c0_1 = arith.constant 0 : index
    %c0_2 = arith.constant 0 : index
    %c0_3 = arith.constant 0 : index
    %1 = vector.load %arg1[%c0_1, %c0_2, %c0_3] : memref<1x16x8xf32, #tpu.memory_space<vmem>>, vector<1x16x8xf32>
    %2 = vector.shape_cast %1 : vector<1x16x8xf32> to vector<16x8xf32>
    %c0_4 = arith.constant 0 : index
    %c0_5 = arith.constant 0 : index
    %c0_6 = arith.constant 0 : index
    %3 = vector.load %arg2[%c0_4, %c0_5, %c0_6] : memref<1x16x8xf32, #tpu.memory_space<vmem>>, vector<1x16x8xf32>
    %4 = vector.shape_cast %3 : vector<1x16x8xf32> to vector<16x8xf32>
    %5 = arith.addf %2, %4 : vector<16x8xf32>
    %c0_7 = arith.constant 0 : index
    %c0_8 = arith.constant 0 : index
    %c0_9 = arith.constant 0 : index
    %6 = vector.load %arg3[%c0_7, %c0_8, %c0_9] : memref<1x16x8xf32, #tpu.memory_space<vmem>>, vector<1x16x8xf32>
    %7 = vector.shape_cast %6 : vector<1x16x8xf32> to vector<16x8xf32>
    %8 = arith.addf %5, %7 : vector<16x8xf32>
    %cst = arith.constant 0.577350259 : f32
    %9 = vector.broadcast %cst : f32 to vector<16x8xf32>
    %10 = arith.mulf %8, %9 : vector<16x8xf32>
    %cst_10 = arith.constant 0.000000e+00 : f32
    %11 = vector.broadcast %cst_10 : f32 to vector<16x8xf32>
    %12 = arith.cmpf oge, %10, %11 : vector<16x8xf32>
    %13 = vector.extract_strided_slice %0 {offsets = [0, 0], sizes = [1, 1], strides = [1, 1]} : vector<3x1xf32> to vector<1x1xf32>
    %14 = vector.broadcast %13 : vector<1x1xf32> to vector<16x8xf32>
    %15 = arith.mulf %10, %14 : vector<16x8xf32>
    %16 = arith.select %12, %10, %15 : vector<16x8xi1>, vector<16x8xf32>
    %c0_11 = arith.constant 0 : index
    %c5 = arith.constant 5 : index
    %17 = vector.load %arg12[%c0_11, %c5] : memref<48x16xf32, #tpu.memory_space<vmem>>, vector<16x8xf32>
    tpu.vector_store %arg12[%c0_11, %c5], %16 {strides = array<i32>} : memref<48x16xf32, #tpu.memory_space<vmem>>, vector<16x8xf32>,
    %c16 = arith.constant 16 : index
    %c4 = arith.constant 4 : index
    %18 = vector.load %arg12[%c16, %c4] : memref<48x16xf32, #tpu.memory_space<vmem>>, vector<16x8xf32>
    tpu.vector_store %arg12[%c16, %c4], %16 {strides = array<i32>} : memref<48x16xf32, #tpu.memory_space<vmem>>, vector<16x8xf32>,
    %c32 = arith.constant 32 : index
    %c3 = arith.constant 3 : index
    %19 = vector.load %arg12[%c32, %c3] : memref<48x16xf32, #tpu.memory_space<vmem>>, vector<16x8xf32>
    tpu.vector_store %arg12[%c32, %c3], %16 {strides = array<i32>} : memref<48x16xf32, #tpu.memory_space<vmem>>, vector<16x8xf32>,
    %cst_12 = arith.constant 0.000000e+00 : f32
    %20 = vector.broadcast %cst_12 : f32 to vector<16x1xf32>
    %c0_13 = arith.constant 0 : index
    %c4_14 = arith.constant 4 : index
    %21 = vector.load %arg12[%c0_13, %c4_14] : memref<48x16xf32, #tpu.memory_space<vmem>>, vector<16x1xf32>
    tpu.vector_store %arg12[%c0_13, %c4_14], %20 {strides = array<i32>} : memref<48x16xf32, #tpu.memory_space<vmem>>, vector<16x1xf32>,
    %cst_15 = arith.constant 0.000000e+00 : f32
    %22 = vector.broadcast %cst_15 : f32 to vector<16x1xf32>
    %c32_16 = arith.constant 32 : index
    %c11 = arith.constant 11 : index
    %23 = vector.load %arg12[%c32_16, %c11] : memref<48x16xf32, #tpu.memory_space<vmem>>, vector<16x1xf32>
    tpu.vector_store %arg12[%c32_16, %c11], %22 {strides = array<i32>} : memref<48x16xf32, #tpu.memory_space<vmem>>, vector<16x1xf32>,
    %c0_17 = arith.constant 0 : index
    %c4_18 = arith.constant 4 : index
    %24 = vector.load %arg12[%c0_17, %c4_18] : memref<48x16xf32, #tpu.memory_space<vmem>>, vector<48x8xf32>
    %c0_19 = arith.constant 0 : index
    %c0_20 = arith.constant 0 : index
    %25 = vector.load %arg4[%c0_19, %c0_20] : memref<16x48xf32, #tpu.memory_space<vmem>>, vector<16x48xf32>
    %cst_21 = arith.constant dense<0.000000e+00> : vector<16x8xf32>
    %26 = tpu.matmul %25, %24, %cst_21 {dimension_numbers = #tpu.dot_dimension_numbers<[1], [0], [0], [1], [0, 0, 1, 1], [], []>} : vector<16x48xf32>, vector<48x8xf32>, vector<16x8xf32> -> vector<16x8xf32>
    %c0_22 = arith.constant 0 : index
    %c0_23 = arith.constant 0 : index
    %27 = vector.load %arg5[%c0_22, %c0_23] : memref<16x1xf32, #tpu.memory_space<vmem>>, vector<16x1xf32>
    %28 = vector.broadcast %27 : vector<16x1xf32> to vector<16x8xf32>
    %29 = arith.addf %26, %28 : vector<16x8xf32>
    %30 = arith.addf %10, %29 : vector<16x8xf32>
    %cst_24 = arith.constant 0.000000e+00 : f32
    %31 = vector.broadcast %cst_24 : f32 to vector<16x8xf32>
    %32 = arith.cmpf oge, %30, %31 : vector<16x8xf32>
    %33 = vector.extract_strided_slice %0 {offsets = [1, 0], sizes = [1, 1], strides = [1, 1]} : vector<3x1xf32> to vector<1x1xf32>
    %34 = vector.broadcast %33 : vector<1x1xf32> to vector<16x8xf32>
    %35 = arith.mulf %30, %34 : vector<16x8xf32>
    %36 = arith.select %32, %30, %35 : vector<16x8xi1>, vector<16x8xf32>
    %c0_25 = arith.constant 0 : index
    %c6 = arith.constant 6 : index
    %37 = vector.load %arg12[%c0_25, %c6] : memref<48x16xf32, #tpu.memory_space<vmem>>, vector<16x8xf32>
    tpu.vector_store %arg12[%c0_25, %c6], %36 {strides = array<i32>} : memref<48x16xf32, #tpu.memory_space<vmem>>, vector<16x8xf32>,
    %c16_26 = arith.constant 16 : index
    %c4_27 = arith.constant 4 : index
    %38 = vector.load %arg12[%c16_26, %c4_27] : memref<48x16xf32, #tpu.memory_space<vmem>>, vector<16x8xf32>
    tpu.vector_store %arg12[%c16_26, %c4_27], %36 {strides = array<i32>} : memref<48x16xf32, #tpu.memory_space<vmem>>, vector<16x8xf32>,
    %c32_28 = arith.constant 32 : index
    %c2 = arith.constant 2 : index
    %39 = vector.load %arg12[%c32_28, %c2] : memref<48x16xf32, #tpu.memory_space<vmem>>, vector<16x8xf32>
    tpu.vector_store %arg12[%c32_28, %c2], %36 {strides = array<i32>} : memref<48x16xf32, #tpu.memory_space<vmem>>, vector<16x8xf32>,
    %cst_29 = arith.constant 0.000000e+00 : f32
    %40 = vector.broadcast %cst_29 : f32 to vector<16x2xf32>
    %c0_30 = arith.constant 0 : index
    %c4_31 = arith.constant 4 : index
    %41 = vector.load %arg12[%c0_30, %c4_31] : memref<48x16xf32, #tpu.memory_space<vmem>>, vector<16x2xf32>
    tpu.vector_store %arg12[%c0_30, %c4_31], %40 {strides = array<i32>} : memref<48x16xf32, #tpu.memory_space<vmem>>, vector<16x2xf32>,
    %cst_32 = arith.constant 0.000000e+00 : f32
    %42 = vector.broadcast %cst_32 : f32 to vector<16x2xf32>
    %c32_33 = arith.constant 32 : index
    %c10 = arith.constant 10 : index
    %43 = vector.load %arg12[%c32_33, %c10] : memref<48x16xf32, #tpu.memory_space<vmem>>, vector<16x2xf32>
    tpu.vector_store %arg12[%c32_33, %c10], %42 {strides = array<i32>} : memref<48x16xf32, #tpu.memory_space<vmem>>, vector<16x2xf32>,
    %c0_34 = arith.constant 0 : index
    %c4_35 = arith.constant 4 : index
    %44 = vector.load %arg12[%c0_34, %c4_35] : memref<48x16xf32, #tpu.memory_space<vmem>>, vector<48x8xf32>
    %c0_36 = arith.constant 0 : index
    %c0_37 = arith.constant 0 : index
    %45 = vector.load %arg6[%c0_36, %c0_37] : memref<16x48xf32, #tpu.memory_space<vmem>>, vector<16x48xf32>
    %cst_38 = arith.constant dense<0.000000e+00> : vector<16x8xf32>
    %46 = tpu.matmul %45, %44, %cst_38 {dimension_numbers = #tpu.dot_dimension_numbers<[1], [0], [0], [1], [0, 0, 1, 1], [], []>} : vector<16x48xf32>, vector<48x8xf32>, vector<16x8xf32> -> vector<16x8xf32>
    %c0_39 = arith.constant 0 : index
    %c0_40 = arith.constant 0 : index
    %47 = vector.load %arg7[%c0_39, %c0_40] : memref<16x1xf32, #tpu.memory_space<vmem>>, vector<16x1xf32>
    %48 = vector.broadcast %47 : vector<16x1xf32> to vector<16x8xf32>
    %49 = arith.addf %46, %48 : vector<16x8xf32>
    %50 = arith.addf %30, %49 : vector<16x8xf32>
    %cst_41 = arith.constant 0.000000e+00 : f32
    %51 = vector.broadcast %cst_41 : f32 to vector<16x8xf32>
    %52 = arith.cmpf oge, %50, %51 : vector<16x8xf32>
    %53 = vector.extract_strided_slice %0 {offsets = [2, 0], sizes = [1, 1], strides = [1, 1]} : vector<3x1xf32> to vector<1x1xf32>
    %54 = vector.broadcast %53 : vector<1x1xf32> to vector<16x8xf32>
    %55 = arith.mulf %50, %54 : vector<16x8xf32>
    %56 = arith.select %52, %50, %55 : vector<16x8xi1>, vector<16x8xf32>
    %c0_42 = arith.constant 0 : index
    %c8 = arith.constant 8 : index
    %57 = vector.load %arg12[%c0_42, %c8] : memref<48x16xf32, #tpu.memory_space<vmem>>, vector<16x8xf32>
    tpu.vector_store %arg12[%c0_42, %c8], %56 {strides = array<i32>} : memref<48x16xf32, #tpu.memory_space<vmem>>, vector<16x8xf32>,
    %c16_43 = arith.constant 16 : index
    %c4_44 = arith.constant 4 : index
    %58 = vector.load %arg12[%c16_43, %c4_44] : memref<48x16xf32, #tpu.memory_space<vmem>>, vector<16x8xf32>
    tpu.vector_store %arg12[%c16_43, %c4_44], %56 {strides = array<i32>} : memref<48x16xf32, #tpu.memory_space<vmem>>, vector<16x8xf32>,
    %c32_45 = arith.constant 32 : index
    %c0_46 = arith.constant 0 : index
    %59 = vector.load %arg12[%c32_45, %c0_46] : memref<48x16xf32, #tpu.memory_space<vmem>>, vector<16x8xf32>
    tpu.vector_store %arg12[%c32_45, %c0_46], %56 {strides = array<i32>} : memref<48x16xf32, #tpu.memory_space<vmem>>, vector<16x8xf32>,
    %cst_47 = arith.constant 0.000000e+00 : f32
    %60 = vector.broadcast %cst_47 : f32 to vector<16x4xf32>
    %c0_48 = arith.constant 0 : index
    %c4_49 = arith.constant 4 : index
    %61 = vector.load %arg12[%c0_48, %c4_49] : memref<48x16xf32, #tpu.memory_space<vmem>>, vector<16x4xf32>
    tpu.vector_store %arg12[%c0_48, %c4_49], %60 {strides = array<i32>} : memref<48x16xf32, #tpu.memory_space<vmem>>, vector<16x4xf32>,
    %cst_50 = arith.constant 0.000000e+00 : f32
    %62 = vector.broadcast %cst_50 : f32 to vector<16x4xf32>
    %c32_51 = arith.constant 32 : index
    %c8_52 = arith.constant 8 : index
    %63 = vector.load %arg12[%c32_51, %c8_52] : memref<48x16xf32, #tpu.memory_space<vmem>>, vector<16x4xf32>
    tpu.vector_store %arg12[%c32_51, %c8_52], %62 {strides = array<i32>} : memref<48x16xf32, #tpu.memory_space<vmem>>, vector<16x4xf32>,
    %c0_53 = arith.constant 0 : index
    %c4_54 = arith.constant 4 : index
    %64 = vector.load %arg12[%c0_53, %c4_54] : memref<48x16xf32, #tpu.memory_space<vmem>>, vector<48x8xf32>
    %c0_55 = arith.constant 0 : index
    %c0_56 = arith.constant 0 : index
    %65 = vector.load %arg8[%c0_55, %c0_56] : memref<16x48xf32, #tpu.memory_space<vmem>>, vector<16x48xf32>
    %cst_57 = arith.constant dense<0.000000e+00> : vector<16x8xf32>
    %66 = tpu.matmul %65, %64, %cst_57 {dimension_numbers = #tpu.dot_dimension_numbers<[1], [0], [0], [1], [0, 0, 1, 1], [], []>} : vector<16x48xf32>, vector<48x8xf32>, vector<16x8xf32> -> vector<16x8xf32>
    %c0_58 = arith.constant 0 : index
    %c0_59 = arith.constant 0 : index
    %67 = vector.load %arg9[%c0_58, %c0_59] : memref<16x1xf32, #tpu.memory_space<vmem>>, vector<16x1xf32>
    %68 = vector.broadcast %67 : vector<16x1xf32> to vector<16x8xf32>
    %69 = arith.addf %66, %68 : vector<16x8xf32>
    %70 = arith.addf %50, %69 : vector<16x8xf32>
    %c0_60 = arith.constant 0 : index
    %c0_61 = arith.constant 0 : index
    %c0_62 = arith.constant 0 : index
    %71 = vector.load %arg11[%c0_60, %c0_61, %c0_62] : memref<1x16x8xf32, #tpu.memory_space<vmem>>, vector<1x16x8xf32>
    %72 = vector.shape_cast %71 : vector<1x16x8xf32> to vector<16x8xf32>
    %73 = vector.shape_cast %70 : vector<16x8xf32> to vector<1x16x8xf32>
    tpu.vector_store %arg11[%c0_60, %c0_61, %c0_62], %73 {strides = array<i32>} : memref<1x16x8xf32, #tpu.memory_space<vmem>>, vector<1x16x8xf32>,
    return
  }
  func.func @transform_0(%arg0: i32) -> (i32, i32, i32) {
    %c0_i32 = arith.constant 0 : i32
    %c0_i32_0 = arith.constant 0 : i32
    %c0_i32_1 = arith.constant 0 : i32
    return %arg0, %c0_i32, %c0_i32_0 : i32, i32, i32
  }
  func.func @transform_1(%arg0: i32) -> (i32, i32, i32) {
    %c0_i32 = arith.constant 0 : i32
    %c0_i32_0 = arith.constant 0 : i32
    %c0_i32_1 = arith.constant 0 : i32
    return %arg0, %c0_i32, %c0_i32_0 : i32, i32, i32
  }
  func.func @transform_2(%arg0: i32) -> (i32, i32, i32) {
    %c0_i32 = arith.constant 0 : i32
    %c0_i32_0 = arith.constant 0 : i32
    %c0_i32_1 = arith.constant 0 : i32
    return %arg0, %c0_i32, %c0_i32_0 : i32, i32, i32
  }
  func.func @transform_3(%arg0: i32) -> (i32, i32) {
    %c0_i32 = arith.constant 0 : i32
    %c0_i32_0 = arith.constant 0 : i32
    %c0_i32_1 = arith.constant 0 : i32
    return %c0_i32, %c0_i32_0 : i32, i32
  }
  func.func @transform_4(%arg0: i32) -> (i32, i32) {
    %c0_i32 = arith.constant 0 : i32
    %c0_i32_0 = arith.constant 0 : i32
    %c0_i32_1 = arith.constant 0 : i32
    return %c0_i32, %c0_i32_0 : i32, i32
  }
  func.func @transform_5(%arg0: i32) -> (i32, i32) {
    %c0_i32 = arith.constant 0 : i32
    %c0_i32_0 = arith.constant 0 : i32
    %c0_i32_1 = arith.constant 0 : i32
    return %c0_i32, %c0_i32_0 : i32, i32
  }
  func.func @transform_6(%arg0: i32) -> (i32, i32) {
    %c0_i32 = arith.constant 0 : i32
    %c0_i32_0 = arith.constant 0 : i32
    %c0_i32_1 = arith.constant 0 : i32
    return %c0_i32, %c0_i32_0 : i32, i32
  }
  func.func @transform_7(%arg0: i32) -> (i32, i32) {
    %c0_i32 = arith.constant 0 : i32
    %c0_i32_0 = arith.constant 0 : i32
    %c0_i32_1 = arith.constant 0 : i32
    return %c0_i32, %c0_i32_0 : i32, i32
  }
  func.func @transform_8(%arg0: i32) -> (i32, i32) {
    %c0_i32 = arith.constant 0 : i32
    %c0_i32_0 = arith.constant 0 : i32
    %c0_i32_1 = arith.constant 0 : i32
    return %c0_i32, %c0_i32_0 : i32, i32
  }
  func.func @transform_9(%arg0: i32) -> (i32, i32) {
    %c0_i32 = arith.constant 0 : i32
    %c0_i32_0 = arith.constant 0 : i32
    %c0_i32_1 = arith.constant 0 : i32
    return %c0_i32, %c0_i32_0 : i32, i32
  }
  func.func @transform_10(%arg0: i32) -> (i32, i32, i32) {
    %c0_i32 = arith.constant 0 : i32
    %c0_i32_0 = arith.constant 0 : i32
    %c0_i32_1 = arith.constant 0 : i32
    return %arg0, %c0_i32, %c0_i32_0 : i32, i32, i32
  }
}

module attributes {stable_mosaic.version = 11 : i64} {
  func.func @kernel(%arg0: memref<8x2x24xf32, #tpu.memory_space<vmem>>, %arg1: memref<8x2x24xf32, #tpu.memory_space<vmem>>, %arg2: memref<8x24xf32, #tpu.memory_space<vmem>>, %arg3: memref<8x24xf32, #tpu.memory_space<vmem>>, %arg4: memref<1x8xf32, #tpu.memory_space<vmem>>, %arg5: memref<1x8xf32, #tpu.memory_space<vmem>>, %arg6: memref<8x2x16xf32, #tpu.memory_space<vmem>>) attributes {dimension_semantics = [], scalar_prefetch = 0 : i64, scratch_operands = 0 : i64, tpu.core_type = #tpu.core_type<tc>} {
    %c0 = arith.constant 0 : index
    %c0_0 = arith.constant 0 : index
    %0 = vector.load %arg2[%c0, %c0_0] : memref<8x24xf32, #tpu.memory_space<vmem>>, vector<8x24xf32>
    %c0_1 = arith.constant 0 : index
    %c0_2 = arith.constant 0 : index
    %1 = vector.load %arg3[%c0_1, %c0_2] : memref<8x24xf32, #tpu.memory_space<vmem>>, vector<8x24xf32>
    %c0_3 = arith.constant 0 : index
    %c0_4 = arith.constant 0 : index
    %2 = vector.load %arg4[%c0_3, %c0_4] : memref<1x8xf32, #tpu.memory_space<vmem>>, vector<1x8xf32>
    %c0_5 = arith.constant 0 : index
    %c0_6 = arith.constant 0 : index
    %3 = vector.load %arg5[%c0_5, %c0_6] : memref<1x8xf32, #tpu.memory_space<vmem>>, vector<1x8xf32>
    %cst = arith.constant 0.000000e+00 : f32
    %4 = vector.broadcast %cst : f32 to vector<2x8xf32>
    %c0_i32 = arith.constant 0 : i32
    %c8_i32 = arith.constant 8 : i32
    %5 = arith.addi %c0_i32, %c8_i32 : i32
    %c1_i32 = arith.constant 1 : i32
    %6:2 = scf.for %arg7 = %c0_i32 to %5 step %c1_i32 iter_args(%arg8 = %4, %arg9 = %4) -> (vector<2x8xf32>, vector<2x8xf32>)  : i32 {
      %c7_i32 = arith.constant 7 : i32
      %7 = arith.subi %c7_i32, %arg7 : i32
      %8 = arith.index_cast %arg7 : i32 to index
      %c0_8 = arith.constant 0 : index
      %c0_9 = arith.constant 0 : index
      %9 = vector.load %arg0[%8, %c0_8, %c0_9] : memref<8x2x24xf32, #tpu.memory_space<vmem>>, vector<1x2x24xf32>
      %10 = vector.shape_cast %9 : vector<1x2x24xf32> to vector<2x24xf32>
      %11 = arith.index_cast %7 : i32 to index
      %c0_10 = arith.constant 0 : index
      %c0_11 = arith.constant 0 : index
      %12 = vector.load %arg1[%11, %c0_10, %c0_11] : memref<8x2x24xf32, #tpu.memory_space<vmem>>, vector<1x2x24xf32>
      %13 = vector.shape_cast %12 : vector<1x2x24xf32> to vector<2x24xf32>
      %cst_12 = arith.constant dense<0.000000e+00> : vector<2x24xf32>
      %14 = tpu.matmul %arg8, %0, %cst_12 {dimension_numbers = #tpu.dot_dimension_numbers<[1], [0], [0], [1], [0, 0, 1, 1], [], []>} : vector<2x8xf32>, vector<8x24xf32>, vector<2x24xf32> -> vector<2x24xf32>
      %cst_13 = arith.constant dense<0.000000e+00> : vector<2x24xf32>
      %15 = tpu.matmul %arg9, %1, %cst_13 {dimension_numbers = #tpu.dot_dimension_numbers<[1], [0], [0], [1], [0, 0, 1, 1], [], []>} : vector<2x8xf32>, vector<8x24xf32>, vector<2x24xf32> -> vector<2x24xf32>
      %16 = vector.extract_strided_slice %10 {offsets = [0, 0], sizes = [2, 8], strides = [1, 1]} : vector<2x24xf32> to vector<2x8xf32>
      %17 = vector.extract_strided_slice %14 {offsets = [0, 0], sizes = [2, 8], strides = [1, 1]} : vector<2x24xf32> to vector<2x8xf32>
      %18 = arith.addf %16, %17 : vector<2x8xf32>
      %19 = arith.negf %18 : vector<2x8xf32>
      %20 = math.exp %19 : vector<2x8xf32>
      %cst_14 = arith.constant 1.000000e+00 : f32
      %21 = vector.broadcast %cst_14 : f32 to vector<2x8xf32>
      %22 = arith.addf %21, %20 : vector<2x8xf32>
      %23 = arith.divf %21, %22 : vector<2x8xf32>
      %24 = vector.extract_strided_slice %10 {offsets = [0, 8], sizes = [2, 8], strides = [1, 1]} : vector<2x24xf32> to vector<2x8xf32>
      %25 = vector.extract_strided_slice %14 {offsets = [0, 8], sizes = [2, 8], strides = [1, 1]} : vector<2x24xf32> to vector<2x8xf32>
      %26 = arith.addf %24, %25 : vector<2x8xf32>
      %27 = arith.negf %26 : vector<2x8xf32>
      %28 = math.exp %27 : vector<2x8xf32>
      %cst_15 = arith.constant 1.000000e+00 : f32
      %29 = vector.broadcast %cst_15 : f32 to vector<2x8xf32>
      %30 = arith.addf %29, %28 : vector<2x8xf32>
      %31 = arith.divf %29, %30 : vector<2x8xf32>
      %32 = vector.extract_strided_slice %10 {offsets = [0, 16], sizes = [2, 8], strides = [1, 1]} : vector<2x24xf32> to vector<2x8xf32>
      %33 = vector.extract_strided_slice %14 {offsets = [0, 16], sizes = [2, 8], strides = [1, 1]} : vector<2x24xf32> to vector<2x8xf32>
      %34 = vector.broadcast %2 : vector<1x8xf32> to vector<2x8xf32>
      %35 = arith.addf %33, %34 : vector<2x8xf32>
      %36 = arith.mulf %23, %35 : vector<2x8xf32>
      %37 = arith.addf %32, %36 : vector<2x8xf32>
      %38 = math.tanh %37 : vector<2x8xf32>
      %cst_16 = arith.constant 1.000000e+00 : f32
      %39 = vector.broadcast %cst_16 : f32 to vector<2x8xf32>
      %40 = arith.subf %39, %31 : vector<2x8xf32>
      %41 = arith.mulf %40, %38 : vector<2x8xf32>
      %42 = arith.mulf %31, %arg8 : vector<2x8xf32>
      %43 = arith.addf %41, %42 : vector<2x8xf32>
      %44 = vector.extract_strided_slice %13 {offsets = [0, 0], sizes = [2, 8], strides = [1, 1]} : vector<2x24xf32> to vector<2x8xf32>
      %45 = vector.extract_strided_slice %15 {offsets = [0, 0], sizes = [2, 8], strides = [1, 1]} : vector<2x24xf32> to vector<2x8xf32>
      %46 = arith.addf %44, %45 : vector<2x8xf32>
      %47 = arith.negf %46 : vector<2x8xf32>
      %48 = math.exp %47 : vector<2x8xf32>
      %cst_17 = arith.constant 1.000000e+00 : f32
      %49 = vector.broadcast %cst_17 : f32 to vector<2x8xf32>
      %50 = arith.addf %49, %48 : vector<2x8xf32>
      %51 = arith.divf %49, %50 : vector<2x8xf32>
      %52 = vector.extract_strided_slice %13 {offsets = [0, 8], sizes = [2, 8], strides = [1, 1]} : vector<2x24xf32> to vector<2x8xf32>
      %53 = vector.extract_strided_slice %15 {offsets = [0, 8], sizes = [2, 8], strides = [1, 1]} : vector<2x24xf32> to vector<2x8xf32>
      %54 = arith.addf %52, %53 : vector<2x8xf32>
      %55 = arith.negf %54 : vector<2x8xf32>
      %56 = math.exp %55 : vector<2x8xf32>
      %cst_18 = arith.constant 1.000000e+00 : f32
      %57 = vector.broadcast %cst_18 : f32 to vector<2x8xf32>
      %58 = arith.addf %57, %56 : vector<2x8xf32>
      %59 = arith.divf %57, %58 : vector<2x8xf32>
      %60 = vector.extract_strided_slice %13 {offsets = [0, 16], sizes = [2, 8], strides = [1, 1]} : vector<2x24xf32> to vector<2x8xf32>
      %61 = vector.extract_strided_slice %15 {offsets = [0, 16], sizes = [2, 8], strides = [1, 1]} : vector<2x24xf32> to vector<2x8xf32>
      %62 = vector.broadcast %3 : vector<1x8xf32> to vector<2x8xf32>
      %63 = arith.addf %61, %62 : vector<2x8xf32>
      %64 = arith.mulf %51, %63 : vector<2x8xf32>
      %65 = arith.addf %60, %64 : vector<2x8xf32>
      %66 = math.tanh %65 : vector<2x8xf32>
      %cst_19 = arith.constant 1.000000e+00 : f32
      %67 = vector.broadcast %cst_19 : f32 to vector<2x8xf32>
      %68 = arith.subf %67, %59 : vector<2x8xf32>
      %69 = arith.mulf %68, %66 : vector<2x8xf32>
      %70 = arith.mulf %59, %arg9 : vector<2x8xf32>
      %71 = arith.addf %69, %70 : vector<2x8xf32>
      %72 = arith.index_cast %arg7 : i32 to index
      %c0_20 = arith.constant 0 : index
      %c0_21 = arith.constant 0 : index
      %73 = vector.load %arg6[%72, %c0_20, %c0_21] : memref<8x2x16xf32, #tpu.memory_space<vmem>>, vector<1x2x8xf32>
      %74 = vector.shape_cast %73 : vector<1x2x8xf32> to vector<2x8xf32>
      %75 = vector.shape_cast %43 : vector<2x8xf32> to vector<1x2x8xf32>
      tpu.vector_store %arg6[%72, %c0_20, %c0_21], %75 {strides = array<i32>} : memref<8x2x16xf32, #tpu.memory_space<vmem>>, vector<1x2x8xf32>,
      %76 = arith.index_cast %7 : i32 to index
      %c0_22 = arith.constant 0 : index
      %c8 = arith.constant 8 : index
      %77 = vector.load %arg6[%76, %c0_22, %c8] : memref<8x2x16xf32, #tpu.memory_space<vmem>>, vector<1x2x8xf32>
      %78 = vector.shape_cast %77 : vector<1x2x8xf32> to vector<2x8xf32>
      %79 = vector.shape_cast %71 : vector<2x8xf32> to vector<1x2x8xf32>
      tpu.vector_store %arg6[%76, %c0_22, %c8], %79 {strides = array<i32>} : memref<8x2x16xf32, #tpu.memory_space<vmem>>, vector<1x2x8xf32>,
      scf.yield %43, %71 : vector<2x8xf32>, vector<2x8xf32>
    }
    %c8_i32_7 = arith.constant 8 : i32
    return
  }
}

module attributes {stable_mosaic.version = 11 : i64} {
  func.func @kernel(%arg0: i32, %arg1: memref<1x16x8xf32, #tpu.memory_space<vmem>>, %arg2: memref<16x48xf32, #tpu.memory_space<vmem>>, %arg3: memref<16x1xf32, #tpu.memory_space<vmem>>, %arg4: memref<16x48xf32, #tpu.memory_space<vmem>>, %arg5: memref<16x1xf32, #tpu.memory_space<vmem>>, %arg6: memref<16x48xf32, #tpu.memory_space<vmem>>, %arg7: memref<16x1xf32, #tpu.memory_space<vmem>>, %arg8: memref<3x1xf32, #tpu.memory_space<vmem>>, %arg9: memref<1x16x8xf32, #tpu.memory_space<vmem>>, %arg10: memref<48x16xf32, #tpu.memory_space<vmem>>) attributes {dimension_semantics = [#tpu.dimension_semantics<parallel>], iteration_bounds = array<i64: 2>, scalar_prefetch = 0 : i64, scratch_operands = 1 : i64, tpu.core_type = #tpu.core_type<tc>, window_params = [{transform_indices = @transform_0, window_bounds = array<i64: 1, 16, 8>}, {pipeline_mode = #tpu.pipeline_mode<synchronous>, transform_indices = @transform_1, window_bounds = array<i64: 16, 48>}, {pipeline_mode = #tpu.pipeline_mode<synchronous>, transform_indices = @transform_2, window_bounds = array<i64: 16, 1>}, {pipeline_mode = #tpu.pipeline_mode<synchronous>, transform_indices = @transform_3, window_bounds = array<i64: 16, 48>}, {pipeline_mode = #tpu.pipeline_mode<synchronous>, transform_indices = @transform_4, window_bounds = array<i64: 16, 1>}, {pipeline_mode = #tpu.pipeline_mode<synchronous>, transform_indices = @transform_5, window_bounds = array<i64: 16, 48>}, {pipeline_mode = #tpu.pipeline_mode<synchronous>, transform_indices = @transform_6, window_bounds = array<i64: 16, 1>}, {pipeline_mode = #tpu.pipeline_mode<synchronous>, transform_indices = @transform_7, window_bounds = array<i64: 3, 1>}, {transform_indices = @transform_8, window_bounds = array<i64: 1, 16, 8>}]} {
    %c0 = arith.constant 0 : index
    %c0_0 = arith.constant 0 : index
    %0 = vector.load %arg8[%c0, %c0_0] : memref<3x1xf32, #tpu.memory_space<vmem>>, vector<3x1xf32>
    %c0_1 = arith.constant 0 : index
    %c0_2 = arith.constant 0 : index
    %c0_3 = arith.constant 0 : index
    %1 = vector.load %arg1[%c0_1, %c0_2, %c0_3] : memref<1x16x8xf32, #tpu.memory_space<vmem>>, vector<1x16x8xf32>
    %2 = vector.shape_cast %1 : vector<1x16x8xf32> to vector<16x8xf32>
    %cst = arith.constant 0.000000e+00 : f32
    %3 = vector.broadcast %cst : f32 to vector<16x8xf32>
    %4 = arith.cmpf oge, %2, %3 : vector<16x8xf32>
    %5 = vector.extract_strided_slice %0 {offsets = [0, 0], sizes = [1, 1], strides = [1, 1]} : vector<3x1xf32> to vector<1x1xf32>
    %6 = vector.broadcast %5 : vector<1x1xf32> to vector<16x8xf32>
    %7 = arith.mulf %2, %6 : vector<16x8xf32>
    %8 = arith.select %4, %2, %7 : vector<16x8xi1>, vector<16x8xf32>
    %c0_4 = arith.constant 0 : index
    %c5 = arith.constant 5 : index
    %9 = vector.load %arg10[%c0_4, %c5] : memref<48x16xf32, #tpu.memory_space<vmem>>, vector<16x8xf32>
    tpu.vector_store %arg10[%c0_4, %c5], %8 {strides = array<i32>} : memref<48x16xf32, #tpu.memory_space<vmem>>, vector<16x8xf32>,
    %c16 = arith.constant 16 : index
    %c4 = arith.constant 4 : index
    %10 = vector.load %arg10[%c16, %c4] : memref<48x16xf32, #tpu.memory_space<vmem>>, vector<16x8xf32>
    tpu.vector_store %arg10[%c16, %c4], %8 {strides = array<i32>} : memref<48x16xf32, #tpu.memory_space<vmem>>, vector<16x8xf32>,
    %c32 = arith.constant 32 : index
    %c3 = arith.constant 3 : index
    %11 = vector.load %arg10[%c32, %c3] : memref<48x16xf32, #tpu.memory_space<vmem>>, vector<16x8xf32>
    tpu.vector_store %arg10[%c32, %c3], %8 {strides = array<i32>} : memref<48x16xf32, #tpu.memory_space<vmem>>, vector<16x8xf32>,
    %cst_5 = arith.constant 0.000000e+00 : f32
    %12 = vector.broadcast %cst_5 : f32 to vector<16x1xf32>
    %c0_6 = arith.constant 0 : index
    %c4_7 = arith.constant 4 : index
    %13 = vector.load %arg10[%c0_6, %c4_7] : memref<48x16xf32, #tpu.memory_space<vmem>>, vector<16x1xf32>
    tpu.vector_store %arg10[%c0_6, %c4_7], %12 {strides = array<i32>} : memref<48x16xf32, #tpu.memory_space<vmem>>, vector<16x1xf32>,
    %cst_8 = arith.constant 0.000000e+00 : f32
    %14 = vector.broadcast %cst_8 : f32 to vector<16x1xf32>
    %c32_9 = arith.constant 32 : index
    %c11 = arith.constant 11 : index
    %15 = vector.load %arg10[%c32_9, %c11] : memref<48x16xf32, #tpu.memory_space<vmem>>, vector<16x1xf32>
    tpu.vector_store %arg10[%c32_9, %c11], %14 {strides = array<i32>} : memref<48x16xf32, #tpu.memory_space<vmem>>, vector<16x1xf32>,
    %c0_10 = arith.constant 0 : index
    %c4_11 = arith.constant 4 : index
    %16 = vector.load %arg10[%c0_10, %c4_11] : memref<48x16xf32, #tpu.memory_space<vmem>>, vector<48x8xf32>
    %c0_12 = arith.constant 0 : index
    %c0_13 = arith.constant 0 : index
    %17 = vector.load %arg2[%c0_12, %c0_13] : memref<16x48xf32, #tpu.memory_space<vmem>>, vector<16x48xf32>
    %cst_14 = arith.constant dense<0.000000e+00> : vector<16x8xf32>
    %18 = tpu.matmul %17, %16, %cst_14 {dimension_numbers = #tpu.dot_dimension_numbers<[1], [0], [0], [1], [0, 0, 1, 1], [], []>} : vector<16x48xf32>, vector<48x8xf32>, vector<16x8xf32> -> vector<16x8xf32>
    %c0_15 = arith.constant 0 : index
    %c0_16 = arith.constant 0 : index
    %19 = vector.load %arg3[%c0_15, %c0_16] : memref<16x1xf32, #tpu.memory_space<vmem>>, vector<16x1xf32>
    %20 = vector.broadcast %19 : vector<16x1xf32> to vector<16x8xf32>
    %21 = arith.addf %18, %20 : vector<16x8xf32>
    %22 = arith.addf %2, %21 : vector<16x8xf32>
    %cst_17 = arith.constant 0.000000e+00 : f32
    %23 = vector.broadcast %cst_17 : f32 to vector<16x8xf32>
    %24 = arith.cmpf oge, %22, %23 : vector<16x8xf32>
    %25 = vector.extract_strided_slice %0 {offsets = [1, 0], sizes = [1, 1], strides = [1, 1]} : vector<3x1xf32> to vector<1x1xf32>
    %26 = vector.broadcast %25 : vector<1x1xf32> to vector<16x8xf32>
    %27 = arith.mulf %22, %26 : vector<16x8xf32>
    %28 = arith.select %24, %22, %27 : vector<16x8xi1>, vector<16x8xf32>
    %c0_18 = arith.constant 0 : index
    %c6 = arith.constant 6 : index
    %29 = vector.load %arg10[%c0_18, %c6] : memref<48x16xf32, #tpu.memory_space<vmem>>, vector<16x8xf32>
    tpu.vector_store %arg10[%c0_18, %c6], %28 {strides = array<i32>} : memref<48x16xf32, #tpu.memory_space<vmem>>, vector<16x8xf32>,
    %c16_19 = arith.constant 16 : index
    %c4_20 = arith.constant 4 : index
    %30 = vector.load %arg10[%c16_19, %c4_20] : memref<48x16xf32, #tpu.memory_space<vmem>>, vector<16x8xf32>
    tpu.vector_store %arg10[%c16_19, %c4_20], %28 {strides = array<i32>} : memref<48x16xf32, #tpu.memory_space<vmem>>, vector<16x8xf32>,
    %c32_21 = arith.constant 32 : index
    %c2 = arith.constant 2 : index
    %31 = vector.load %arg10[%c32_21, %c2] : memref<48x16xf32, #tpu.memory_space<vmem>>, vector<16x8xf32>
    tpu.vector_store %arg10[%c32_21, %c2], %28 {strides = array<i32>} : memref<48x16xf32, #tpu.memory_space<vmem>>, vector<16x8xf32>,
    %cst_22 = arith.constant 0.000000e+00 : f32
    %32 = vector.broadcast %cst_22 : f32 to vector<16x2xf32>
    %c0_23 = arith.constant 0 : index
    %c4_24 = arith.constant 4 : index
    %33 = vector.load %arg10[%c0_23, %c4_24] : memref<48x16xf32, #tpu.memory_space<vmem>>, vector<16x2xf32>
    tpu.vector_store %arg10[%c0_23, %c4_24], %32 {strides = array<i32>} : memref<48x16xf32, #tpu.memory_space<vmem>>, vector<16x2xf32>,
    %cst_25 = arith.constant 0.000000e+00 : f32
    %34 = vector.broadcast %cst_25 : f32 to vector<16x2xf32>
    %c32_26 = arith.constant 32 : index
    %c10 = arith.constant 10 : index
    %35 = vector.load %arg10[%c32_26, %c10] : memref<48x16xf32, #tpu.memory_space<vmem>>, vector<16x2xf32>
    tpu.vector_store %arg10[%c32_26, %c10], %34 {strides = array<i32>} : memref<48x16xf32, #tpu.memory_space<vmem>>, vector<16x2xf32>,
    %c0_27 = arith.constant 0 : index
    %c4_28 = arith.constant 4 : index
    %36 = vector.load %arg10[%c0_27, %c4_28] : memref<48x16xf32, #tpu.memory_space<vmem>>, vector<48x8xf32>
    %c0_29 = arith.constant 0 : index
    %c0_30 = arith.constant 0 : index
    %37 = vector.load %arg4[%c0_29, %c0_30] : memref<16x48xf32, #tpu.memory_space<vmem>>, vector<16x48xf32>
    %cst_31 = arith.constant dense<0.000000e+00> : vector<16x8xf32>
    %38 = tpu.matmul %37, %36, %cst_31 {dimension_numbers = #tpu.dot_dimension_numbers<[1], [0], [0], [1], [0, 0, 1, 1], [], []>} : vector<16x48xf32>, vector<48x8xf32>, vector<16x8xf32> -> vector<16x8xf32>
    %c0_32 = arith.constant 0 : index
    %c0_33 = arith.constant 0 : index
    %39 = vector.load %arg5[%c0_32, %c0_33] : memref<16x1xf32, #tpu.memory_space<vmem>>, vector<16x1xf32>
    %40 = vector.broadcast %39 : vector<16x1xf32> to vector<16x8xf32>
    %41 = arith.addf %38, %40 : vector<16x8xf32>
    %42 = arith.addf %22, %41 : vector<16x8xf32>
    %cst_34 = arith.constant 0.000000e+00 : f32
    %43 = vector.broadcast %cst_34 : f32 to vector<16x8xf32>
    %44 = arith.cmpf oge, %42, %43 : vector<16x8xf32>
    %45 = vector.extract_strided_slice %0 {offsets = [2, 0], sizes = [1, 1], strides = [1, 1]} : vector<3x1xf32> to vector<1x1xf32>
    %46 = vector.broadcast %45 : vector<1x1xf32> to vector<16x8xf32>
    %47 = arith.mulf %42, %46 : vector<16x8xf32>
    %48 = arith.select %44, %42, %47 : vector<16x8xi1>, vector<16x8xf32>
    %c0_35 = arith.constant 0 : index
    %c8 = arith.constant 8 : index
    %49 = vector.load %arg10[%c0_35, %c8] : memref<48x16xf32, #tpu.memory_space<vmem>>, vector<16x8xf32>
    tpu.vector_store %arg10[%c0_35, %c8], %48 {strides = array<i32>} : memref<48x16xf32, #tpu.memory_space<vmem>>, vector<16x8xf32>,
    %c16_36 = arith.constant 16 : index
    %c4_37 = arith.constant 4 : index
    %50 = vector.load %arg10[%c16_36, %c4_37] : memref<48x16xf32, #tpu.memory_space<vmem>>, vector<16x8xf32>
    tpu.vector_store %arg10[%c16_36, %c4_37], %48 {strides = array<i32>} : memref<48x16xf32, #tpu.memory_space<vmem>>, vector<16x8xf32>,
    %c32_38 = arith.constant 32 : index
    %c0_39 = arith.constant 0 : index
    %51 = vector.load %arg10[%c32_38, %c0_39] : memref<48x16xf32, #tpu.memory_space<vmem>>, vector<16x8xf32>
    tpu.vector_store %arg10[%c32_38, %c0_39], %48 {strides = array<i32>} : memref<48x16xf32, #tpu.memory_space<vmem>>, vector<16x8xf32>,
    %cst_40 = arith.constant 0.000000e+00 : f32
    %52 = vector.broadcast %cst_40 : f32 to vector<16x4xf32>
    %c0_41 = arith.constant 0 : index
    %c4_42 = arith.constant 4 : index
    %53 = vector.load %arg10[%c0_41, %c4_42] : memref<48x16xf32, #tpu.memory_space<vmem>>, vector<16x4xf32>
    tpu.vector_store %arg10[%c0_41, %c4_42], %52 {strides = array<i32>} : memref<48x16xf32, #tpu.memory_space<vmem>>, vector<16x4xf32>,
    %cst_43 = arith.constant 0.000000e+00 : f32
    %54 = vector.broadcast %cst_43 : f32 to vector<16x4xf32>
    %c32_44 = arith.constant 32 : index
    %c8_45 = arith.constant 8 : index
    %55 = vector.load %arg10[%c32_44, %c8_45] : memref<48x16xf32, #tpu.memory_space<vmem>>, vector<16x4xf32>
    tpu.vector_store %arg10[%c32_44, %c8_45], %54 {strides = array<i32>} : memref<48x16xf32, #tpu.memory_space<vmem>>, vector<16x4xf32>,
    %c0_46 = arith.constant 0 : index
    %c4_47 = arith.constant 4 : index
    %56 = vector.load %arg10[%c0_46, %c4_47] : memref<48x16xf32, #tpu.memory_space<vmem>>, vector<48x8xf32>
    %c0_48 = arith.constant 0 : index
    %c0_49 = arith.constant 0 : index
    %57 = vector.load %arg6[%c0_48, %c0_49] : memref<16x48xf32, #tpu.memory_space<vmem>>, vector<16x48xf32>
    %cst_50 = arith.constant dense<0.000000e+00> : vector<16x8xf32>
    %58 = tpu.matmul %57, %56, %cst_50 {dimension_numbers = #tpu.dot_dimension_numbers<[1], [0], [0], [1], [0, 0, 1, 1], [], []>} : vector<16x48xf32>, vector<48x8xf32>, vector<16x8xf32> -> vector<16x8xf32>
    %c0_51 = arith.constant 0 : index
    %c0_52 = arith.constant 0 : index
    %59 = vector.load %arg7[%c0_51, %c0_52] : memref<16x1xf32, #tpu.memory_space<vmem>>, vector<16x1xf32>
    %60 = vector.broadcast %59 : vector<16x1xf32> to vector<16x8xf32>
    %61 = arith.addf %58, %60 : vector<16x8xf32>
    %62 = arith.addf %42, %61 : vector<16x8xf32>
    %c0_53 = arith.constant 0 : index
    %c0_54 = arith.constant 0 : index
    %c0_55 = arith.constant 0 : index
    %63 = vector.load %arg9[%c0_53, %c0_54, %c0_55] : memref<1x16x8xf32, #tpu.memory_space<vmem>>, vector<1x16x8xf32>
    %64 = vector.shape_cast %63 : vector<1x16x8xf32> to vector<16x8xf32>
    %65 = vector.shape_cast %62 : vector<16x8xf32> to vector<1x16x8xf32>
    tpu.vector_store %arg9[%c0_53, %c0_54, %c0_55], %65 {strides = array<i32>} : memref<1x16x8xf32, #tpu.memory_space<vmem>>, vector<1x16x8xf32>,
    return
  }
  func.func @transform_0(%arg0: i32) -> (i32, i32, i32) {
    %c0_i32 = arith.constant 0 : i32
    %c0_i32_0 = arith.constant 0 : i32
    %c0_i32_1 = arith.constant 0 : i32
    return %arg0, %c0_i32, %c0_i32_0 : i32, i32, i32
  }
  func.func @transform_1(%arg0: i32) -> (i32, i32) {
    %c0_i32 = arith.constant 0 : i32
    %c0_i32_0 = arith.constant 0 : i32
    %c0_i32_1 = arith.constant 0 : i32
    return %c0_i32, %c0_i32_0 : i32, i32
  }
  func.func @transform_2(%arg0: i32) -> (i32, i32) {
    %c0_i32 = arith.constant 0 : i32
    %c0_i32_0 = arith.constant 0 : i32
    %c0_i32_1 = arith.constant 0 : i32
    return %c0_i32, %c0_i32_0 : i32, i32
  }
  func.func @transform_3(%arg0: i32) -> (i32, i32) {
    %c0_i32 = arith.constant 0 : i32
    %c0_i32_0 = arith.constant 0 : i32
    %c0_i32_1 = arith.constant 0 : i32
    return %c0_i32, %c0_i32_0 : i32, i32
  }
  func.func @transform_4(%arg0: i32) -> (i32, i32) {
    %c0_i32 = arith.constant 0 : i32
    %c0_i32_0 = arith.constant 0 : i32
    %c0_i32_1 = arith.constant 0 : i32
    return %c0_i32, %c0_i32_0 : i32, i32
  }
  func.func @transform_5(%arg0: i32) -> (i32, i32) {
    %c0_i32 = arith.constant 0 : i32
    %c0_i32_0 = arith.constant 0 : i32
    %c0_i32_1 = arith.constant 0 : i32
    return %c0_i32, %c0_i32_0 : i32, i32
  }
  func.func @transform_6(%arg0: i32) -> (i32, i32) {
    %c0_i32 = arith.constant 0 : i32
    %c0_i32_0 = arith.constant 0 : i32
    %c0_i32_1 = arith.constant 0 : i32
    return %c0_i32, %c0_i32_0 : i32, i32
  }
  func.func @transform_7(%arg0: i32) -> (i32, i32) {
    %c0_i32 = arith.constant 0 : i32
    %c0_i32_0 = arith.constant 0 : i32
    %c0_i32_1 = arith.constant 0 : i32
    return %c0_i32, %c0_i32_0 : i32, i32
  }
  func.func @transform_8(%arg0: i32) -> (i32, i32, i32) {
    %c0_i32 = arith.constant 0 : i32
    %c0_i32_0 = arith.constant 0 : i32
    %c0_i32_1 = arith.constant 0 : i32
    return %arg0, %c0_i32, %c0_i32_0 : i32, i32, i32
  }
}

</mosaic_0001>

<llo_original>
// kernel: _forward_impl.8
$region0: #{_forward_impl.8}
  #allocation0 [shape = 'u32[]', space=smem, size = 0x4, offset = 0x4, fixed_abs, tag = 'smem constant byte address 0x4 - core index']
  #allocation1 [shape = 'u32[144,128]{1,0:T(1,128)}', space=vmem, size = 0x12000, scoped, tag = 'internal scratch']
  #allocation2 [shape = 'f32[1,1]{1,0:T(1,128)S(1)}', space=vmem, size = 0x200, scoped, tag = 'scoped memory for _forward_impl.8']
  %s0 = inlined_call_operand.vmem [shape: f32[2,16,8], index: 0, kind: input, shape index: {}]
  %s1 = inlined_call_operand.vmem [shape: f32[16,16], index: 1, kind: input, shape index: {}]
  %s2 = inlined_call_operand.vmem [shape: f32[16,1], index: 2, kind: input, shape index: {}]
  %s3 = inlined_call_operand.<no memory space> [shape: f32[1,1], index: 3, kind: input, shape index: {}]
  %s4 = inlined_call_operand.vmem [shape: f32[2,16,8], index: 4, kind: output, shape index: {}]
  %s5 = sld [smem:[#allocation0]]
  $region49: #{_forward_impl.8} parent=0
    _
  %s7 = ssub.s32 1, %s5
  %s8 = scalar_select 0, %s7, %s5
  %v9 = vstv %s3
  %10 = vst [vmem:[#allocation2] sm:$0x1] %v9
  loop: start=0, step=1, limit=4
  $region2: #{_forward_impl.8} parent=0 // loop_pre_header
    _
  $region3: #{_forward_impl.8} parent=0 // loop_header
    %s12 = sphi 0, %s16
    %p13 = scmp.ge.s32.totalorder %s12, 4
    %s22 = sphi 0, %s24
    %s25 = sphi 0, %s22
    %s26 = sphi 0, %s25
    %s42 = sphi 0, %s26
    %s46 = sphi 0, %s46
    %s48 = sphi 0, %s46
    %s49 = sphi 0, %s48
    %s63 = sphi 0, %s49
    %s67 = sphi 0, %s67
    %s69 = sphi 0, %s67
    %s70 = sphi 0, %s69
    %s84 = sphi 0, %s70
    %s88 = sphi 0, %s88
    %s90 = sphi 0, %s88
    %s91 = sphi 0, %s90
    %s105 = sphi 0, %s91
    %s111 = sphi 0, %s113
    %s114 = sphi 0, %s111
    %s115 = sphi 0, %s114
    %s131 = sphi 0, %s115
  $region4: #{_forward_impl.8} parent=0 // loop_header_branch
    %15 = sbr.rel (%p13) target = $region8
  $region5: #{_forward_impl.8} parent=0 // loop_body
    %s17 = ssub.s32 %s12, 1
    %s18 = ssub.s32 %s12, 2
    %s19 = sadd.s32 %s12, 1
    %s20 = ssub.s32 %s12, %s19
    %p21 = scmp.eq.s32.totalorder %s20, 0
    %s23 = sadd.s32 %s22, 1
    %s24 = scalar_select %p21, %s22, %s23
    %p27 = pneg %p21
    %p28 = scmp.eq.s32.totalorder %s12, 1
    %p29 = por %p27, %p28
    %p30 = scmp.ne.s32.totalorder %s22, %s25
    %p31 = scmp.eq.s32.totalorder %s12, 0
    %p32 = por %p30, %p31
    %p33 = scmp.ne.s32.totalorder %s22, %s25
    %p34 = scmp.eq.s32.totalorder %s17, 1
    %p35 = por %p33, %p34
    %p36 = scmp.ne.s32.totalorder %s25, %s26
    %p37 = scmp.eq.s32.totalorder %s17, 0
    %p38 = por %p36, %p37
    %p39 = scmp.ne.s32.totalorder %s25, %s26
    %p40 = scmp.eq.s32.totalorder %s18, 1
    %p41 = por %p39, %p40
    %p43 = scmp.ne.s32.totalorder %s26, %s42
    %p44 = scmp.eq.s32.totalorder %s18, 0
    %p45 = por %p43, %p44
    %s47 = sadd.s32 %s46, 1
    %p50 = scmp.eq.s32.totalorder %s12, 1
    %p51 = scmp.ne.s32.totalorder %s46, %s48
    %p52 = scmp.eq.s32.totalorder %s12, 0
    %p53 = por %p51, %p52
    %p54 = scmp.ne.s32.totalorder %s46, %s48
    %p55 = scmp.eq.s32.totalorder %s17, 1
    %p56 = por %p54, %p55
    %p57 = scmp.ne.s32.totalorder %s48, %s49
    %p58 = scmp.eq.s32.totalorder %s17, 0
    %p59 = por %p57, %p58
    %p60 = scmp.ne.s32.totalorder %s48, %s49
    %p61 = scmp.eq.s32.totalorder %s18, 1
    %p62 = por %p60, %p61
    %p64 = scmp.ne.s32.totalorder %s49, %s63
    %p65 = scmp.eq.s32.totalorder %s18, 0
    %p66 = por %p64, %p65
    %s68 = sadd.s32 %s67, 1
    %p71 = scmp.eq.s32.totalorder %s12, 1
    %p72 = scmp.ne.s32.totalorder %s67, %s69
    %p73 = scmp.eq.s32.totalorder %s12, 0
    %p74 = por %p72, %p73
    %p75 = scmp.ne.s32.totalorder %s67, %s69
    %p76 = scmp.eq.s32.totalorder %s17, 1
    %p77 = por %p75, %p76
    %p78 = scmp.ne.s32.totalorder %s69, %s70
    %p79 = scmp.eq.s32.totalorder %s17, 0
    %p80 = por %p78, %p79
    %p81 = scmp.ne.s32.totalorder %s69, %s70
    %p82 = scmp.eq.s32.totalorder %s18, 1
    %p83 = por %p81, %p82
    %p85 = scmp.ne.s32.totalorder %s70, %s84
    %p86 = scmp.eq.s32.totalorder %s18, 0
    %p87 = por %p85, %p86
    %s89 = sadd.s32 %s88, 1
    %p92 = scmp.eq.s32.totalorder %s12, 1
    %p93 = scmp.ne.s32.totalorder %s88, %s90
    %p94 = scmp.eq.s32.totalorder %s12, 0
    %p95 = por %p93, %p94
    %p96 = scmp.ne.s32.totalorder %s88, %s90
    %p97 = scmp.eq.s32.totalorder %s17, 1
    %p98 = por %p96, %p97
    %p99 = scmp.ne.s32.totalorder %s90, %s91
    %p100 = scmp.eq.s32.totalorder %s17, 0
    %p101 = por %p99, %p100
    %p102 = scmp.ne.s32.totalorder %s90, %s91
    %p103 = scmp.eq.s32.totalorder %s18, 1
    %p104 = por %p102, %p103
    %p106 = scmp.ne.s32.totalorder %s91, %s105
    %p107 = scmp.eq.s32.totalorder %s18, 0
    %p108 = por %p106, %p107
    %s109 = ssub.s32 %s12, %s19
    %p110 = scmp.eq.s32.totalorder %s109, 0
    %s112 = sadd.s32 %s111, 1
    %s113 = scalar_select %p110, %s111, %s112
    %p116 = pneg %p110
    %p117 = scmp.eq.s32.totalorder %s12, 1
    %p118 = por %p116, %p117
    %p119 = scmp.ne.s32.totalorder %s111, %s114
    %p120 = scmp.eq.s32.totalorder %s12, 0
    %p121 = por %p119, %p120
    %p122 = scmp.ne.s32.totalorder %s111, %s114
    %p123 = scmp.eq.s32.totalorder %s17, 1
    %p124 = por %p122, %p123
    %p125 = scmp.ne.s32.totalorder %s114, %s115
    %p126 = scmp.eq.s32.totalorder %s17, 0
    %p127 = por %p125, %p126
    %p128 = scmp.ne.s32.totalorder %s114, %s115
    %p129 = scmp.eq.s32.totalorder %s18, 1
    %p130 = por %p128, %p129
    %p132 = scmp.ne.s32.totalorder %s115, %s131
    %p133 = scmp.eq.s32.totalorder %s18, 0
    %p134 = por %p132, %p133
    %p135 = scmp.le.s32.totalorder 1, %s12
    %p136 = scmp.lt.s32.totalorder %s12, 3
    %p137 = pnand %p135, %p136
    %p138 = pneg %p137
    // Predicated region
    $region9: #{_forward_impl.8} parent=5 // pred_check
      _
    $region10: #{_forward_impl.8} parent=5 // pred_check_branch
      %140 = sbr.rel (%p137) target = $region12
    $region11: #{_forward_impl.8} parent=5 // pred_region
      %s141 = ssub.s32 %s12, 1
      // Predicated region
      $region13: #{_forward_impl.8} parent=11 // pred_check
        %p142 = pneg %p59
      $region14: #{_forward_impl.8} parent=11 // pred_check_branch
        %144 = sbr.rel (%p142) target = $region16
      $region15: #{_forward_impl.8} parent=11 // pred_region
        _
      $region16: #{_forward_impl.8} parent=11 // pred_fallthru
        _
      // Predicated region
      $region17: #{_forward_impl.8} parent=11 // pred_check
        %p145 = pneg %p80
      $region18: #{_forward_impl.8} parent=11 // pred_check_branch
        %147 = sbr.rel (%p145) target = $region20
      $region19: #{_forward_impl.8} parent=11 // pred_region
        _
      $region20: #{_forward_impl.8} parent=11 // pred_fallthru
        _
      // Predicated region
      $region21: #{_forward_impl.8} parent=11 // pred_check
        %p148 = pneg %p101
      $region22: #{_forward_impl.8} parent=11 // pred_check_branch
        %150 = sbr.rel (%p148) target = $region24
      $region23: #{_forward_impl.8} parent=11 // pred_region
        _
      $region24: #{_forward_impl.8} parent=11 // pred_fallthru
        _
    $region12: #{_forward_impl.8} parent=5 // pred_fallthru
      _
    %p151 = scmp.lt.s32.totalorder %s12, 2
    // Predicated region
    $region25: #{_forward_impl.8} parent=5 // pred_check
      %p152 = pneg %p151
    $region26: #{_forward_impl.8} parent=5 // pred_check_branch
      %154 = sbr.rel (%p152) target = $region28
    $region27: #{_forward_impl.8} parent=5 // pred_region
      // Predicated region
      $region29: #{_forward_impl.8} parent=27 // pred_check
        %p155 = pneg %p32
      $region30: #{_forward_impl.8} parent=27 // pred_check_branch
        %157 = sbr.rel (%p155) target = $region32
      $region31: #{_forward_impl.8} parent=27 // pred_region
        %p158 = scmp.lt.s32.totalorder %s12, 1
        %s159 = scalar_select %p158, %s12, 1
        %s160 = smul.addr %s159, 2
        %s161 = smul.addr %s160, 8
        %s162 = scalar_lea.vmem %s0, %s161
      $region32: #{_forward_impl.8} parent=27 // pred_fallthru
        _
    $region28: #{_forward_impl.8} parent=5 // pred_fallthru
      _
    %p163 = scmp.le.s32.totalorder 1, %s12
    %p164 = scmp.lt.s32.totalorder %s12, 3
    %p165 = pnand %p163, %p164
    %p166 = pneg %p165
    // Predicated region
    $region33: #{_forward_impl.8} parent=5 // pred_check
      _
    $region34: #{_forward_impl.8} parent=5 // pred_check_branch
      %168 = sbr.rel (%p165) target = $region36
    $region35: #{_forward_impl.8} parent=5 // pred_region
      %s169 = ssub.s32 %s12, 1
      %p170 = scmp.lt.s32.totalorder %s17, 1
      %s171 = scalar_select %p170, %s17, 1
      %s172 = smul.addr %s171, 2
      %s173 = smul.addr %s172, 8
      %s174 = scalar_lea.vmem %s0, %s173
      %p175 = pneg %p38
      %p176 = pneg %p35
      %p177 = pneg %p59
      %p178 = pneg %p56
      %p179 = pneg %p80
      %p180 = pneg %p77
      %p181 = pneg %p101
      %p182 = pneg %p98
      %p183 = pneg %p127
      %p184 = pneg %p124
      %p185 = scmp.lt.s32.totalorder %s17, 1
      %s186 = scalar_select %p185, %s17, 1
      %s187 = smul.addr %s186, 2
      %s188 = smul.addr %s187, 8
      %s189 = scalar_lea.vmem %s4, %s188
      %p190 = scmp.lt.s32.totalorder %s17, 1
      %s191 = scalar_select %p190, %s17, 1
      %s192 = smul.addr %s191, 2
      %s193 = smul.addr %s192, 8
      %s194 = scalar_lea.vmem %s0, %s193
      %p195 = scmp.lt.s32.totalorder %s17, 1
      %s196 = scalar_select %p195, %s17, 1
      %s197 = smul.addr %s196, 2
      %s198 = smul.addr %s197, 8
      %s199 = scalar_lea.vmem %s4, %s198
      %v200 = vld [vmem:[%s194] sm:$0xff]
      %v201 = vld [vmem:[%s194 + $0x8] sm:$0xff]
      %vm202 = vcmp.ge.f32.partialorder %v200, 0.0
      %vm203 = vcmp.ge.f32.partialorder %v201, 0.0
      %v204 = vld [vmem:[#allocation2] sm:$0x1]
      %v206 = vlaneseq
      %v207 = vshrl.u32 %v206, 7
      %v208 = vsub.s32 0, %v207
      %v209 = vrot.slane %v204, %v208
      %210 = vset.pattern.permute.xlu0 0
      %211 = vperm.xlu0 %210, %v209
      %v212 = vpop.permute.xlu0 %211
      %v214 = vmul.f32 %v200, %v212
      %v215 = vmul.f32 %v201, %v212
      %v216 = vsel %vm202, %v200, %v214
      %v217 = vsel %vm203, %v201, %v215
      %v218 = vld [vmem:[%s1] sm:$0xff]
      %v219 = vld [vmem:[%s1 + $0x8] sm:$0xff]
      %v220 = vld [vmem:[%s2] sm:$0xff]
      %v221 = vld [vmem:[%s2 + $0x8] sm:$0xff]
      %223 = vset.pattern.permute.xlu0 0
      %224 = vperm.xlu0 %223, %v220
      %v225 = vpop.permute.xlu0 %224
      %228 = vset.pattern.permute.xlu0 0
      %229 = vperm.xlu0 %228, %v221
      %v230 = vpop.permute.xlu0 %229
      %vm232 = vcmask 130048
      %v234 = vsel %vm232, %v218, 0
      %v237 = vsel %vm232, %v219, 0
      %239 = vmatprep.subr.mxu0 0.0
      %240 = vmatpush1.msra.mxu0 %v216
      %241 = vmatprep.subr.mxu0 0.0
      %242 = vmatpush1.msra.mxu0 %v217
      %243 = vmatprep.subr.mxu0 0.0
      %244 = vmatpush1.msra.mxu0 0.0
      %245 = vmatprep.subr.mxu0 0.0
      %246 = vmatpush1.msra.mxu0 0.0
      %247 = vmatprep.subr.mxu0 0.0
      %248 = vmatpush1.msra.mxu0 0.0
      %249 = vmatprep.subr.mxu0 0.0
      %250 = vmatpush1.msra.mxu0 0.0
      %251 = vmatprep.subr.mxu0 0.0
      %252 = vmatpush1.msra.mxu0 0.0
      %253 = vmatprep.subr.mxu0 0.0
      %254 = vmatpush1.msra.mxu0 0.0
      %255 = vmatprep.subr.mxu0 0.0
      %256 = vmatpush1.msra.mxu0 0.0
      %257 = vmatprep.subr.mxu0 0.0
      %258 = vmatpush1.msra.mxu0 0.0
      %259 = vmatprep.subr.mxu0 0.0
      %260 = vmatpush1.msra.mxu0 0.0
      %261 = vmatprep.subr.mxu0 0.0
      %262 = vmatpush1.msra.mxu0 0.0
      %263 = vmatprep.subr.mxu0 0.0
      %264 = vmatpush1.msra.mxu0 0.0
      %265 = vmatprep.subr.mxu0 0.0
      %266 = vmatpush1.msra.mxu0 0.0
      %267 = vmatprep.subr.mxu0 0.0
      %268 = vmatpush1.msra.mxu0 0.0
      %269 = vmatprep.subr.mxu0 0.0
      %270 = vmatpush1.msra.mxu0 0.0
      %271 = vmatprep.subr.mxu0 0.0
      %272 = vmatpush1.msra.mxu0 0.0
      %273 = vmatprep.subr.mxu0 0.0
      %274 = vmatpush1.msra.mxu0 0.0
      %275 = vmatprep.subr.mxu0 0.0
      %276 = vmatpush1.msra.mxu0 0.0
      %277 = vmatprep.subr.mxu0 0.0
      %278 = vmatpush1.msra.mxu0 0.0
      %279 = vmatprep.subr.mxu0 0.0
      %280 = vmatpush1.msra.mxu0 0.0
      %281 = vmatprep.subr.mxu0 0.0
      %282 = vmatpush1.msra.mxu0 0.0
      %283 = vmatprep.subr.mxu0 0.0
      %284 = vmatpush1.msra.mxu0 0.0
      %285 = vmatprep.subr.mxu0 0.0
      %286 = vmatpush1.msra.mxu0 0.0
      %287 = vmatprep.subr.mxu0 0.0
      %288 = vmatpush1.msra.mxu0 0.0
      %289 = vmatprep.subr.mxu0 0.0
      %290 = vmatpush1.msra.mxu0 0.0
      %291 = vmatprep.subr.mxu0 0.0
      %292 = vmatpush1.msra.mxu0 0.0
      %293 = vmatprep.subr.mxu0 0.0
      %294 = vmatpush1.msra.mxu0 0.0
      %295 = vmatprep.subr.mxu0 0.0
      %296 = vmatpush1.msra.mxu0 0.0
      %297 = vmatprep.subr.mxu0 0.0
      %298 = vmatpush1.msra.mxu0 0.0
      %299 = vmatprep.subr.mxu0 0.0
      %300 = vmatpush1.msra.mxu0 0.0
      %301 = vmatprep.subr.mxu0 0.0
      %302 = vmatpush1.msra.mxu0 0.0
      %303 = vmatprep.mubr.f32.mxu0 0.0
      %304 = vmatmul.mubr.f32.gmra.mrb[0].mxu0 %v234
      %v305 = vpop.f32.mrb[0].mxu0
      %v306 = vadd.f32 %v225, %v305
      %v307 = vpop.f32.mrb[0].mxu0
      %308 = vmatprep.mubr.f32.mxu0 0.0
      %309 = vmatmul.mubr.f32.gmra.mrb[0].mxu0 %v237
      %v310 = vpop.f32.mrb[0].mxu0
      %v311 = vadd.f32 %v230, %v310
      %v312 = vpop.f32.mrb[0].mxu0
      %313 = vdwg.mxu0
      %vm314 = vcmask 64512
      %315 = vst.msk [vmem:[%s199] sm:$0xff] %vm314, %v306
      %316 = vst.msk [vmem:[%s199 + $0x8] sm:$0xff] %vm314, %v311
      %p317 = scmp.lt.s32.totalorder %s17, 1
      %s318 = scalar_select %p317, %s17, 1
      %s319 = smul.addr %s318, 2
      %s320 = smul.addr %s319, 8
      %s321 = scalar_lea.vmem %s4, %s320
      // Predicated region
      $region37: #{_forward_impl.8} parent=35 // pred_check
        %p322 = pneg %p124
      $region38: #{_forward_impl.8} parent=35 // pred_check_branch
        %324 = sbr.rel (%p322) target = $region40
      $region39: #{_forward_impl.8} parent=35 // pred_region
        _
      $region40: #{_forward_impl.8} parent=35 // pred_fallthru
        _
    $region36: #{_forward_impl.8} parent=5 // pred_fallthru
      _
    %p325 = scmp.le.s32.totalorder 2, %s12
    // Predicated region
    $region41: #{_forward_impl.8} parent=5 // pred_check
      %p326 = pneg %p325
    $region42: #{_forward_impl.8} parent=5 // pred_check_branch
      %328 = sbr.rel (%p326) target = $region44
    $region43: #{_forward_impl.8} parent=5 // pred_region
      %s329 = ssub.s32 %s12, 2
      // Predicated region
      $region45: #{_forward_impl.8} parent=43 // pred_check
        %p330 = pneg %p130
      $region46: #{_forward_impl.8} parent=43 // pred_check_branch
        %332 = sbr.rel (%p330) target = $region48
      $region47: #{_forward_impl.8} parent=43 // pred_region
        %p333 = scmp.lt.s32.totalorder %s18, 1
        %s334 = scalar_select %p333, %s18, 1
        %s335 = smul.addr %s334, 2
        %s336 = smul.addr %s335, 8
        %s337 = scalar_lea.vmem %s4, %s336
      $region48: #{_forward_impl.8} parent=43 // pred_fallthru
        _
    $region44: #{_forward_impl.8} parent=5 // pred_fallthru
      _
  $region6: #{_forward_impl.8} parent=0 // loop_footer
    %s16 = sadd.s32 1, %s12
  $region7: #{_forward_impl.8} parent=0 // loop_footer_branch
    %11 = sbr.rel target = $region3
  $region8: #{_forward_impl.8} parent=0 // loop_exit
    _

// kernel: _forward_impl.9
$region0: #{_forward_impl.9}
  #allocation0 [shape = 'u32[]', space=smem, size = 0x4, offset = 0x4, fixed_abs, tag = 'smem constant byte address 0x4 - core index']
  #allocation1 [shape = 'u32[144,128]{1,0:T(1,128)}', space=vmem, size = 0x12000, scoped, tag = 'internal scratch']
  #allocation2 [shape = 'f32[48,16]{1,0:T(8,128)}', space=vmem, size = 0x6000, scoped, tag = 'scratch operand']
  %s0 = inlined_call_operand.vmem [shape: f32[2,16,9], index: 0, kind: input, shape index: {}]
  %s1 = inlined_call_operand.vmem [shape: f32[16,32], index: 1, kind: input, shape index: {}]
  %s2 = inlined_call_operand.vmem [shape: f32[16,1], index: 2, kind: input, shape index: {}]
  %s3 = inlined_call_operand.vmem [shape: f32[16,48], index: 3, kind: input, shape index: {}]
  %s4 = inlined_call_operand.vmem [shape: f32[16,1], index: 4, kind: input, shape index: {}]
  %s5 = inlined_call_operand.vmem [shape: f32[16,48], index: 5, kind: input, shape index: {}]
  %s6 = inlined_call_operand.vmem [shape: f32[16,1], index: 6, kind: input, shape index: {}]
  %s7 = inlined_call_operand.vmem [shape: f32[16,48], index: 7, kind: input, shape index: {}]
  %s8 = inlined_call_operand.vmem [shape: f32[16,1], index: 8, kind: input, shape index: {}]
  %s9 = inlined_call_operand.vmem [shape: f32[4,1], index: 9, kind: input, shape index: {}]
  %s10 = inlined_call_operand.vmem [shape: f32[2,16,8], index: 10, kind: output, shape index: {}]
  %s11 = sld [smem:[#allocation0]]
  $region73: #{_forward_impl.9} parent=0
    _
  %s13 = ssub.s32 1, %s11
  %s14 = scalar_select 0, %s13, %s11
  loop: start=0, step=1, limit=4
  $region2: #{_forward_impl.9} parent=0 // loop_pre_header
    _
  $region3: #{_forward_impl.9} parent=0 // loop_header
    %s16 = sphi 0, %s20
    %p17 = scmp.ge.s32.totalorder %s16, 4
    %s26 = sphi 0, %s28
    %s29 = sphi 0, %s26
    %s30 = sphi 0, %s29
    %s46 = sphi 0, %s30
    %s50 = sphi 0, %s50
    %s52 = sphi 0, %s50
    %s53 = sphi 0, %s52
    %s67 = sphi 0, %s53
    %s71 = sphi 0, %s71
    %s73 = sphi 0, %s71
    %s74 = sphi 0, %s73
    %s88 = sphi 0, %s74
    %s92 = sphi 0, %s92
    %s94 = sphi 0, %s92
    %s95 = sphi 0, %s94
    %s109 = sphi 0, %s95
    %s113 = sphi 0, %s113
    %s115 = sphi 0, %s113
    %s116 = sphi 0, %s115
    %s130 = sphi 0, %s116
    %s134 = sphi 0, %s134
    %s136 = sphi 0, %s134
    %s137 = sphi 0, %s136
    %s151 = sphi 0, %s137
    %s155 = sphi 0, %s155
    %s157 = sphi 0, %s155
    %s158 = sphi 0, %s157
    %s172 = sphi 0, %s158
    %s176 = sphi 0, %s176
    %s178 = sphi 0, %s176
    %s179 = sphi 0, %s178
    %s193 = sphi 0, %s179
    %s197 = sphi 0, %s197
    %s199 = sphi 0, %s197
    %s200 = sphi 0, %s199
    %s214 = sphi 0, %s200
    %s218 = sphi 0, %s218
    %s220 = sphi 0, %s218
    %s221 = sphi 0, %s220
    %s235 = sphi 0, %s221
    %s241 = sphi 0, %s243
    %s244 = sphi 0, %s241
    %s245 = sphi 0, %s244
    %s261 = sphi 0, %s245
  $region4: #{_forward_impl.9} parent=0 // loop_header_branch
    %19 = sbr.rel (%p17) target = $region8
  $region5: #{_forward_impl.9} parent=0 // loop_body
    %s21 = ssub.s32 %s16, 1
    %s22 = ssub.s32 %s16, 2
    %s23 = sadd.s32 %s16, 1
    %s24 = ssub.s32 %s16, %s23
    %p25 = scmp.eq.s32.totalorder %s24, 0
    %s27 = sadd.s32 %s26, 1
    %s28 = scalar_select %p25, %s26, %s27
    %p31 = pneg %p25
    %p32 = scmp.eq.s32.totalorder %s16, 1
    %p33 = por %p31, %p32
    %p34 = scmp.ne.s32.totalorder %s26, %s29
    %p35 = scmp.eq.s32.totalorder %s16, 0
    %p36 = por %p34, %p35
    %p37 = scmp.ne.s32.totalorder %s26, %s29
    %p38 = scmp.eq.s32.totalorder %s21, 1
    %p39 = por %p37, %p38
    %p40 = scmp.ne.s32.totalorder %s29, %s30
    %p41 = scmp.eq.s32.totalorder %s21, 0
    %p42 = por %p40, %p41
    %p43 = scmp.ne.s32.totalorder %s29, %s30
    %p44 = scmp.eq.s32.totalorder %s22, 1
    %p45 = por %p43, %p44
    %p47 = scmp.ne.s32.totalorder %s30, %s46
    %p48 = scmp.eq.s32.totalorder %s22, 0
    %p49 = por %p47, %p48
    %s51 = sadd.s32 %s50, 1
    %p54 = scmp.eq.s32.totalorder %s16, 1
    %p55 = scmp.ne.s32.totalorder %s50, %s52
    %p56 = scmp.eq.s32.totalorder %s16, 0
    %p57 = por %p55, %p56
    %p58 = scmp.ne.s32.totalorder %s50, %s52
    %p59 = scmp.eq.s32.totalorder %s21, 1
    %p60 = por %p58, %p59
    %p61 = scmp.ne.s32.totalorder %s52, %s53
    %p62 = scmp.eq.s32.totalorder %s21, 0
    %p63 = por %p61, %p62
    %p64 = scmp.ne.s32.totalorder %s52, %s53
    %p65 = scmp.eq.s32.totalorder %s22, 1
    %p66 = por %p64, %p65
    %p68 = scmp.ne.s32.totalorder %s53, %s67
    %p69 = scmp.eq.s32.totalorder %s22, 0
    %p70 = por %p68, %p69
    %s72 = sadd.s32 %s71, 1
    %p75 = scmp.eq.s32.totalorder %s16, 1
    %p76 = scmp.ne.s32.totalorder %s71, %s73
    %p77 = scmp.eq.s32.totalorder %s16, 0
    %p78 = por %p76, %p77
    %p79 = scmp.ne.s32.totalorder %s71, %s73
    %p80 = scmp.eq.s32.totalorder %s21, 1
    %p81 = por %p79, %p80
    %p82 = scmp.ne.s32.totalorder %s73, %s74
    %p83 = scmp.eq.s32.totalorder %s21, 0
    %p84 = por %p82, %p83
    %p85 = scmp.ne.s32.totalorder %s73, %s74
    %p86 = scmp.eq.s32.totalorder %s22, 1
    %p87 = por %p85, %p86
    %p89 = scmp.ne.s32.totalorder %s74, %s88
    %p90 = scmp.eq.s32.totalorder %s22, 0
    %p91 = por %p89, %p90
    %s93 = sadd.s32 %s92, 1
    %p96 = scmp.eq.s32.totalorder %s16, 1
    %p97 = scmp.ne.s32.totalorder %s92, %s94
    %p98 = scmp.eq.s32.totalorder %s16, 0
    %p99 = por %p97, %p98
    %p100 = scmp.ne.s32.totalorder %s92, %s94
    %p101 = scmp.eq.s32.totalorder %s21, 1
    %p102 = por %p100, %p101
    %p103 = scmp.ne.s32.totalorder %s94, %s95
    %p104 = scmp.eq.s32.totalorder %s21, 0
    %p105 = por %p103, %p104
    %p106 = scmp.ne.s32.totalorder %s94, %s95
    %p107 = scmp.eq.s32.totalorder %s22, 1
    %p108 = por %p106, %p107
    %p110 = scmp.ne.s32.totalorder %s95, %s109
    %p111 = scmp.eq.s32.totalorder %s22, 0
    %p112 = por %p110, %p111
    %s114 = sadd.s32 %s113, 1
    %p117 = scmp.eq.s32.totalorder %s16, 1
    %p118 = scmp.ne.s32.totalorder %s113, %s115
    %p119 = scmp.eq.s32.totalorder %s16, 0
    %p120 = por %p118, %p119
    %p121 = scmp.ne.s32.totalorder %s113, %s115
    %p122 = scmp.eq.s32.totalorder %s21, 1
    %p123 = por %p121, %p122
    %p124 = scmp.ne.s32.totalorder %s115, %s116
    %p125 = scmp.eq.s32.totalorder %s21, 0
    %p126 = por %p124, %p125
    %p127 = scmp.ne.s32.totalorder %s115, %s116
    %p128 = scmp.eq.s32.totalorder %s22, 1
    %p129 = por %p127, %p128
    %p131 = scmp.ne.s32.totalorder %s116, %s130
    %p132 = scmp.eq.s32.totalorder %s22, 0
    %p133 = por %p131, %p132
    %s135 = sadd.s32 %s134, 1
    %p138 = scmp.eq.s32.totalorder %s16, 1
    %p139 = scmp.ne.s32.totalorder %s134, %s136
    %p140 = scmp.eq.s32.totalorder %s16, 0
    %p141 = por %p139, %p140
    %p142 = scmp.ne.s32.totalorder %s134, %s136
    %p143 = scmp.eq.s32.totalorder %s21, 1
    %p144 = por %p142, %p143
    %p145 = scmp.ne.s32.totalorder %s136, %s137
    %p146 = scmp.eq.s32.totalorder %s21, 0
    %p147 = por %p145, %p146
    %p148 = scmp.ne.s32.totalorder %s136, %s137
    %p149 = scmp.eq.s32.totalorder %s22, 1
    %p150 = por %p148, %p149
    %p152 = scmp.ne.s32.totalorder %s137, %s151
    %p153 = scmp.eq.s32.totalorder %s22, 0
    %p154 = por %p152, %p153
    %s156 = sadd.s32 %s155, 1
    %p159 = scmp.eq.s32.totalorder %s16, 1
    %p160 = scmp.ne.s32.totalorder %s155, %s157
    %p161 = scmp.eq.s32.totalorder %s16, 0
    %p162 = por %p160, %p161
    %p163 = scmp.ne.s32.totalorder %s155, %s157
    %p164 = scmp.eq.s32.totalorder %s21, 1
    %p165 = por %p163, %p164
    %p166 = scmp.ne.s32.totalorder %s157, %s158
    %p167 = scmp.eq.s32.totalorder %s21, 0
    %p168 = por %p166, %p167
    %p169 = scmp.ne.s32.totalorder %s157, %s158
    %p170 = scmp.eq.s32.totalorder %s22, 1
    %p171 = por %p169, %p170
    %p173 = scmp.ne.s32.totalorder %s158, %s172
    %p174 = scmp.eq.s32.totalorder %s22, 0
    %p175 = por %p173, %p174
    %s177 = sadd.s32 %s176, 1
    %p180 = scmp.eq.s32.totalorder %s16, 1
    %p181 = scmp.ne.s32.totalorder %s176, %s178
    %p182 = scmp.eq.s32.totalorder %s16, 0
    %p183 = por %p181, %p182
    %p184 = scmp.ne.s32.totalorder %s176, %s178
    %p185 = scmp.eq.s32.totalorder %s21, 1
    %p186 = por %p184, %p185
    %p187 = scmp.ne.s32.totalorder %s178, %s179
    %p188 = scmp.eq.s32.totalorder %s21, 0
    %p189 = por %p187, %p188
    %p190 = scmp.ne.s32.totalorder %s178, %s179
    %p191 = scmp.eq.s32.totalorder %s22, 1
    %p192 = por %p190, %p191
    %p194 = scmp.ne.s32.totalorder %s179, %s193
    %p195 = scmp.eq.s32.totalorder %s22, 0
    %p196 = por %p194, %p195
    %s198 = sadd.s32 %s197, 1
    %p201 = scmp.eq.s32.totalorder %s16, 1
    %p202 = scmp.ne.s32.totalorder %s197, %s199
    %p203 = scmp.eq.s32.totalorder %s16, 0
    %p204 = por %p202, %p203
    %p205 = scmp.ne.s32.totalorder %s197, %s199
    %p206 = scmp.eq.s32.totalorder %s21, 1
    %p207 = por %p205, %p206
    %p208 = scmp.ne.s32.totalorder %s199, %s200
    %p209 = scmp.eq.s32.totalorder %s21, 0
    %p210 = por %p208, %p209
    %p211 = scmp.ne.s32.totalorder %s199, %s200
    %p212 = scmp.eq.s32.totalorder %s22, 1
    %p213 = por %p211, %p212
    %p215 = scmp.ne.s32.totalorder %s200, %s214
    %p216 = scmp.eq.s32.totalorder %s22, 0
    %p217 = por %p215, %p216
    %s219 = sadd.s32 %s218, 1
    %p222 = scmp.eq.s32.totalorder %s16, 1
    %p223 = scmp.ne.s32.totalorder %s218, %s220
    %p224 = scmp.eq.s32.totalorder %s16, 0
    %p225 = por %p223, %p224
    %p226 = scmp.ne.s32.totalorder %s218, %s220
    %p227 = scmp.eq.s32.totalorder %s21, 1
    %p228 = por %p226, %p227
    %p229 = scmp.ne.s32.totalorder %s220, %s221
    %p230 = scmp.eq.s32.totalorder %s21, 0
    %p231 = por %p229, %p230
    %p232 = scmp.ne.s32.totalorder %s220, %s221
    %p233 = scmp.eq.s32.totalorder %s22, 1
    %p234 = por %p232, %p233
    %p236 = scmp.ne.s32.totalorder %s221, %s235
    %p237 = scmp.eq.s32.totalorder %s22, 0
    %p238 = por %p236, %p237
    %s239 = ssub.s32 %s16, %s23
    %p240 = scmp.eq.s32.totalorder %s239, 0
    %s242 = sadd.s32 %s241, 1
    %s243 = scalar_select %p240, %s241, %s242
    %p246 = pneg %p240
    %p247 = scmp.eq.s32.totalorder %s16, 1
    %p248 = por %p246, %p247
    %p249 = scmp.ne.s32.totalorder %s241, %s244
    %p250 = scmp.eq.s32.totalorder %s16, 0
    %p251 = por %p249, %p250
    %p252 = scmp.ne.s32.totalorder %s241, %s244
    %p253 = scmp.eq.s32.totalorder %s21, 1
    %p254 = por %p252, %p253
    %p255 = scmp.ne.s32.totalorder %s244, %s245
    %p256 = scmp.eq.s32.totalorder %s21, 0
    %p257 = por %p255, %p256
    %p258 = scmp.ne.s32.totalorder %s244, %s245
    %p259 = scmp.eq.s32.totalorder %s22, 1
    %p260 = por %p258, %p259
    %p262 = scmp.ne.s32.totalorder %s245, %s261
    %p263 = scmp.eq.s32.totalorder %s22, 0
    %p264 = por %p262, %p263
    %p265 = scmp.le.s32.totalorder 1, %s16
    %p266 = scmp.lt.s32.totalorder %s16, 3
    %p267 = pnand %p265, %p266
    %p268 = pneg %p267
    // Predicated region
    $region9: #{_forward_impl.9} parent=5 // pred_check
      _
    $region10: #{_forward_impl.9} parent=5 // pred_check_branch
      %270 = sbr.rel (%p267) target = $region12
    $region11: #{_forward_impl.9} parent=5 // pred_region
      %s271 = ssub.s32 %s16, 1
      // Predicated region
      $region13: #{_forward_impl.9} parent=11 // pred_check
        %p272 = pneg %p63
      $region14: #{_forward_impl.9} parent=11 // pred_check_branch
        %274 = sbr.rel (%p272) target = $region16
      $region15: #{_forward_impl.9} parent=11 // pred_region
        _
      $region16: #{_forward_impl.9} parent=11 // pred_fallthru
        _
      // Predicated region
      $region17: #{_forward_impl.9} parent=11 // pred_check
        %p275 = pneg %p84
      $region18: #{_forward_impl.9} parent=11 // pred_check_branch
        %277 = sbr.rel (%p275) target = $region20
      $region19: #{_forward_impl.9} parent=11 // pred_region
        _
      $region20: #{_forward_impl.9} parent=11 // pred_fallthru
        _
      // Predicated region
      $region21: #{_forward_impl.9} parent=11 // pred_check
        %p278 = pneg %p105
      $region22: #{_forward_impl.9} parent=11 // pred_check_branch
        %280 = sbr.rel (%p278) target = $region24
      $region23: #{_forward_impl.9} parent=11 // pred_region
        _
      $region24: #{_forward_impl.9} parent=11 // pred_fallthru
        _
      // Predicated region
      $region25: #{_forward_impl.9} parent=11 // pred_check
        %p281 = pneg %p126
      $region26: #{_forward_impl.9} parent=11 // pred_check_branch
        %283 = sbr.rel (%p281) target = $region28
      $region27: #{_forward_impl.9} parent=11 // pred_region
        _
      $region28: #{_forward_impl.9} parent=11 // pred_fallthru
        _
      // Predicated region
      $region29: #{_forward_impl.9} parent=11 // pred_check
        %p284 = pneg %p147
      $region30: #{_forward_impl.9} parent=11 // pred_check_branch
        %286 = sbr.rel (%p284) target = $region32
      $region31: #{_forward_impl.9} parent=11 // pred_region
        _
      $region32: #{_forward_impl.9} parent=11 // pred_fallthru
        _
      // Predicated region
      $region33: #{_forward_impl.9} parent=11 // pred_check
        %p287 = pneg %p168
      $region34: #{_forward_impl.9} parent=11 // pred_check_branch
        %289 = sbr.rel (%p287) target = $region36
      $region35: #{_forward_impl.9} parent=11 // pred_region
        _
      $region36: #{_forward_impl.9} parent=11 // pred_fallthru
        _
      // Predicated region
      $region37: #{_forward_impl.9} parent=11 // pred_check
        %p290 = pneg %p189
      $region38: #{_forward_impl.9} parent=11 // pred_check_branch
        %292 = sbr.rel (%p290) target = $region40
      $region39: #{_forward_impl.9} parent=11 // pred_region
        _
      $region40: #{_forward_impl.9} parent=11 // pred_fallthru
        _
      // Predicated region
      $region41: #{_forward_impl.9} parent=11 // pred_check
        %p293 = pneg %p210
      $region42: #{_forward_impl.9} parent=11 // pred_check_branch
        %295 = sbr.rel (%p293) target = $region44
      $region43: #{_forward_impl.9} parent=11 // pred_region
        _
      $region44: #{_forward_impl.9} parent=11 // pred_fallthru
        _
      // Predicated region
      $region45: #{_forward_impl.9} parent=11 // pred_check
        %p296 = pneg %p231
      $region46: #{_forward_impl.9} parent=11 // pred_check_branch
        %298 = sbr.rel (%p296) target = $region48
      $region47: #{_forward_impl.9} parent=11 // pred_region
        _
      $region48: #{_forward_impl.9} parent=11 // pred_fallthru
        _
    $region12: #{_forward_impl.9} parent=5 // pred_fallthru
      _
    %p299 = scmp.lt.s32.totalorder %s16, 2
    // Predicated region
    $region49: #{_forward_impl.9} parent=5 // pred_check
      %p300 = pneg %p299
    $region50: #{_forward_impl.9} parent=5 // pred_check_branch
      %302 = sbr.rel (%p300) target = $region52
    $region51: #{_forward_impl.9} parent=5 // pred_region
      // Predicated region
      $region53: #{_forward_impl.9} parent=51 // pred_check
        %p303 = pneg %p36
      $region54: #{_forward_impl.9} parent=51 // pred_check_branch
        %305 = sbr.rel (%p303) target = $region56
      $region55: #{_forward_impl.9} parent=51 // pred_region
        %p306 = scmp.lt.s32.totalorder %s16, 1
        %s307 = scalar_select %p306, %s16, 1
        %s308 = smul.addr %s307, 2
        %s309 = smul.addr %s308, 8
        %s310 = scalar_lea.vmem %s0, %s309
      $region56: #{_forward_impl.9} parent=51 // pred_fallthru
        _
    $region52: #{_forward_impl.9} parent=5 // pred_fallthru
      _
    %p311 = scmp.le.s32.totalorder 1, %s16
    %p312 = scmp.lt.s32.totalorder %s16, 3
    %p313 = pnand %p311, %p312
    %p314 = pneg %p313
    // Predicated region
    $region57: #{_forward_impl.9} parent=5 // pred_check
      _
    $region58: #{_forward_impl.9} parent=5 // pred_check_branch
      %316 = sbr.rel (%p313) target = $region60
    $region59: #{_forward_impl.9} parent=5 // pred_region
      %s317 = ssub.s32 %s16, 1
      %p318 = scmp.lt.s32.totalorder %s21, 1
      %s319 = scalar_select %p318, %s21, 1
      %s320 = smul.addr %s319, 2
      %s321 = smul.addr %s320, 8
      %s322 = scalar_lea.vmem %s0, %s321
      %p323 = pneg %p42
      %p324 = pneg %p39
      %p325 = pneg %p63
      %p326 = pneg %p60
      %p327 = pneg %p84
      %p328 = pneg %p81
      %p329 = pneg %p105
      %p330 = pneg %p102
      %p331 = pneg %p126
      %p332 = pneg %p123
      %p333 = pneg %p147
      %p334 = pneg %p144
      %p335 = pneg %p168
      %p336 = pneg %p165
      %p337 = pneg %p189
      %p338 = pneg %p186
      %p339 = pneg %p210
      %p340 = pneg %p207
      %p341 = pneg %p231
      %p342 = pneg %p228
      %p343 = pneg %p257
      %p344 = pneg %p254
      %p345 = scmp.lt.s32.totalorder %s21, 1
      %s346 = scalar_select %p345, %s21, 1
      %s347 = smul.addr %s346, 2
      %s348 = smul.addr %s347, 8
      %s349 = scalar_lea.vmem %s10, %s348
      %p350 = scmp.lt.s32.totalorder %s21, 1
      %s351 = scalar_select %p350, %s21, 1
      %s352 = smul.addr %s351, 2
      %s353 = smul.addr %s352, 8
      %s354 = scalar_lea.vmem %s0, %s353
      %p355 = scmp.lt.s32.totalorder %s21, 1
      %s356 = scalar_select %p355, %s21, 1
      %s357 = smul.addr %s356, 2
      %s358 = smul.addr %s357, 8
      %s359 = scalar_lea.vmem %s10, %s358
      %v360 = vld [vmem:[%s9] sm:$0xf]
      %v361 = vld [vmem:[%s354] sm:$0xff]
      %v362 = vld [vmem:[%s354 + $0x8] sm:$0xff]
      %vm363 = vcmp.ge.f32.partialorder %v361, 0.0
      %vm364 = vcmp.ge.f32.partialorder %v362, 0.0
      %s366 = vtos %v360
      %v367 = vstv %s366
      %v369 = vmul.f32 %v361, %v367
      %v370 = vmul.f32 %v362, %v367
      %v371 = vsel %vm363, %v361, %v369
      %v372 = vsel %vm364, %v362, %v370
      %vm373 = vcmask 64512
      %374 = vst.msk [vmem:[#allocation2] sm:$0xff] %vm373, %v371
      %375 = vst.msk [vmem:[#allocation2 + $0x8] sm:$0xff] %vm373, %v372
      %378 = vrot.lane.b32.xlu0 %v371, 127
      %v379 = vpop.permute.xlu0 %378
      %380 = vrot.lane.b32.xlu0 %v372, 127
      %v381 = vpop.permute.xlu0 %380
      %384 = vst.msk [vmem:[#allocation2 + $0x10] sm:$0xff] %vm373, %v379
      %385 = vst.msk [vmem:[#allocation2 + $0x18] sm:$0xff] %vm373, %v381
      %v386 = vld [vmem:[#allocation2] sm:$0xff]
      %v387 = vld [vmem:[#allocation2 + $0x8] sm:$0xff]
      %v388 = vld [vmem:[#allocation2 + $0x10] sm:$0xff]
      %v389 = vld [vmem:[#allocation2 + $0x18] sm:$0xff]
      %v390 = vld [vmem:[%s1] sm:$0xff]
      %v391 = vld [vmem:[%s1 + $0x8] sm:$0xff]
      %v392 = vld [vmem:[%s2] sm:$0xff]
      %v393 = vld [vmem:[%s2 + $0x8] sm:$0xff]
      %395 = vset.pattern.permute.xlu0 0
      %396 = vperm.xlu0 %395, %v392
      %v397 = vpop.permute.xlu0 %396
      %400 = vset.pattern.permute.xlu0 0
      %401 = vperm.xlu0 %400, %v393
      %v402 = vpop.permute.xlu0 %401
      %vm404 = vcmask 261120
      %v406 = vsel %vm404, %v390, 0
      %v409 = vsel %vm404, %v391, 0
      %411 = vmatprep.subr.mxu0 0.0
      %412 = vmatpush1.msra.mxu0 %v386
      %413 = vmatprep.subr.mxu0 0.0
      %414 = vmatpush1.msra.mxu0 %v387
      %415 = vmatprep.subr.mxu0 0.0
      %416 = vmatpush1.msra.mxu0 %v388
      %417 = vmatprep.subr.mxu0 0.0
      %418 = vmatpush1.msra.mxu0 %v389
      %419 = vmatprep.subr.mxu0 0.0
      %420 = vmatpush1.msra.mxu0 0.0
      %421 = vmatprep.subr.mxu0 0.0
      %422 = vmatpush1.msra.mxu0 0.0
      %423 = vmatprep.subr.mxu0 0.0
      %424 = vmatpush1.msra.mxu0 0.0
      %425 = vmatprep.subr.mxu0 0.0
      %426 = vmatpush1.msra.mxu0 0.0
      %427 = vmatprep.subr.mxu0 0.0
      %428 = vmatpush1.msra.mxu0 0.0
      %429 = vmatprep.subr.mxu0 0.0
      %430 = vmatpush1.msra.mxu0 0.0
      %431 = vmatprep.subr.mxu0 0.0
      %432 = vmatpush1.msra.mxu0 0.0
      %433 = vmatprep.subr.mxu0 0.0
      %434 = vmatpush1.msra.mxu0 0.0
      %435 = vmatprep.subr.mxu0 0.0
      %436 = vmatpush1.msra.mxu0 0.0
      %437 = vmatprep.subr.mxu0 0.0
      %438 = vmatpush1.msra.mxu0 0.0
      %439 = vmatprep.subr.mxu0 0.0
      %440 = vmatpush1.msra.mxu0 0.0
      %441 = vmatprep.subr.mxu0 0.0
      %442 = vmatpush1.msra.mxu0 0.0
      %443 = vmatprep.subr.mxu0 0.0
      %444 = vmatpush1.msra.mxu0 0.0
      %445 = vmatprep.subr.mxu0 0.0
      %446 = vmatpush1.msra.mxu0 0.0
      %447 = vmatprep.subr.mxu0 0.0
      %448 = vmatpush1.msra.mxu0 0.0
      %449 = vmatprep.subr.mxu0 0.0
      %450 = vmatpush1.msra.mxu0 0.0
      %451 = vmatprep.subr.mxu0 0.0
      %452 = vmatpush1.msra.mxu0 0.0
      %453 = vmatprep.subr.mxu0 0.0
      %454 = vmatpush1.msra.mxu0 0.0
      %455 = vmatprep.subr.mxu0 0.0
      %456 = vmatpush1.msra.mxu0 0.0
      %457 = vmatprep.subr.mxu0 0.0
      %458 = vmatpush1.msra.mxu0 0.0
      %459 = vmatprep.subr.mxu0 0.0
      %460 = vmatpush1.msra.mxu0 0.0
      %461 = vmatprep.subr.mxu0 0.0
      %462 = vmatpush1.msra.mxu0 0.0
      %463 = vmatprep.subr.mxu0 0.0
      %464 = vmatpush1.msra.mxu0 0.0
      %465 = vmatprep.subr.mxu0 0.0
      %466 = vmatpush1.msra.mxu0 0.0
      %467 = vmatprep.subr.mxu0 0.0
      %468 = vmatpush1.msra.mxu0 0.0
      %469 = vmatprep.subr.mxu0 0.0
      %470 = vmatpush1.msra.mxu0 0.0
      %471 = vmatprep.subr.mxu0 0.0
      %472 = vmatpush1.msra.mxu0 0.0
      %473 = vmatprep.subr.mxu0 0.0
      %474 = vmatpush1.msra.mxu0 0.0
      %475 = vmatprep.mubr.f32.mxu0 0.0
      %476 = vmatmul.mubr.f32.gmra.mrb[0].mxu0 %v406
      %v477 = vpop.f32.mrb[0].mxu0
      %v478 = vadd.f32 %v397, %v477
      %v479 = vpop.f32.mrb[0].mxu0
      %480 = vmatprep.mubr.f32.mxu0 0.0
      %481 = vmatmul.mubr.f32.gmra.mrb[0].mxu0 %v409
      %v482 = vpop.f32.mrb[0].mxu0
      %v483 = vadd.f32 %v402, %v482
      %v484 = vpop.f32.mrb[0].mxu0
      %485 = vdwg.mxu0
      %vm486 = vcmp.ge.f32.partialorder %v478, 0.0
      %vm487 = vcmp.ge.f32.partialorder %v483, 0.0
      %v488 = vrot.slane %v360, 1
      %s489 = vtos %v488
      %v490 = vstv %s489
      %v492 = vmul.f32 %v478, %v490
      %v493 = vmul.f32 %v483, %v490
      %v494 = vsel %vm486, %v478, %v492
      %v495 = vsel %vm487, %v483, %v493
      %498 = vrot.lane.b32.xlu0 %v494, 5
      %v499 = vpop.permute.xlu0 %498
      %500 = vrot.lane.b32.xlu0 %v495, 5
      %v501 = vpop.permute.xlu0 %500
      %vm504 = vcmask 105512
      %505 = vst.msk [vmem:[#allocation2] sm:$0xff] %vm504, %v499
      %506 = vst.msk [vmem:[#allocation2 + $0x8] sm:$0xff] %vm504, %v501
      %507 = vrot.lane.b32.xlu0 %v494, 4
      %v508 = vpop.permute.xlu0 %507
      %509 = vrot.lane.b32.xlu0 %v495, 4
      %v510 = vpop.permute.xlu0 %509
      %vm513 = vcmask 97312
      %514 = vst.msk [vmem:[#allocation2 + $0x10] sm:$0xff] %vm513, %v508
      %515 = vst.msk [vmem:[#allocation2 + $0x18] sm:$0xff] %vm513, %v510
      %516 = vrot.lane.b32.xlu0 %v494, 3
      %v517 = vpop.permute.xlu0 %516
      %518 = vrot.lane.b32.xlu0 %v495, 3
      %v519 = vpop.permute.xlu0 %518
      %vm522 = vcmask 89112
      %523 = vst.msk [vmem:[#allocation2 + $0x20] sm:$0xff] %vm522, %v517
      %524 = vst.msk [vmem:[#allocation2 + $0x28] sm:$0xff] %vm522, %v519
      %vm525 = vcmask 39968
      %526 = vst.msk [vmem:[#allocation2] sm:$0xff] %vm525, 0.0
      %527 = vst.msk [vmem:[#allocation2 + $0x8] sm:$0xff] %vm525, 0.0
      %vm528 = vcmask 97368
      %529 = vst.msk [vmem:[#allocation2 + $0x20] sm:$0xff] %vm528, 0.0
      %530 = vst.msk [vmem:[#allocation2 + $0x28] sm:$0xff] %vm528, 0.0
      %v531 = vld [vmem:[#allocation2] sm:$0xff]
      %v532 = vld [vmem:[#allocation2 + $0x8] sm:$0xff]
      %v533 = vld [vmem:[#allocation2 + $0x10] sm:$0xff]
      %v534 = vld [vmem:[#allocation2 + $0x18] sm:$0xff]
      %v535 = vld [vmem:[#allocation2 + $0x20] sm:$0xff]
      %v536 = vld [vmem:[#allocation2 + $0x28] sm:$0xff]
      %v537 = vld [vmem:[%s3] sm:$0xff]
      %v538 = vld [vmem:[%s3 + $0x8] sm:$0xff]
      %v539 = vld [vmem:[%s4] sm:$0xff]
      %v540 = vld [vmem:[%s4 + $0x8] sm:$0xff]
      %542 = vset.pattern.permute.xlu0 0
      %543 = vperm.xlu0 %542, %v539
      %v544 = vpop.permute.xlu0 %543
      %547 = vset.pattern.permute.xlu0 0
      %548 = vperm.xlu0 %547, %v540
      %v549 = vpop.permute.xlu0 %548
      %557 = vrot.lane.b32.xlu0 %v531, 124
      %v558 = vpop.permute.xlu0 %557
      %559 = vrot.lane.b32.xlu0 %v532, 124
      %v560 = vpop.permute.xlu0 %559
      %561 = vrot.lane.b32.xlu0 %v533, 124
      %v562 = vpop.permute.xlu0 %561
      %563 = vrot.lane.b32.xlu0 %v534, 124
      %v564 = vpop.permute.xlu0 %563
      %565 = vrot.lane.b32.xlu0 %v535, 124
      %v566 = vpop.permute.xlu0 %565
      %567 = vrot.lane.b32.xlu0 %v536, 124
      %v568 = vpop.permute.xlu0 %567
      %vm575 = vcmask 392192
      %v577 = vsel %vm575, %v537, 0
      %v580 = vsel %vm575, %v538, 0
      %582 = vmatprep.subr.mxu0 0.0
      %583 = vmatpush1.msra.mxu0 %v558
      %584 = vmatprep.subr.mxu0 0.0
      %585 = vmatpush1.msra.mxu0 %v560
      %586 = vmatprep.subr.mxu0 0.0
      %587 = vmatpush1.msra.mxu0 %v562
      %588 = vmatprep.subr.mxu0 0.0
      %589 = vmatpush1.msra.mxu0 %v564
      %590 = vmatprep.subr.mxu0 0.0
      %591 = vmatpush1.msra.mxu0 %v566
      %592 = vmatprep.subr.mxu0 0.0
      %593 = vmatpush1.msra.mxu0 %v568
      %594 = vmatprep.subr.mxu0 0.0
      %595 = vmatpush1.msra.mxu0 0.0
      %596 = vmatprep.subr.mxu0 0.0
      %597 = vmatpush1.msra.mxu0 0.0
      %598 = vmatprep.subr.mxu0 0.0
      %599 = vmatpush1.msra.mxu0 0.0
      %600 = vmatprep.subr.mxu0 0.0
      %601 = vmatpush1.msra.mxu0 0.0
      %602 = vmatprep.subr.mxu0 0.0
      %603 = vmatpush1.msra.mxu0 0.0
      %604 = vmatprep.subr.mxu0 0.0
      %605 = vmatpush1.msra.mxu0 0.0
      %606 = vmatprep.subr.mxu0 0.0
      %607 = vmatpush1.msra.mxu0 0.0
      %608 = vmatprep.subr.mxu0 0.0
      %609 = vmatpush1.msra.mxu0 0.0
      %610 = vmatprep.subr.mxu0 0.0
      %611 = vmatpush1.msra.mxu0 0.0
      %612 = vmatprep.subr.mxu0 0.0
      %613 = vmatpush1.msra.mxu0 0.0
      %614 = vmatprep.subr.mxu0 0.0
      %615 = vmatpush1.msra.mxu0 0.0
      %616 = vmatprep.subr.mxu0 0.0
      %617 = vmatpush1.msra.mxu0 0.0
      %618 = vmatprep.subr.mxu0 0.0
      %619 = vmatpush1.msra.mxu0 0.0
      %620 = vmatprep.subr.mxu0 0.0
      %621 = vmatpush1.msra.mxu0 0.0
      %622 = vmatprep.subr.mxu0 0.0
      %623 = vmatpush1.msra.mxu0 0.0
      %624 = vmatprep.subr.mxu0 0.0
      %625 = vmatpush1.msra.mxu0 0.0
      %626 = vmatprep.subr.mxu0 0.0
      %627 = vmatpush1.msra.mxu0 0.0
      %628 = vmatprep.subr.mxu0 0.0
      %629 = vmatpush1.msra.mxu0 0.0
      %630 = vmatprep.subr.mxu0 0.0
      %631 = vmatpush1.msra.mxu0 0.0
      %632 = vmatprep.subr.mxu0 0.0
      %633 = vmatpush1.msra.mxu0 0.0
      %634 = vmatprep.subr.mxu0 0.0
      %635 = vmatpush1.msra.mxu0 0.0
      %636 = vmatprep.subr.mxu0 0.0
      %637 = vmatpush1.msra.mxu0 0.0
      %638 = vmatprep.subr.mxu0 0.0
      %639 = vmatpush1.msra.mxu0 0.0
      %640 = vmatprep.subr.mxu0 0.0
      %641 = vmatpush1.msra.mxu0 0.0
      %642 = vmatprep.subr.mxu0 0.0
      %643 = vmatpush1.msra.mxu0 0.0
      %644 = vmatprep.subr.mxu0 0.0
      %645 = vmatpush1.msra.mxu0 0.0
      %646 = vmatprep.mubr.f32.mxu0 0.0
      %647 = vmatmul.mubr.f32.gmra.mrb[0].mxu0 %v577
      %v648 = vpop.f32.mrb[0].mxu0
      %v649 = vadd.f32 %v544, %v648
      %v650 = vpop.f32.mrb[0].mxu0
      %651 = vmatprep.mubr.f32.mxu0 0.0
      %652 = vmatmul.mubr.f32.gmra.mrb[0].mxu0 %v580
      %v653 = vpop.f32.mrb[0].mxu0
      %v654 = vadd.f32 %v549, %v653
      %v655 = vpop.f32.mrb[0].mxu0
      %656 = vdwg.mxu0
      %v657 = vadd.f32 %v478, %v649
      %v658 = vadd.f32 %v483, %v654
      %vm659 = vcmp.ge.f32.partialorder %v657, 0.0
      %vm660 = vcmp.ge.f32.partialorder %v658, 0.0
      %v661 = vrot.slane %v360, 2
      %s662 = vtos %v661
      %v663 = vstv %s662
      %v665 = vmul.f32 %v657, %v663
      %v666 = vmul.f32 %v658, %v663
      %v667 = vsel %vm659, %v657, %v665
      %v668 = vsel %vm660, %v658, %v666
      %671 = vrot.lane.b32.xlu0 %v667, 6
      %v672 = vpop.permute.xlu0 %671
      %673 = vrot.lane.b32.xlu0 %v668, 6
      %v674 = vpop.permute.xlu0 %673
      %vm677 = vcmask 113712
      %678 = vst.msk [vmem:[#allocation2] sm:$0xff] %vm677, %v672
      %679 = vst.msk [vmem:[#allocation2 + $0x8] sm:$0xff] %vm677, %v674
      %680 = vrot.lane.b32.xlu0 %v667, 4
      %v681 = vpop.permute.xlu0 %680
      %682 = vrot.lane.b32.xlu0 %v668, 4
      %v683 = vpop.permute.xlu0 %682
      %686 = vst.msk [vmem:[#allocation2 + $0x10] sm:$0xff] %vm513, %v681
      %687 = vst.msk [vmem:[#allocation2 + $0x18] sm:$0xff] %vm513, %v683
      %688 = vrot.lane.b32.xlu0 %v667, 2
      %v689 = vpop.permute.xlu0 %688
      %690 = vrot.lane.b32.xlu0 %v668, 2
      %v691 = vpop.permute.xlu0 %690
      %vm694 = vcmask 80912
      %695 = vst.msk [vmem:[#allocation2 + $0x20] sm:$0xff] %vm694, %v689
      %696 = vst.msk [vmem:[#allocation2 + $0x28] sm:$0xff] %vm694, %v691
      %vm697 = vcmask 48160
      %698 = vst.msk [vmem:[#allocation2] sm:$0xff] %vm697, 0.0
      %699 = vst.msk [vmem:[#allocation2 + $0x8] sm:$0xff] %vm697, 0.0
      %vm700 = vcmask 97360
      %701 = vst.msk [vmem:[#allocation2 + $0x20] sm:$0xff] %vm700, 0.0
      %702 = vst.msk [vmem:[#allocation2 + $0x28] sm:$0xff] %vm700, 0.0
      %v703 = vld [vmem:[#allocation2] sm:$0xff]
      %v704 = vld [vmem:[#allocation2 + $0x8] sm:$0xff]
      %v705 = vld [vmem:[#allocation2 + $0x10] sm:$0xff]
      %v706 = vld [vmem:[#allocation2 + $0x18] sm:$0xff]
      %v707 = vld [vmem:[#allocation2 + $0x20] sm:$0xff]
      %v708 = vld [vmem:[#allocation2 + $0x28] sm:$0xff]
      %v709 = vld [vmem:[%s5] sm:$0xff]
      %v710 = vld [vmem:[%s5 + $0x8] sm:$0xff]
      %v711 = vld [vmem:[%s6] sm:$0xff]
      %v712 = vld [vmem:[%s6 + $0x8] sm:$0xff]
      %714 = vset.pattern.permute.xlu0 0
      %715 = vperm.xlu0 %714, %v711
      %v716 = vpop.permute.xlu0 %715
      %719 = vset.pattern.permute.xlu0 0
      %720 = vperm.xlu0 %719, %v712
      %v721 = vpop.permute.xlu0 %720
      %729 = vrot.lane.b32.xlu0 %v703, 124
      %v730 = vpop.permute.xlu0 %729
      %731 = vrot.lane.b32.xlu0 %v704, 124
      %v732 = vpop.permute.xlu0 %731
      %733 = vrot.lane.b32.xlu0 %v705, 124
      %v734 = vpop.permute.xlu0 %733
      %735 = vrot.lane.b32.xlu0 %v706, 124
      %v736 = vpop.permute.xlu0 %735
      %737 = vrot.lane.b32.xlu0 %v707, 124
      %v738 = vpop.permute.xlu0 %737
      %739 = vrot.lane.b32.xlu0 %v708, 124
      %v740 = vpop.permute.xlu0 %739
      %v748 = vsel %vm575, %v709, 0
      %v751 = vsel %vm575, %v710, 0
      %753 = vmatprep.subr.mxu0 0.0
      %754 = vmatpush1.msra.mxu0 %v730
      %755 = vmatprep.subr.mxu0 0.0
      %756 = vmatpush1.msra.mxu0 %v732
      %757 = vmatprep.subr.mxu0 0.0
      %758 = vmatpush1.msra.mxu0 %v734
      %759 = vmatprep.subr.mxu0 0.0
      %760 = vmatpush1.msra.mxu0 %v736
      %761 = vmatprep.subr.mxu0 0.0
      %762 = vmatpush1.msra.mxu0 %v738
      %763 = vmatprep.subr.mxu0 0.0
      %764 = vmatpush1.msra.mxu0 %v740
      %765 = vmatprep.subr.mxu0 0.0
      %766 = vmatpush1.msra.mxu0 0.0
      %767 = vmatprep.subr.mxu0 0.0
      %768 = vmatpush1.msra.mxu0 0.0
      %769 = vmatprep.subr.mxu0 0.0
      %770 = vmatpush1.msra.mxu0 0.0
      %771 = vmatprep.subr.mxu0 0.0
      %772 = vmatpush1.msra.mxu0 0.0
      %773 = vmatprep.subr.mxu0 0.0
      %774 = vmatpush1.msra.mxu0 0.0
      %775 = vmatprep.subr.mxu0 0.0
      %776 = vmatpush1.msra.mxu0 0.0
      %777 = vmatprep.subr.mxu0 0.0
      %778 = vmatpush1.msra.mxu0 0.0
      %779 = vmatprep.subr.mxu0 0.0
      %780 = vmatpush1.msra.mxu0 0.0
      %781 = vmatprep.subr.mxu0 0.0
      %782 = vmatpush1.msra.mxu0 0.0
      %783 = vmatprep.subr.mxu0 0.0
      %784 = vmatpush1.msra.mxu0 0.0
      %785 = vmatprep.subr.mxu0 0.0
      %786 = vmatpush1.msra.mxu0 0.0
      %787 = vmatprep.subr.mxu0 0.0
      %788 = vmatpush1.msra.mxu0 0.0
      %789 = vmatprep.subr.mxu0 0.0
      %790 = vmatpush1.msra.mxu0 0.0
      %791 = vmatprep.subr.mxu0 0.0
      %792 = vmatpush1.msra.mxu0 0.0
      %793 = vmatprep.subr.mxu0 0.0
      %794 = vmatpush1.msra.mxu0 0.0
      %795 = vmatprep.subr.mxu0 0.0
      %796 = vmatpush1.msra.mxu0 0.0
      %797 = vmatprep.subr.mxu0 0.0
      %798 = vmatpush1.msra.mxu0 0.0
      %799 = vmatprep.subr.mxu0 0.0
      %800 = vmatpush1.msra.mxu0 0.0
      %801 = vmatprep.subr.mxu0 0.0
      %802 = vmatpush1.msra.mxu0 0.0
      %803 = vmatprep.subr.mxu0 0.0
      %804 = vmatpush1.msra.mxu0 0.0
      %805 = vmatprep.subr.mxu0 0.0
      %806 = vmatpush1.msra.mxu0 0.0
      %807 = vmatprep.subr.mxu0 0.0
      %808 = vmatpush1.msra.mxu0 0.0
      %809 = vmatprep.subr.mxu0 0.0
      %810 = vmatpush1.msra.mxu0 0.0
      %811 = vmatprep.subr.mxu0 0.0
      %812 = vmatpush1.msra.mxu0 0.0
      %813 = vmatprep.subr.mxu0 0.0
      %814 = vmatpush1.msra.mxu0 0.0
      %815 = vmatprep.subr.mxu0 0.0
      %816 = vmatpush1.msra.mxu0 0.0
      %817 = vmatprep.mubr.f32.mxu0 0.0
      %818 = vmatmul.mubr.f32.gmra.mrb[0].mxu0 %v748
      %v819 = vpop.f32.mrb[0].mxu0
      %v820 = vadd.f32 %v716, %v819
      %v821 = vpop.f32.mrb[0].mxu0
      %822 = vmatprep.mubr.f32.mxu0 0.0
      %823 = vmatmul.mubr.f32.gmra.mrb[0].mxu0 %v751
      %v824 = vpop.f32.mrb[0].mxu0
      %v825 = vadd.f32 %v721, %v824
      %v826 = vpop.f32.mrb[0].mxu0
      %827 = vdwg.mxu0
      %v828 = vadd.f32 %v657, %v820
      %v829 = vadd.f32 %v658, %v825
      %vm830 = vcmp.ge.f32.partialorder %v828, 0.0
      %vm831 = vcmp.ge.f32.partialorder %v829, 0.0
      %v832 = vrot.slane %v360, 3
      %s833 = vtos %v832
      %v834 = vstv %s833
      %v836 = vmul.f32 %v828, %v834
      %v837 = vmul.f32 %v829, %v834
      %v838 = vsel %vm830, %v828, %v836
      %v839 = vsel %vm831, %v829, %v837
      %842 = vrot.lane.b32.xlu0 %v838, 8
      %v843 = vpop.permute.xlu0 %842
      %844 = vrot.lane.b32.xlu0 %v839, 8
      %v845 = vpop.permute.xlu0 %844
      %vm848 = vcmask 130112
      %849 = vst.msk [vmem:[#allocation2] sm:$0xff] %vm848, %v843
      %850 = vst.msk [vmem:[#allocation2 + $0x8] sm:$0xff] %vm848, %v845
      %851 = vrot.lane.b32.xlu0 %v838, 4
      %v852 = vpop.permute.xlu0 %851
      %853 = vrot.lane.b32.xlu0 %v839, 4
      %v854 = vpop.permute.xlu0 %853
      %857 = vst.msk [vmem:[#allocation2 + $0x10] sm:$0xff] %vm513, %v852
      %858 = vst.msk [vmem:[#allocation2 + $0x18] sm:$0xff] %vm513, %v854
      %859 = vst.msk [vmem:[#allocation2 + $0x20] sm:$0xff] %vm373, %v838
      %860 = vst.msk [vmem:[#allocation2 + $0x28] sm:$0xff] %vm373, %v839
      %vm861 = vcmask 64544
      %862 = vst.msk [vmem:[#allocation2] sm:$0xff] %vm861, 0.0
      %863 = vst.msk [vmem:[#allocation2 + $0x8] sm:$0xff] %vm861, 0.0
      %vm864 = vcmask 97344
      %865 = vst.msk [vmem:[#allocation2 + $0x20] sm:$0xff] %vm864, 0.0
      %866 = vst.msk [vmem:[#allocation2 + $0x28] sm:$0xff] %vm864, 0.0
      %v867 = vld [vmem:[#allocation2] sm:$0xff]
      %v868 = vld [vmem:[#allocation2 + $0x8] sm:$0xff]
      %v869 = vld [vmem:[#allocation2 + $0x10] sm:$0xff]
      %v870 = vld [vmem:[#allocation2 + $0x18] sm:$0xff]
      %v871 = vld [vmem:[#allocation2 + $0x20] sm:$0xff]
      %v872 = vld [vmem:[#allocation2 + $0x28] sm:$0xff]
      %v873 = vld [vmem:[%s7] sm:$0xff]
      %v874 = vld [vmem:[%s7 + $0x8] sm:$0xff]
      %v875 = vld [vmem:[%s8] sm:$0xff]
      %v876 = vld [vmem:[%s8 + $0x8] sm:$0xff]
      %878 = vset.pattern.permute.xlu0 0
      %879 = vperm.xlu0 %878, %v875
      %v880 = vpop.permute.xlu0 %879
      %883 = vset.pattern.permute.xlu0 0
      %884 = vperm.xlu0 %883, %v876
      %v885 = vpop.permute.xlu0 %884
      %893 = vrot.lane.b32.xlu0 %v867, 124
      %v894 = vpop.permute.xlu0 %893
      %895 = vrot.lane.b32.xlu0 %v868, 124
      %v896 = vpop.permute.xlu0 %895
      %897 = vrot.lane.b32.xlu0 %v869, 124
      %v898 = vpop.permute.xlu0 %897
      %899 = vrot.lane.b32.xlu0 %v870, 124
      %v900 = vpop.permute.xlu0 %899
      %901 = vrot.lane.b32.xlu0 %v871, 124
      %v902 = vpop.permute.xlu0 %901
      %903 = vrot.lane.b32.xlu0 %v872, 124
      %v904 = vpop.permute.xlu0 %903
      %v912 = vsel %vm575, %v873, 0
      %v915 = vsel %vm575, %v874, 0
      %917 = vmatprep.subr.mxu0 0.0
      %918 = vmatpush1.msra.mxu0 %v894
      %919 = vmatprep.subr.mxu0 0.0
      %920 = vmatpush1.msra.mxu0 %v896
      %921 = vmatprep.subr.mxu0 0.0
      %922 = vmatpush1.msra.mxu0 %v898
      %923 = vmatprep.subr.mxu0 0.0
      %924 = vmatpush1.msra.mxu0 %v900
      %925 = vmatprep.subr.mxu0 0.0
      %926 = vmatpush1.msra.mxu0 %v902
      %927 = vmatprep.subr.mxu0 0.0
      %928 = vmatpush1.msra.mxu0 %v904
      %929 = vmatprep.subr.mxu0 0.0
      %930 = vmatpush1.msra.mxu0 0.0
      %931 = vmatprep.subr.mxu0 0.0
      %932 = vmatpush1.msra.mxu0 0.0
      %933 = vmatprep.subr.mxu0 0.0
      %934 = vmatpush1.msra.mxu0 0.0
      %935 = vmatprep.subr.mxu0 0.0
      %936 = vmatpush1.msra.mxu0 0.0
      %937 = vmatprep.subr.mxu0 0.0
      %938 = vmatpush1.msra.mxu0 0.0
      %939 = vmatprep.subr.mxu0 0.0
      %940 = vmatpush1.msra.mxu0 0.0
      %941 = vmatprep.subr.mxu0 0.0
      %942 = vmatpush1.msra.mxu0 0.0
      %943 = vmatprep.subr.mxu0 0.0
      %944 = vmatpush1.msra.mxu0 0.0
      %945 = vmatprep.subr.mxu0 0.0
      %946 = vmatpush1.msra.mxu0 0.0
      %947 = vmatprep.subr.mxu0 0.0
      %948 = vmatpush1.msra.mxu0 0.0
      %949 = vmatprep.subr.mxu0 0.0
      %950 = vmatpush1.msra.mxu0 0.0
      %951 = vmatprep.subr.mxu0 0.0
      %952 = vmatpush1.msra.mxu0 0.0
      %953 = vmatprep.subr.mxu0 0.0
      %954 = vmatpush1.msra.mxu0 0.0
      %955 = vmatprep.subr.mxu0 0.0
      %956 = vmatpush1.msra.mxu0 0.0
      %957 = vmatprep.subr.mxu0 0.0
      %958 = vmatpush1.msra.mxu0 0.0
      %959 = vmatprep.subr.mxu0 0.0
      %960 = vmatpush1.msra.mxu0 0.0
      %961 = vmatprep.subr.mxu0 0.0
      %962 = vmatpush1.msra.mxu0 0.0
      %963 = vmatprep.subr.mxu0 0.0
      %964 = vmatpush1.msra.mxu0 0.0
      %965 = vmatprep.subr.mxu0 0.0
      %966 = vmatpush1.msra.mxu0 0.0
      %967 = vmatprep.subr.mxu0 0.0
      %968 = vmatpush1.msra.mxu0 0.0
      %969 = vmatprep.subr.mxu0 0.0
      %970 = vmatpush1.msra.mxu0 0.0
      %971 = vmatprep.subr.mxu0 0.0
      %972 = vmatpush1.msra.mxu0 0.0
      %973 = vmatprep.subr.mxu0 0.0
      %974 = vmatpush1.msra.mxu0 0.0
      %975 = vmatprep.subr.mxu0 0.0
      %976 = vmatpush1.msra.mxu0 0.0
      %977 = vmatprep.subr.mxu0 0.0
      %978 = vmatpush1.msra.mxu0 0.0
      %979 = vmatprep.subr.mxu0 0.0
      %980 = vmatpush1.msra.mxu0 0.0
      %981 = vmatprep.mubr.f32.mxu0 0.0
      %982 = vmatmul.mubr.f32.gmra.mrb[0].mxu0 %v912
      %v983 = vpop.f32.mrb[0].mxu0
      %v984 = vadd.f32 %v880, %v983
      %v985 = vpop.f32.mrb[0].mxu0
      %986 = vmatprep.mubr.f32.mxu0 0.0
      %987 = vmatmul.mubr.f32.gmra.mrb[0].mxu0 %v915
      %v988 = vpop.f32.mrb[0].mxu0
      %v989 = vadd.f32 %v885, %v988
      %v990 = vpop.f32.mrb[0].mxu0
      %991 = vdwg.mxu0
      %v992 = vadd.f32 %v828, %v984
      %v993 = vadd.f32 %v829, %v989
      %994 = vst.msk [vmem:[%s359] sm:$0xff] %vm373, %v992
      %995 = vst.msk [vmem:[%s359 + $0x8] sm:$0xff] %vm373, %v993
      %p996 = scmp.lt.s32.totalorder %s21, 1
      %s997 = scalar_select %p996, %s21, 1
      %s998 = smul.addr %s997, 2
      %s999 = smul.addr %s998, 8
      %s1000 = scalar_lea.vmem %s10, %s999
      // Predicated region
      $region61: #{_forward_impl.9} parent=59 // pred_check
        %p1001 = pneg %p254
      $region62: #{_forward_impl.9} parent=59 // pred_check_branch
        %1003 = sbr.rel (%p1001) target = $region64
      $region63: #{_forward_impl.9} parent=59 // pred_region
        _
      $region64: #{_forward_impl.9} parent=59 // pred_fallthru
        _
    $region60: #{_forward_impl.9} parent=5 // pred_fallthru
      _
    %p1004 = scmp.le.s32.totalorder 2, %s16
    // Predicated region
    $region65: #{_forward_impl.9} parent=5 // pred_check
      %p1005 = pneg %p1004
    $region66: #{_forward_impl.9} parent=5 // pred_check_branch
      %1007 = sbr.rel (%p1005) target = $region68
    $region67: #{_forward_impl.9} parent=5 // pred_region
      %s1008 = ssub.s32 %s16, 2
      // Predicated region
      $region69: #{_forward_impl.9} parent=67 // pred_check
        %p1009 = pneg %p260
      $region70: #{_forward_impl.9} parent=67 // pred_check_branch
        %1011 = sbr.rel (%p1009) target = $region72
      $region71: #{_forward_impl.9} parent=67 // pred_region
        %p1012 = scmp.lt.s32.totalorder %s22, 1
        %s1013 = scalar_select %p1012, %s22, 1
        %s1014 = smul.addr %s1013, 2
        %s1015 = smul.addr %s1014, 8
        %s1016 = scalar_lea.vmem %s10, %s1015
      $region72: #{_forward_impl.9} parent=67 // pred_fallthru
        _
    $region68: #{_forward_impl.9} parent=5 // pred_fallthru
      _
  $region6: #{_forward_impl.9} parent=0 // loop_footer
    %s20 = sadd.s32 1, %s16
  $region7: #{_forward_impl.9} parent=0 // loop_footer_branch
    %15 = sbr.rel target = $region3
  $region8: #{_forward_impl.9} parent=0 // loop_exit
    _

// kernel: _forward_impl.7
$region0: #{_forward_impl.7}
  #allocation0 [shape = 'u32[]', space=smem, size = 0x4, offset = 0x4, fixed_abs, tag = 'smem constant byte address 0x4 - core index']
  #allocation1 [shape = 'u32[144,128]{1,0:T(1,128)}', space=vmem, size = 0x12000, scoped, tag = 'internal scratch']
  #allocation2 [shape = 'f32[24,24]{1,0:T(8,128)}', space=vmem, size = 0x3000, scoped, tag = 'scratch operand']
  %s0 = inlined_call_operand.vmem [shape: f32[2,8,17], index: 0, kind: input, shape index: {}]
  %s1 = inlined_call_operand.vmem [shape: f32[8,16], index: 1, kind: input, shape index: {}]
  %s2 = inlined_call_operand.vmem [shape: f32[8,1], index: 2, kind: input, shape index: {}]
  %s3 = inlined_call_operand.vmem [shape: f32[8,24], index: 3, kind: input, shape index: {}]
  %s4 = inlined_call_operand.vmem [shape: f32[8,1], index: 4, kind: input, shape index: {}]
  %s5 = inlined_call_operand.vmem [shape: f32[8,24], index: 5, kind: input, shape index: {}]
  %s6 = inlined_call_operand.vmem [shape: f32[8,1], index: 6, kind: input, shape index: {}]
  %s7 = inlined_call_operand.vmem [shape: f32[8,24], index: 7, kind: input, shape index: {}]
  %s8 = inlined_call_operand.vmem [shape: f32[8,1], index: 8, kind: input, shape index: {}]
  %s9 = inlined_call_operand.vmem [shape: f32[4,1], index: 9, kind: input, shape index: {}]
  %s10 = inlined_call_operand.vmem [shape: f32[2,8,16], index: 10, kind: output, shape index: {}]
  %s11 = sld [smem:[#allocation0]]
  $region73: #{_forward_impl.7} parent=0
    _
  %s13 = ssub.s32 1, %s11
  %s14 = scalar_select 0, %s13, %s11
  loop: start=0, step=1, limit=4
  $region2: #{_forward_impl.7} parent=0 // loop_pre_header
    _
  $region3: #{_forward_impl.7} parent=0 // loop_header
    %s16 = sphi 0, %s20
    %p17 = scmp.ge.s32.totalorder %s16, 4
    %s26 = sphi 0, %s28
    %s29 = sphi 0, %s26
    %s30 = sphi 0, %s29
    %s46 = sphi 0, %s30
    %s50 = sphi 0, %s50
    %s52 = sphi 0, %s50
    %s53 = sphi 0, %s52
    %s67 = sphi 0, %s53
    %s71 = sphi 0, %s71
    %s73 = sphi 0, %s71
    %s74 = sphi 0, %s73
    %s88 = sphi 0, %s74
    %s92 = sphi 0, %s92
    %s94 = sphi 0, %s92
    %s95 = sphi 0, %s94
    %s109 = sphi 0, %s95
    %s113 = sphi 0, %s113
    %s115 = sphi 0, %s113
    %s116 = sphi 0, %s115
    %s130 = sphi 0, %s116
    %s134 = sphi 0, %s134
    %s136 = sphi 0, %s134
    %s137 = sphi 0, %s136
    %s151 = sphi 0, %s137
    %s155 = sphi 0, %s155
    %s157 = sphi 0, %s155
    %s158 = sphi 0, %s157
    %s172 = sphi 0, %s158
    %s176 = sphi 0, %s176
    %s178 = sphi 0, %s176
    %s179 = sphi 0, %s178
    %s193 = sphi 0, %s179
    %s197 = sphi 0, %s197
    %s199 = sphi 0, %s197
    %s200 = sphi 0, %s199
    %s214 = sphi 0, %s200
    %s218 = sphi 0, %s218
    %s220 = sphi 0, %s218
    %s221 = sphi 0, %s220
    %s235 = sphi 0, %s221
    %s241 = sphi 0, %s243
    %s244 = sphi 0, %s241
    %s245 = sphi 0, %s244
    %s261 = sphi 0, %s245
  $region4: #{_forward_impl.7} parent=0 // loop_header_branch
    %19 = sbr.rel (%p17) target = $region8
  $region5: #{_forward_impl.7} parent=0 // loop_body
    %s21 = ssub.s32 %s16, 1
    %s22 = ssub.s32 %s16, 2
    %s23 = sadd.s32 %s16, 1
    %s24 = ssub.s32 %s16, %s23
    %p25 = scmp.eq.s32.totalorder %s24, 0
    %s27 = sadd.s32 %s26, 1
    %s28 = scalar_select %p25, %s26, %s27
    %p31 = pneg %p25
    %p32 = scmp.eq.s32.totalorder %s16, 1
    %p33 = por %p31, %p32
    %p34 = scmp.ne.s32.totalorder %s26, %s29
    %p35 = scmp.eq.s32.totalorder %s16, 0
    %p36 = por %p34, %p35
    %p37 = scmp.ne.s32.totalorder %s26, %s29
    %p38 = scmp.eq.s32.totalorder %s21, 1
    %p39 = por %p37, %p38
    %p40 = scmp.ne.s32.totalorder %s29, %s30
    %p41 = scmp.eq.s32.totalorder %s21, 0
    %p42 = por %p40, %p41
    %p43 = scmp.ne.s32.totalorder %s29, %s30
    %p44 = scmp.eq.s32.totalorder %s22, 1
    %p45 = por %p43, %p44
    %p47 = scmp.ne.s32.totalorder %s30, %s46
    %p48 = scmp.eq.s32.totalorder %s22, 0
    %p49 = por %p47, %p48
    %s51 = sadd.s32 %s50, 1
    %p54 = scmp.eq.s32.totalorder %s16, 1
    %p55 = scmp.ne.s32.totalorder %s50, %s52
    %p56 = scmp.eq.s32.totalorder %s16, 0
    %p57 = por %p55, %p56
    %p58 = scmp.ne.s32.totalorder %s50, %s52
    %p59 = scmp.eq.s32.totalorder %s21, 1
    %p60 = por %p58, %p59
    %p61 = scmp.ne.s32.totalorder %s52, %s53
    %p62 = scmp.eq.s32.totalorder %s21, 0
    %p63 = por %p61, %p62
    %p64 = scmp.ne.s32.totalorder %s52, %s53
    %p65 = scmp.eq.s32.totalorder %s22, 1
    %p66 = por %p64, %p65
    %p68 = scmp.ne.s32.totalorder %s53, %s67
    %p69 = scmp.eq.s32.totalorder %s22, 0
    %p70 = por %p68, %p69
    %s72 = sadd.s32 %s71, 1
    %p75 = scmp.eq.s32.totalorder %s16, 1
    %p76 = scmp.ne.s32.totalorder %s71, %s73
    %p77 = scmp.eq.s32.totalorder %s16, 0
    %p78 = por %p76, %p77
    %p79 = scmp.ne.s32.totalorder %s71, %s73
    %p80 = scmp.eq.s32.totalorder %s21, 1
    %p81 = por %p79, %p80
    %p82 = scmp.ne.s32.totalorder %s73, %s74
    %p83 = scmp.eq.s32.totalorder %s21, 0
    %p84 = por %p82, %p83
    %p85 = scmp.ne.s32.totalorder %s73, %s74
    %p86 = scmp.eq.s32.totalorder %s22, 1
    %p87 = por %p85, %p86
    %p89 = scmp.ne.s32.totalorder %s74, %s88
    %p90 = scmp.eq.s32.totalorder %s22, 0
    %p91 = por %p89, %p90
    %s93 = sadd.s32 %s92, 1
    %p96 = scmp.eq.s32.totalorder %s16, 1
    %p97 = scmp.ne.s32.totalorder %s92, %s94
    %p98 = scmp.eq.s32.totalorder %s16, 0
    %p99 = por %p97, %p98
    %p100 = scmp.ne.s32.totalorder %s92, %s94
    %p101 = scmp.eq.s32.totalorder %s21, 1
    %p102 = por %p100, %p101
    %p103 = scmp.ne.s32.totalorder %s94, %s95
    %p104 = scmp.eq.s32.totalorder %s21, 0
    %p105 = por %p103, %p104
    %p106 = scmp.ne.s32.totalorder %s94, %s95
    %p107 = scmp.eq.s32.totalorder %s22, 1
    %p108 = por %p106, %p107
    %p110 = scmp.ne.s32.totalorder %s95, %s109
    %p111 = scmp.eq.s32.totalorder %s22, 0
    %p112 = por %p110, %p111
    %s114 = sadd.s32 %s113, 1
    %p117 = scmp.eq.s32.totalorder %s16, 1
    %p118 = scmp.ne.s32.totalorder %s113, %s115
    %p119 = scmp.eq.s32.totalorder %s16, 0
    %p120 = por %p118, %p119
    %p121 = scmp.ne.s32.totalorder %s113, %s115
    %p122 = scmp.eq.s32.totalorder %s21, 1
    %p123 = por %p121, %p122
    %p124 = scmp.ne.s32.totalorder %s115, %s116
    %p125 = scmp.eq.s32.totalorder %s21, 0
    %p126 = por %p124, %p125
    %p127 = scmp.ne.s32.totalorder %s115, %s116
    %p128 = scmp.eq.s32.totalorder %s22, 1
    %p129 = por %p127, %p128
    %p131 = scmp.ne.s32.totalorder %s116, %s130
    %p132 = scmp.eq.s32.totalorder %s22, 0
    %p133 = por %p131, %p132
    %s135 = sadd.s32 %s134, 1
    %p138 = scmp.eq.s32.totalorder %s16, 1
    %p139 = scmp.ne.s32.totalorder %s134, %s136
    %p140 = scmp.eq.s32.totalorder %s16, 0
    %p141 = por %p139, %p140
    %p142 = scmp.ne.s32.totalorder %s134, %s136
    %p143 = scmp.eq.s32.totalorder %s21, 1
    %p144 = por %p142, %p143
    %p145 = scmp.ne.s32.totalorder %s136, %s137
    %p146 = scmp.eq.s32.totalorder %s21, 0
    %p147 = por %p145, %p146
    %p148 = scmp.ne.s32.totalorder %s136, %s137
    %p149 = scmp.eq.s32.totalorder %s22, 1
    %p150 = por %p148, %p149
    %p152 = scmp.ne.s32.totalorder %s137, %s151
    %p153 = scmp.eq.s32.totalorder %s22, 0
    %p154 = por %p152, %p153
    %s156 = sadd.s32 %s155, 1
    %p159 = scmp.eq.s32.totalorder %s16, 1
    %p160 = scmp.ne.s32.totalorder %s155, %s157
    %p161 = scmp.eq.s32.totalorder %s16, 0
    %p162 = por %p160, %p161
    %p163 = scmp.ne.s32.totalorder %s155, %s157
    %p164 = scmp.eq.s32.totalorder %s21, 1
    %p165 = por %p163, %p164
    %p166 = scmp.ne.s32.totalorder %s157, %s158
    %p167 = scmp.eq.s32.totalorder %s21, 0
    %p168 = por %p166, %p167
    %p169 = scmp.ne.s32.totalorder %s157, %s158
    %p170 = scmp.eq.s32.totalorder %s22, 1
    %p171 = por %p169, %p170
    %p173 = scmp.ne.s32.totalorder %s158, %s172
    %p174 = scmp.eq.s32.totalorder %s22, 0
    %p175 = por %p173, %p174
    %s177 = sadd.s32 %s176, 1
    %p180 = scmp.eq.s32.totalorder %s16, 1
    %p181 = scmp.ne.s32.totalorder %s176, %s178
    %p182 = scmp.eq.s32.totalorder %s16, 0
    %p183 = por %p181, %p182
    %p184 = scmp.ne.s32.totalorder %s176, %s178
    %p185 = scmp.eq.s32.totalorder %s21, 1
    %p186 = por %p184, %p185
    %p187 = scmp.ne.s32.totalorder %s178, %s179
    %p188 = scmp.eq.s32.totalorder %s21, 0
    %p189 = por %p187, %p188
    %p190 = scmp.ne.s32.totalorder %s178, %s179
    %p191 = scmp.eq.s32.totalorder %s22, 1
    %p192 = por %p190, %p191
    %p194 = scmp.ne.s32.totalorder %s179, %s193
    %p195 = scmp.eq.s32.totalorder %s22, 0
    %p196 = por %p194, %p195
    %s198 = sadd.s32 %s197, 1
    %p201 = scmp.eq.s32.totalorder %s16, 1
    %p202 = scmp.ne.s32.totalorder %s197, %s199
    %p203 = scmp.eq.s32.totalorder %s16, 0
    %p204 = por %p202, %p203
    %p205 = scmp.ne.s32.totalorder %s197, %s199
    %p206 = scmp.eq.s32.totalorder %s21, 1
    %p207 = por %p205, %p206
    %p208 = scmp.ne.s32.totalorder %s199, %s200
    %p209 = scmp.eq.s32.totalorder %s21, 0
    %p210 = por %p208, %p209
    %p211 = scmp.ne.s32.totalorder %s199, %s200
    %p212 = scmp.eq.s32.totalorder %s22, 1
    %p213 = por %p211, %p212
    %p215 = scmp.ne.s32.totalorder %s200, %s214
    %p216 = scmp.eq.s32.totalorder %s22, 0
    %p217 = por %p215, %p216
    %s219 = sadd.s32 %s218, 1
    %p222 = scmp.eq.s32.totalorder %s16, 1
    %p223 = scmp.ne.s32.totalorder %s218, %s220
    %p224 = scmp.eq.s32.totalorder %s16, 0
    %p225 = por %p223, %p224
    %p226 = scmp.ne.s32.totalorder %s218, %s220
    %p227 = scmp.eq.s32.totalorder %s21, 1
    %p228 = por %p226, %p227
    %p229 = scmp.ne.s32.totalorder %s220, %s221
    %p230 = scmp.eq.s32.totalorder %s21, 0
    %p231 = por %p229, %p230
    %p232 = scmp.ne.s32.totalorder %s220, %s221
    %p233 = scmp.eq.s32.totalorder %s22, 1
    %p234 = por %p232, %p233
    %p236 = scmp.ne.s32.totalorder %s221, %s235
    %p237 = scmp.eq.s32.totalorder %s22, 0
    %p238 = por %p236, %p237
    %s239 = ssub.s32 %s16, %s23
    %p240 = scmp.eq.s32.totalorder %s239, 0
    %s242 = sadd.s32 %s241, 1
    %s243 = scalar_select %p240, %s241, %s242
    %p246 = pneg %p240
    %p247 = scmp.eq.s32.totalorder %s16, 1
    %p248 = por %p246, %p247
    %p249 = scmp.ne.s32.totalorder %s241, %s244
    %p250 = scmp.eq.s32.totalorder %s16, 0
    %p251 = por %p249, %p250
    %p252 = scmp.ne.s32.totalorder %s241, %s244
    %p253 = scmp.eq.s32.totalorder %s21, 1
    %p254 = por %p252, %p253
    %p255 = scmp.ne.s32.totalorder %s244, %s245
    %p256 = scmp.eq.s32.totalorder %s21, 0
    %p257 = por %p255, %p256
    %p258 = scmp.ne.s32.totalorder %s244, %s245
    %p259 = scmp.eq.s32.totalorder %s22, 1
    %p260 = por %p258, %p259
    %p262 = scmp.ne.s32.totalorder %s245, %s261
    %p263 = scmp.eq.s32.totalorder %s22, 0
    %p264 = por %p262, %p263
    %p265 = scmp.le.s32.totalorder 1, %s16
    %p266 = scmp.lt.s32.totalorder %s16, 3
    %p267 = pnand %p265, %p266
    %p268 = pneg %p267
    // Predicated region
    $region9: #{_forward_impl.7} parent=5 // pred_check
      _
    $region10: #{_forward_impl.7} parent=5 // pred_check_branch
      %270 = sbr.rel (%p267) target = $region12
    $region11: #{_forward_impl.7} parent=5 // pred_region
      %s271 = ssub.s32 %s16, 1
      // Predicated region
      $region13: #{_forward_impl.7} parent=11 // pred_check
        %p272 = pneg %p63
      $region14: #{_forward_impl.7} parent=11 // pred_check_branch
        %274 = sbr.rel (%p272) target = $region16
      $region15: #{_forward_impl.7} parent=11 // pred_region
        _
      $region16: #{_forward_impl.7} parent=11 // pred_fallthru
        _
      // Predicated region
      $region17: #{_forward_impl.7} parent=11 // pred_check
        %p275 = pneg %p84
      $region18: #{_forward_impl.7} parent=11 // pred_check_branch
        %277 = sbr.rel (%p275) target = $region20
      $region19: #{_forward_impl.7} parent=11 // pred_region
        _
      $region20: #{_forward_impl.7} parent=11 // pred_fallthru
        _
      // Predicated region
      $region21: #{_forward_impl.7} parent=11 // pred_check
        %p278 = pneg %p105
      $region22: #{_forward_impl.7} parent=11 // pred_check_branch
        %280 = sbr.rel (%p278) target = $region24
      $region23: #{_forward_impl.7} parent=11 // pred_region
        _
      $region24: #{_forward_impl.7} parent=11 // pred_fallthru
        _
      // Predicated region
      $region25: #{_forward_impl.7} parent=11 // pred_check
        %p281 = pneg %p126
      $region26: #{_forward_impl.7} parent=11 // pred_check_branch
        %283 = sbr.rel (%p281) target = $region28
      $region27: #{_forward_impl.7} parent=11 // pred_region
        _
      $region28: #{_forward_impl.7} parent=11 // pred_fallthru
        _
      // Predicated region
      $region29: #{_forward_impl.7} parent=11 // pred_check
        %p284 = pneg %p147
      $region30: #{_forward_impl.7} parent=11 // pred_check_branch
        %286 = sbr.rel (%p284) target = $region32
      $region31: #{_forward_impl.7} parent=11 // pred_region
        _
      $region32: #{_forward_impl.7} parent=11 // pred_fallthru
        _
      // Predicated region
      $region33: #{_forward_impl.7} parent=11 // pred_check
        %p287 = pneg %p168
      $region34: #{_forward_impl.7} parent=11 // pred_check_branch
        %289 = sbr.rel (%p287) target = $region36
      $region35: #{_forward_impl.7} parent=11 // pred_region
        _
      $region36: #{_forward_impl.7} parent=11 // pred_fallthru
        _
      // Predicated region
      $region37: #{_forward_impl.7} parent=11 // pred_check
        %p290 = pneg %p189
      $region38: #{_forward_impl.7} parent=11 // pred_check_branch
        %292 = sbr.rel (%p290) target = $region40
      $region39: #{_forward_impl.7} parent=11 // pred_region
        _
      $region40: #{_forward_impl.7} parent=11 // pred_fallthru
        _
      // Predicated region
      $region41: #{_forward_impl.7} parent=11 // pred_check
        %p293 = pneg %p210
      $region42: #{_forward_impl.7} parent=11 // pred_check_branch
        %295 = sbr.rel (%p293) target = $region44
      $region43: #{_forward_impl.7} parent=11 // pred_region
        _
      $region44: #{_forward_impl.7} parent=11 // pred_fallthru
        _
      // Predicated region
      $region45: #{_forward_impl.7} parent=11 // pred_check
        %p296 = pneg %p231
      $region46: #{_forward_impl.7} parent=11 // pred_check_branch
        %298 = sbr.rel (%p296) target = $region48
      $region47: #{_forward_impl.7} parent=11 // pred_region
        _
      $region48: #{_forward_impl.7} parent=11 // pred_fallthru
        _
    $region12: #{_forward_impl.7} parent=5 // pred_fallthru
      _
    %p299 = scmp.lt.s32.totalorder %s16, 2
    // Predicated region
    $region49: #{_forward_impl.7} parent=5 // pred_check
      %p300 = pneg %p299
    $region50: #{_forward_impl.7} parent=5 // pred_check_branch
      %302 = sbr.rel (%p300) target = $region52
    $region51: #{_forward_impl.7} parent=5 // pred_region
      // Predicated region
      $region53: #{_forward_impl.7} parent=51 // pred_check
        %p303 = pneg %p36
      $region54: #{_forward_impl.7} parent=51 // pred_check_branch
        %305 = sbr.rel (%p303) target = $region56
      $region55: #{_forward_impl.7} parent=51 // pred_region
        %p306 = scmp.lt.s32.totalorder %s16, 1
        %s307 = scalar_select %p306, %s16, 1
        %s308 = smul.addr %s307, 8
        %s309 = scalar_lea.vmem %s0, %s308
      $region56: #{_forward_impl.7} parent=51 // pred_fallthru
        _
    $region52: #{_forward_impl.7} parent=5 // pred_fallthru
      _
    %p310 = scmp.le.s32.totalorder 1, %s16
    %p311 = scmp.lt.s32.totalorder %s16, 3
    %p312 = pnand %p310, %p311
    %p313 = pneg %p312
    // Predicated region
    $region57: #{_forward_impl.7} parent=5 // pred_check
      _
    $region58: #{_forward_impl.7} parent=5 // pred_check_branch
      %315 = sbr.rel (%p312) target = $region60
    $region59: #{_forward_impl.7} parent=5 // pred_region
      %s316 = ssub.s32 %s16, 1
      %p317 = scmp.lt.s32.totalorder %s21, 1
      %s318 = scalar_select %p317, %s21, 1
      %s319 = smul.addr %s318, 8
      %s320 = scalar_lea.vmem %s0, %s319
      %p321 = pneg %p42
      %p322 = pneg %p39
      %p323 = pneg %p63
      %p324 = pneg %p60
      %p325 = pneg %p84
      %p326 = pneg %p81
      %p327 = pneg %p105
      %p328 = pneg %p102
      %p329 = pneg %p126
      %p330 = pneg %p123
      %p331 = pneg %p147
      %p332 = pneg %p144
      %p333 = pneg %p168
      %p334 = pneg %p165
      %p335 = pneg %p189
      %p336 = pneg %p186
      %p337 = pneg %p210
      %p338 = pneg %p207
      %p339 = pneg %p231
      %p340 = pneg %p228
      %p341 = pneg %p257
      %p342 = pneg %p254
      %p343 = scmp.lt.s32.totalorder %s21, 1
      %s344 = scalar_select %p343, %s21, 1
      %s345 = smul.addr %s344, 8
      %s346 = scalar_lea.vmem %s10, %s345
      %p347 = scmp.lt.s32.totalorder %s21, 1
      %s348 = scalar_select %p347, %s21, 1
      %s349 = smul.addr %s348, 8
      %s350 = scalar_lea.vmem %s0, %s349
      %p351 = scmp.lt.s32.totalorder %s21, 1
      %s352 = scalar_select %p351, %s21, 1
      %s353 = smul.addr %s352, 8
      %s354 = scalar_lea.vmem %s10, %s353
      %v355 = vld [vmem:[%s9] sm:$0xf]
      %v356 = vld [vmem:[%s350] sm:$0xff]
      %vm357 = vcmp.ge.f32.partialorder %v356, 0.0
      %s359 = vtos %v355
      %v360 = vstv %s359
      %v362 = vmul.f32 %v356, %v360
      %v363 = vsel %vm357, %v356, %v362
      %vm364 = vcmask 130048
      %365 = vst.msk [vmem:[#allocation2] sm:$0xff] %vm364, %v363
      %367 = vrot.lane.b32.xlu0 %v363, 127
      %v368 = vpop.permute.xlu0 %367
      %370 = vst.msk [vmem:[#allocation2 + $0x8] sm:$0xff] %vm364, %v368
      %v371 = vld [vmem:[#allocation2] sm:$0xff]
      %v372 = vld [vmem:[#allocation2 + $0x8] sm:$0xff]
      %v373 = vld [vmem:[%s1] sm:$0xff]
      %v374 = vld [vmem:[%s2] sm:$0xff]
      %376 = vset.pattern.permute.xlu0 0
      %377 = vperm.xlu0 %376, %v374
      %v378 = vpop.permute.xlu0 %377
      %v381 = vsel %vm364, %v373, 0
      %383 = vmatprep.subr.mxu0 0.0
      %384 = vmatpush1.msra.mxu0 %v371
      %385 = vmatprep.subr.mxu0 0.0
      %386 = vmatpush1.msra.mxu0 %v372
      %387 = vmatprep.subr.mxu0 0.0
      %388 = vmatpush1.msra.mxu0 0.0
      %389 = vmatprep.subr.mxu0 0.0
      %390 = vmatpush1.msra.mxu0 0.0
      %391 = vmatprep.subr.mxu0 0.0
      %392 = vmatpush1.msra.mxu0 0.0
      %393 = vmatprep.subr.mxu0 0.0
      %394 = vmatpush1.msra.mxu0 0.0
      %395 = vmatprep.subr.mxu0 0.0
      %396 = vmatpush1.msra.mxu0 0.0
      %397 = vmatprep.subr.mxu0 0.0
      %398 = vmatpush1.msra.mxu0 0.0
      %399 = vmatprep.subr.mxu0 0.0
      %400 = vmatpush1.msra.mxu0 0.0
      %401 = vmatprep.subr.mxu0 0.0
      %402 = vmatpush1.msra.mxu0 0.0
      %403 = vmatprep.subr.mxu0 0.0
      %404 = vmatpush1.msra.mxu0 0.0
      %405 = vmatprep.subr.mxu0 0.0
      %406 = vmatpush1.msra.mxu0 0.0
      %407 = vmatprep.subr.mxu0 0.0
      %408 = vmatpush1.msra.mxu0 0.0
      %409 = vmatprep.subr.mxu0 0.0
      %410 = vmatpush1.msra.mxu0 0.0
      %411 = vmatprep.subr.mxu0 0.0
      %412 = vmatpush1.msra.mxu0 0.0
      %413 = vmatprep.subr.mxu0 0.0
      %414 = vmatpush1.msra.mxu0 0.0
      %415 = vmatprep.subr.mxu0 0.0
      %416 = vmatpush1.msra.mxu0 0.0
      %417 = vmatprep.subr.mxu0 0.0
      %418 = vmatpush1.msra.mxu0 0.0
      %419 = vmatprep.subr.mxu0 0.0
      %420 = vmatpush1.msra.mxu0 0.0
      %421 = vmatprep.subr.mxu0 0.0
      %422 = vmatpush1.msra.mxu0 0.0
      %423 = vmatprep.subr.mxu0 0.0
      %424 = vmatpush1.msra.mxu0 0.0
      %425 = vmatprep.subr.mxu0 0.0
      %426 = vmatpush1.msra.mxu0 0.0
      %427 = vmatprep.subr.mxu0 0.0
      %428 = vmatpush1.msra.mxu0 0.0
      %429 = vmatprep.subr.mxu0 0.0
      %430 = vmatpush1.msra.mxu0 0.0
      %431 = vmatprep.subr.mxu0 0.0
      %432 = vmatpush1.msra.mxu0 0.0
      %433 = vmatprep.subr.mxu0 0.0
      %434 = vmatpush1.msra.mxu0 0.0
      %435 = vmatprep.subr.mxu0 0.0
      %436 = vmatpush1.msra.mxu0 0.0
      %437 = vmatprep.subr.mxu0 0.0
      %438 = vmatpush1.msra.mxu0 0.0
      %439 = vmatprep.subr.mxu0 0.0
      %440 = vmatpush1.msra.mxu0 0.0
      %441 = vmatprep.subr.mxu0 0.0
      %442 = vmatpush1.msra.mxu0 0.0
      %443 = vmatprep.subr.mxu0 0.0
      %444 = vmatpush1.msra.mxu0 0.0
      %445 = vmatprep.subr.mxu0 0.0
      %446 = vmatpush1.msra.mxu0 0.0
      %447 = vmatprep.mubr.f32.mxu0 0.0
      %448 = vmatmul.mubr.f32.gmra.mrb[0].mxu0 %v381
      %v449 = vpop.f32.mrb[0].mxu0
      %v450 = vadd.f32 %v378, %v449
      %v451 = vpop.f32.mrb[0].mxu0
      %452 = vdwg.mxu0
      %vm453 = vcmp.ge.f32.partialorder %v450, 0.0
      %v454 = vrot.slane %v355, 1
      %s455 = vtos %v454
      %v456 = vstv %s455
      %v458 = vmul.f32 %v450, %v456
      %v459 = vsel %vm453, %v450, %v458
      %461 = vrot.lane.b32.xlu0 %v459, 5
      %v462 = vpop.permute.xlu0 %461
      %vm464 = vcmask 171048
      %465 = vst.msk [vmem:[#allocation2] sm:$0xff] %vm464, %v462
      %466 = vrot.lane.b32.xlu0 %v459, 4
      %v467 = vpop.permute.xlu0 %466
      %vm469 = vcmask 162848
      %470 = vst.msk [vmem:[#allocation2 + $0x8] sm:$0xff] %vm469, %v467
      %471 = vrot.lane.b32.xlu0 %v459, 3
      %v472 = vpop.permute.xlu0 %471
      %vm474 = vcmask 154648
      %475 = vst.msk [vmem:[#allocation2 + $0x10] sm:$0xff] %vm474, %v472
      %vm476 = vcmask 39968
      %477 = vst.msk [vmem:[#allocation2] sm:$0xff] %vm476, 0.0
      %vm478 = vcmask 162968
      %479 = vst.msk [vmem:[#allocation2 + $0x10] sm:$0xff] %vm478, 0.0
      %v480 = vld [vmem:[#allocation2] sm:$0xff]
      %v481 = vld [vmem:[#allocation2 + $0x8] sm:$0xff]
      %v482 = vld [vmem:[#allocation2 + $0x10] sm:$0xff]
      %v483 = vld [vmem:[%s3] sm:$0xff]
      %v484 = vld [vmem:[%s4] sm:$0xff]
      %486 = vset.pattern.permute.xlu0 0
      %487 = vperm.xlu0 %486, %v484
      %v488 = vpop.permute.xlu0 %487
      %493 = vrot.lane.b32.xlu0 %v480, 124
      %v494 = vpop.permute.xlu0 %493
      %495 = vrot.lane.b32.xlu0 %v481, 124
      %v496 = vpop.permute.xlu0 %495
      %497 = vrot.lane.b32.xlu0 %v482, 124
      %v498 = vpop.permute.xlu0 %497
      %vm502 = vcmask 195584
      %v504 = vsel %vm502, %v483, 0
      %506 = vmatprep.subr.mxu0 0.0
      %507 = vmatpush1.msra.mxu0 %v494
      %508 = vmatprep.subr.mxu0 0.0
      %509 = vmatpush1.msra.mxu0 %v496
      %510 = vmatprep.subr.mxu0 0.0
      %511 = vmatpush1.msra.mxu0 %v498
      %512 = vmatprep.subr.mxu0 0.0
      %513 = vmatpush1.msra.mxu0 0.0
      %514 = vmatprep.subr.mxu0 0.0
      %515 = vmatpush1.msra.mxu0 0.0
      %516 = vmatprep.subr.mxu0 0.0
      %517 = vmatpush1.msra.mxu0 0.0
      %518 = vmatprep.subr.mxu0 0.0
      %519 = vmatpush1.msra.mxu0 0.0
      %520 = vmatprep.subr.mxu0 0.0
      %521 = vmatpush1.msra.mxu0 0.0
      %522 = vmatprep.subr.mxu0 0.0
      %523 = vmatpush1.msra.mxu0 0.0
      %524 = vmatprep.subr.mxu0 0.0
      %525 = vmatpush1.msra.mxu0 0.0
      %526 = vmatprep.subr.mxu0 0.0
      %527 = vmatpush1.msra.mxu0 0.0
      %528 = vmatprep.subr.mxu0 0.0
      %529 = vmatpush1.msra.mxu0 0.0
      %530 = vmatprep.subr.mxu0 0.0
      %531 = vmatpush1.msra.mxu0 0.0
      %532 = vmatprep.subr.mxu0 0.0
      %533 = vmatpush1.msra.mxu0 0.0
      %534 = vmatprep.subr.mxu0 0.0
      %535 = vmatpush1.msra.mxu0 0.0
      %536 = vmatprep.subr.mxu0 0.0
      %537 = vmatpush1.msra.mxu0 0.0
      %538 = vmatprep.subr.mxu0 0.0
      %539 = vmatpush1.msra.mxu0 0.0
      %540 = vmatprep.subr.mxu0 0.0
      %541 = vmatpush1.msra.mxu0 0.0
      %542 = vmatprep.subr.mxu0 0.0
      %543 = vmatpush1.msra.mxu0 0.0
      %544 = vmatprep.subr.mxu0 0.0
      %545 = vmatpush1.msra.mxu0 0.0
      %546 = vmatprep.subr.mxu0 0.0
      %547 = vmatpush1.msra.mxu0 0.0
      %548 = vmatprep.subr.mxu0 0.0
      %549 = vmatpush1.msra.mxu0 0.0
      %550 = vmatprep.subr.mxu0 0.0
      %551 = vmatpush1.msra.mxu0 0.0
      %552 = vmatprep.subr.mxu0 0.0
      %553 = vmatpush1.msra.mxu0 0.0
      %554 = vmatprep.subr.mxu0 0.0
      %555 = vmatpush1.msra.mxu0 0.0
      %556 = vmatprep.subr.mxu0 0.0
      %557 = vmatpush1.msra.mxu0 0.0
      %558 = vmatprep.subr.mxu0 0.0
      %559 = vmatpush1.msra.mxu0 0.0
      %560 = vmatprep.subr.mxu0 0.0
      %561 = vmatpush1.msra.mxu0 0.0
      %562 = vmatprep.subr.mxu0 0.0
      %563 = vmatpush1.msra.mxu0 0.0
      %564 = vmatprep.subr.mxu0 0.0
      %565 = vmatpush1.msra.mxu0 0.0
      %566 = vmatprep.subr.mxu0 0.0
      %567 = vmatpush1.msra.mxu0 0.0
      %568 = vmatprep.subr.mxu0 0.0
      %569 = vmatpush1.msra.mxu0 0.0
      %570 = vmatprep.mubr.f32.mxu0 0.0
      %571 = vmatmul.mubr.f32.gmra.mrb[0].mxu0 %v504
      %v572 = vpop.f32.mrb[0].mxu0
      %v573 = vadd.f32 %v488, %v572
      %v574 = vpop.f32.mrb[0].mxu0
      %575 = vdwg.mxu0
      %v576 = vadd.f32 %v450, %v573
      %vm577 = vcmp.ge.f32.partialorder %v576, 0.0
      %v578 = vrot.slane %v355, 2
      %s579 = vtos %v578
      %v580 = vstv %s579
      %v582 = vmul.f32 %v576, %v580
      %v583 = vsel %vm577, %v576, %v582
      %585 = vrot.lane.b32.xlu0 %v583, 6
      %v586 = vpop.permute.xlu0 %585
      %vm588 = vcmask 179248
      %589 = vst.msk [vmem:[#allocation2] sm:$0xff] %vm588, %v586
      %590 = vrot.lane.b32.xlu0 %v583, 4
      %v591 = vpop.permute.xlu0 %590
      %593 = vst.msk [vmem:[#allocation2 + $0x8] sm:$0xff] %vm469, %v591
      %594 = vrot.lane.b32.xlu0 %v583, 2
      %v595 = vpop.permute.xlu0 %594
      %vm597 = vcmask 146448
      %598 = vst.msk [vmem:[#allocation2 + $0x10] sm:$0xff] %vm597, %v595
      %vm599 = vcmask 48160
      %600 = vst.msk [vmem:[#allocation2] sm:$0xff] %vm599, 0.0
      %vm601 = vcmask 162960
      %602 = vst.msk [vmem:[#allocation2 + $0x10] sm:$0xff] %vm601, 0.0
      %v603 = vld [vmem:[#allocation2] sm:$0xff]
      %v604 = vld [vmem:[#allocation2 + $0x8] sm:$0xff]
      %v605 = vld [vmem:[#allocation2 + $0x10] sm:$0xff]
      %v606 = vld [vmem:[%s5] sm:$0xff]
      %v607 = vld [vmem:[%s6] sm:$0xff]
      %609 = vset.pattern.permute.xlu0 0
      %610 = vperm.xlu0 %609, %v607
      %v611 = vpop.permute.xlu0 %610
      %616 = vrot.lane.b32.xlu0 %v603, 124
      %v617 = vpop.permute.xlu0 %616
      %618 = vrot.lane.b32.xlu0 %v604, 124
      %v619 = vpop.permute.xlu0 %618
      %620 = vrot.lane.b32.xlu0 %v605, 124
      %v621 = vpop.permute.xlu0 %620
      %v626 = vsel %vm502, %v606, 0
      %628 = vmatprep.subr.mxu0 0.0
      %629 = vmatpush1.msra.mxu0 %v617
      %630 = vmatprep.subr.mxu0 0.0
      %631 = vmatpush1.msra.mxu0 %v619
      %632 = vmatprep.subr.mxu0 0.0
      %633 = vmatpush1.msra.mxu0 %v621
      %634 = vmatprep.subr.mxu0 0.0
      %635 = vmatpush1.msra.mxu0 0.0
      %636 = vmatprep.subr.mxu0 0.0
      %637 = vmatpush1.msra.mxu0 0.0
      %638 = vmatprep.subr.mxu0 0.0
      %639 = vmatpush1.msra.mxu0 0.0
      %640 = vmatprep.subr.mxu0 0.0
      %641 = vmatpush1.msra.mxu0 0.0
      %642 = vmatprep.subr.mxu0 0.0
      %643 = vmatpush1.msra.mxu0 0.0
      %644 = vmatprep.subr.mxu0 0.0
      %645 = vmatpush1.msra.mxu0 0.0
      %646 = vmatprep.subr.mxu0 0.0
      %647 = vmatpush1.msra.mxu0 0.0
      %648 = vmatprep.subr.mxu0 0.0
      %649 = vmatpush1.msra.mxu0 0.0
      %650 = vmatprep.subr.mxu0 0.0
      %651 = vmatpush1.msra.mxu0 0.0
      %652 = vmatprep.subr.mxu0 0.0
      %653 = vmatpush1.msra.mxu0 0.0
      %654 = vmatprep.subr.mxu0 0.0
      %655 = vmatpush1.msra.mxu0 0.0
      %656 = vmatprep.subr.mxu0 0.0
      %657 = vmatpush1.msra.mxu0 0.0
      %658 = vmatprep.subr.mxu0 0.0
      %659 = vmatpush1.msra.mxu0 0.0
      %660 = vmatprep.subr.mxu0 0.0
      %661 = vmatpush1.msra.mxu0 0.0
      %662 = vmatprep.subr.mxu0 0.0
      %663 = vmatpush1.msra.mxu0 0.0
      %664 = vmatprep.subr.mxu0 0.0
      %665 = vmatpush1.msra.mxu0 0.0
      %666 = vmatprep.subr.mxu0 0.0
      %667 = vmatpush1.msra.mxu0 0.0
      %668 = vmatprep.subr.mxu0 0.0
      %669 = vmatpush1.msra.mxu0 0.0
      %670 = vmatprep.subr.mxu0 0.0
      %671 = vmatpush1.msra.mxu0 0.0
      %672 = vmatprep.subr.mxu0 0.0
      %673 = vmatpush1.msra.mxu0 0.0
      %674 = vmatprep.subr.mxu0 0.0
      %675 = vmatpush1.msra.mxu0 0.0
      %676 = vmatprep.subr.mxu0 0.0
      %677 = vmatpush1.msra.mxu0 0.0
      %678 = vmatprep.subr.mxu0 0.0
      %679 = vmatpush1.msra.mxu0 0.0
      %680 = vmatprep.subr.mxu0 0.0
      %681 = vmatpush1.msra.mxu0 0.0
      %682 = vmatprep.subr.mxu0 0.0
      %683 = vmatpush1.msra.mxu0 0.0
      %684 = vmatprep.subr.mxu0 0.0
      %685 = vmatpush1.msra.mxu0 0.0
      %686 = vmatprep.subr.mxu0 0.0
      %687 = vmatpush1.msra.mxu0 0.0
      %688 = vmatprep.subr.mxu0 0.0
      %689 = vmatpush1.msra.mxu0 0.0
      %690 = vmatprep.subr.mxu0 0.0
      %691 = vmatpush1.msra.mxu0 0.0
      %692 = vmatprep.mubr.f32.mxu0 0.0
      %693 = vmatmul.mubr.f32.gmra.mrb[0].mxu0 %v626
      %v694 = vpop.f32.mrb[0].mxu0
      %v695 = vadd.f32 %v611, %v694
      %v696 = vpop.f32.mrb[0].mxu0
      %697 = vdwg.mxu0
      %v698 = vadd.f32 %v576, %v695
      %vm699 = vcmp.ge.f32.partialorder %v698, 0.0
      %v700 = vrot.slane %v355, 3
      %s701 = vtos %v700
      %v702 = vstv %s701
      %v704 = vmul.f32 %v698, %v702
      %v705 = vsel %vm699, %v698, %v704
      %707 = vrot.lane.b32.xlu0 %v705, 8
      %v708 = vpop.permute.xlu0 %707
      %vm710 = vcmask 195648
      %711 = vst.msk [vmem:[#allocation2] sm:$0xff] %vm710, %v708
      %712 = vrot.lane.b32.xlu0 %v705, 4
      %v713 = vpop.permute.xlu0 %712
      %715 = vst.msk [vmem:[#allocation2 + $0x8] sm:$0xff] %vm469, %v713
      %716 = vst.msk [vmem:[#allocation2 + $0x10] sm:$0xff] %vm364, %v705
      %vm717 = vcmask 64544
      %718 = vst.msk [vmem:[#allocation2] sm:$0xff] %vm717, 0.0
      %vm719 = vcmask 162944
      %720 = vst.msk [vmem:[#allocation2 + $0x10] sm:$0xff] %vm719, 0.0
      %v721 = vld [vmem:[#allocation2] sm:$0xff]
      %v722 = vld [vmem:[#allocation2 + $0x8] sm:$0xff]
      %v723 = vld [vmem:[#allocation2 + $0x10] sm:$0xff]
      %v724 = vld [vmem:[%s7] sm:$0xff]
      %v725 = vld [vmem:[%s8] sm:$0xff]
      %727 = vset.pattern.permute.xlu0 0
      %728 = vperm.xlu0 %727, %v725
      %v729 = vpop.permute.xlu0 %728
      %734 = vrot.lane.b32.xlu0 %v721, 124
      %v735 = vpop.permute.xlu0 %734
      %736 = vrot.lane.b32.xlu0 %v722, 124
      %v737 = vpop.permute.xlu0 %736
      %738 = vrot.lane.b32.xlu0 %v723, 124
      %v739 = vpop.permute.xlu0 %738
      %v744 = vsel %vm502, %v724, 0
      %746 = vmatprep.subr.mxu0 0.0
      %747 = vmatpush1.msra.mxu0 %v735
      %748 = vmatprep.subr.mxu0 0.0
      %749 = vmatpush1.msra.mxu0 %v737
      %750 = vmatprep.subr.mxu0 0.0
      %751 = vmatpush1.msra.mxu0 %v739
      %752 = vmatprep.subr.mxu0 0.0
      %753 = vmatpush1.msra.mxu0 0.0
      %754 = vmatprep.subr.mxu0 0.0
      %755 = vmatpush1.msra.mxu0 0.0
      %756 = vmatprep.subr.mxu0 0.0
      %757 = vmatpush1.msra.mxu0 0.0
      %758 = vmatprep.subr.mxu0 0.0
      %759 = vmatpush1.msra.mxu0 0.0
      %760 = vmatprep.subr.mxu0 0.0
      %761 = vmatpush1.msra.mxu0 0.0
      %762 = vmatprep.subr.mxu0 0.0
      %763 = vmatpush1.msra.mxu0 0.0
      %764 = vmatprep.subr.mxu0 0.0
      %765 = vmatpush1.msra.mxu0 0.0
      %766 = vmatprep.subr.mxu0 0.0
      %767 = vmatpush1.msra.mxu0 0.0
      %768 = vmatprep.subr.mxu0 0.0
      %769 = vmatpush1.msra.mxu0 0.0
      %770 = vmatprep.subr.mxu0 0.0
      %771 = vmatpush1.msra.mxu0 0.0
      %772 = vmatprep.subr.mxu0 0.0
      %773 = vmatpush1.msra.mxu0 0.0
      %774 = vmatprep.subr.mxu0 0.0
      %775 = vmatpush1.msra.mxu0 0.0
      %776 = vmatprep.subr.mxu0 0.0
      %777 = vmatpush1.msra.mxu0 0.0
      %778 = vmatprep.subr.mxu0 0.0
      %779 = vmatpush1.msra.mxu0 0.0
      %780 = vmatprep.subr.mxu0 0.0
      %781 = vmatpush1.msra.mxu0 0.0
      %782 = vmatprep.subr.mxu0 0.0
      %783 = vmatpush1.msra.mxu0 0.0
      %784 = vmatprep.subr.mxu0 0.0
      %785 = vmatpush1.msra.mxu0 0.0
      %786 = vmatprep.subr.mxu0 0.0
      %787 = vmatpush1.msra.mxu0 0.0
      %788 = vmatprep.subr.mxu0 0.0
      %789 = vmatpush1.msra.mxu0 0.0
      %790 = vmatprep.subr.mxu0 0.0
      %791 = vmatpush1.msra.mxu0 0.0
      %792 = vmatprep.subr.mxu0 0.0
      %793 = vmatpush1.msra.mxu0 0.0
      %794 = vmatprep.subr.mxu0 0.0
      %795 = vmatpush1.msra.mxu0 0.0
      %796 = vmatprep.subr.mxu0 0.0
      %797 = vmatpush1.msra.mxu0 0.0
      %798 = vmatprep.subr.mxu0 0.0
      %799 = vmatpush1.msra.mxu0 0.0
      %800 = vmatprep.subr.mxu0 0.0
      %801 = vmatpush1.msra.mxu0 0.0
      %802 = vmatprep.subr.mxu0 0.0
      %803 = vmatpush1.msra.mxu0 0.0
      %804 = vmatprep.subr.mxu0 0.0
      %805 = vmatpush1.msra.mxu0 0.0
      %806 = vmatprep.subr.mxu0 0.0
      %807 = vmatpush1.msra.mxu0 0.0
      %808 = vmatprep.subr.mxu0 0.0
      %809 = vmatpush1.msra.mxu0 0.0
      %810 = vmatprep.mubr.f32.mxu0 0.0
      %811 = vmatmul.mubr.f32.gmra.mrb[0].mxu0 %v744
      %v812 = vpop.f32.mrb[0].mxu0
      %v813 = vadd.f32 %v729, %v812
      %v814 = vpop.f32.mrb[0].mxu0
      %815 = vdwg.mxu0
      %v816 = vadd.f32 %v698, %v813
      %817 = vst.msk [vmem:[%s354] sm:$0xff] %vm364, %v816
      %p818 = scmp.lt.s32.totalorder %s21, 1
      %s819 = scalar_select %p818, %s21, 1
      %s820 = smul.addr %s819, 8
      %s821 = scalar_lea.vmem %s10, %s820
      // Predicated region
      $region61: #{_forward_impl.7} parent=59 // pred_check
        %p822 = pneg %p254
      $region62: #{_forward_impl.7} parent=59 // pred_check_branch
        %824 = sbr.rel (%p822) target = $region64
      $region63: #{_forward_impl.7} parent=59 // pred_region
        _
      $region64: #{_forward_impl.7} parent=59 // pred_fallthru
        _
    $region60: #{_forward_impl.7} parent=5 // pred_fallthru
      _
    %p825 = scmp.le.s32.totalorder 2, %s16
    // Predicated region
    $region65: #{_forward_impl.7} parent=5 // pred_check
      %p826 = pneg %p825
    $region66: #{_forward_impl.7} parent=5 // pred_check_branch
      %828 = sbr.rel (%p826) target = $region68
    $region67: #{_forward_impl.7} parent=5 // pred_region
      %s829 = ssub.s32 %s16, 2
      // Predicated region
      $region69: #{_forward_impl.7} parent=67 // pred_check
        %p830 = pneg %p260
      $region70: #{_forward_impl.7} parent=67 // pred_check_branch
        %832 = sbr.rel (%p830) target = $region72
      $region71: #{_forward_impl.7} parent=67 // pred_region
        %p833 = scmp.lt.s32.totalorder %s22, 1
        %s834 = scalar_select %p833, %s22, 1
        %s835 = smul.addr %s834, 8
        %s836 = scalar_lea.vmem %s10, %s835
      $region72: #{_forward_impl.7} parent=67 // pred_fallthru
        _
    $region68: #{_forward_impl.7} parent=5 // pred_fallthru
      _
  $region6: #{_forward_impl.7} parent=0 // loop_footer
    %s20 = sadd.s32 1, %s16
  $region7: #{_forward_impl.7} parent=0 // loop_footer_branch
    %15 = sbr.rel target = $region3
  $region8: #{_forward_impl.7} parent=0 // loop_exit
    _

// kernel: _forward_impl.10
$region0: #{_forward_impl.10}
  #allocation0 [shape = 'u32[]', space=smem, size = 0x4, offset = 0x4, fixed_abs, tag = 'smem constant byte address 0x4 - core index']
  #allocation1 [shape = 'u32[144,128]{1,0:T(1,128)}', space=vmem, size = 0x12000, scoped, tag = 'internal scratch']
  #allocation2 [shape = 'f32[48,16]{1,0:T(8,128)}', space=vmem, size = 0x6000, scoped, tag = 'scratch operand']
  %s0 = inlined_call_operand.vmem [shape: f32[2,16,8], index: 0, kind: input, shape index: {}]
  %s1 = inlined_call_operand.vmem [shape: f32[2,16,8], index: 1, kind: input, shape index: {}]
  %s2 = inlined_call_operand.vmem [shape: f32[2,16,8], index: 2, kind: input, shape index: {}]
  %s3 = inlined_call_operand.vmem [shape: f32[16,48], index: 3, kind: input, shape index: {}]
  %s4 = inlined_call_operand.vmem [shape: f32[16,1], index: 4, kind: input, shape index: {}]
  %s5 = inlined_call_operand.vmem [shape: f32[16,48], index: 5, kind: input, shape index: {}]
  %s6 = inlined_call_operand.vmem [shape: f32[16,1], index: 6, kind: input, shape index: {}]
  %s7 = inlined_call_operand.vmem [shape: f32[16,48], index: 7, kind: input, shape index: {}]
  %s8 = inlined_call_operand.vmem [shape: f32[16,1], index: 8, kind: input, shape index: {}]
  %s9 = inlined_call_operand.vmem [shape: f32[3,1], index: 9, kind: input, shape index: {}]
  %s10 = inlined_call_operand.vmem [shape: f32[2,16,8], index: 10, kind: output, shape index: {}]
  %s11 = sld [smem:[#allocation0]]
  $region73: #{_forward_impl.10} parent=0
    _
  %s13 = ssub.s32 1, %s11
  %s14 = scalar_select 0, %s13, %s11
  loop: start=0, step=1, limit=4
  $region2: #{_forward_impl.10} parent=0 // loop_pre_header
    _
  $region3: #{_forward_impl.10} parent=0 // loop_header
    %s16 = sphi 0, %s20
    %p17 = scmp.ge.s32.totalorder %s16, 4
    %s26 = sphi 0, %s28
    %s29 = sphi 0, %s26
    %s30 = sphi 0, %s29
    %s46 = sphi 0, %s30
    %s52 = sphi 0, %s54
    %s55 = sphi 0, %s52
    %s56 = sphi 0, %s55
    %s72 = sphi 0, %s56
    %s78 = sphi 0, %s80
    %s81 = sphi 0, %s78
    %s82 = sphi 0, %s81
    %s98 = sphi 0, %s82
    %s102 = sphi 0, %s102
    %s104 = sphi 0, %s102
    %s105 = sphi 0, %s104
    %s119 = sphi 0, %s105
    %s123 = sphi 0, %s123
    %s125 = sphi 0, %s123
    %s126 = sphi 0, %s125
    %s140 = sphi 0, %s126
    %s144 = sphi 0, %s144
    %s146 = sphi 0, %s144
    %s147 = sphi 0, %s146
    %s161 = sphi 0, %s147
    %s165 = sphi 0, %s165
    %s167 = sphi 0, %s165
    %s168 = sphi 0, %s167
    %s182 = sphi 0, %s168
    %s186 = sphi 0, %s186
    %s188 = sphi 0, %s186
    %s189 = sphi 0, %s188
    %s203 = sphi 0, %s189
    %s207 = sphi 0, %s207
    %s209 = sphi 0, %s207
    %s210 = sphi 0, %s209
    %s224 = sphi 0, %s210
    %s228 = sphi 0, %s228
    %s230 = sphi 0, %s228
    %s231 = sphi 0, %s230
    %s245 = sphi 0, %s231
    %s251 = sphi 0, %s253
    %s254 = sphi 0, %s251
    %s255 = sphi 0, %s254
    %s271 = sphi 0, %s255
  $region4: #{_forward_impl.10} parent=0 // loop_header_branch
    %19 = sbr.rel (%p17) target = $region8
  $region5: #{_forward_impl.10} parent=0 // loop_body
    %s21 = ssub.s32 %s16, 1
    %s22 = ssub.s32 %s16, 2
    %s23 = sadd.s32 %s16, 1
    %s24 = ssub.s32 %s16, %s23
    %p25 = scmp.eq.s32.totalorder %s24, 0
    %s27 = sadd.s32 %s26, 1
    %s28 = scalar_select %p25, %s26, %s27
    %p31 = pneg %p25
    %p32 = scmp.eq.s32.totalorder %s16, 1
    %p33 = por %p31, %p32
    %p34 = scmp.ne.s32.totalorder %s26, %s29
    %p35 = scmp.eq.s32.totalorder %s16, 0
    %p36 = por %p34, %p35
    %p37 = scmp.ne.s32.totalorder %s26, %s29
    %p38 = scmp.eq.s32.totalorder %s21, 1
    %p39 = por %p37, %p38
    %p40 = scmp.ne.s32.totalorder %s29, %s30
    %p41 = scmp.eq.s32.totalorder %s21, 0
    %p42 = por %p40, %p41
    %p43 = scmp.ne.s32.totalorder %s29, %s30
    %p44 = scmp.eq.s32.totalorder %s22, 1
    %p45 = por %p43, %p44
    %p47 = scmp.ne.s32.totalorder %s30, %s46
    %p48 = scmp.eq.s32.totalorder %s22, 0
    %p49 = por %p47, %p48
    %s50 = ssub.s32 %s16, %s23
    %p51 = scmp.eq.s32.totalorder %s50, 0
    %s53 = sadd.s32 %s52, 1
    %s54 = scalar_select %p51, %s52, %s53
    %p57 = pneg %p51
    %p58 = scmp.eq.s32.totalorder %s16, 1
    %p59 = por %p57, %p58
    %p60 = scmp.ne.s32.totalorder %s52, %s55
    %p61 = scmp.eq.s32.totalorder %s16, 0
    %p62 = por %p60, %p61
    %p63 = scmp.ne.s32.totalorder %s52, %s55
    %p64 = scmp.eq.s32.totalorder %s21, 1
    %p65 = por %p63, %p64
    %p66 = scmp.ne.s32.totalorder %s55, %s56
    %p67 = scmp.eq.s32.totalorder %s21, 0
    %p68 = por %p66, %p67
    %p69 = scmp.ne.s32.totalorder %s55, %s56
    %p70 = scmp.eq.s32.totalorder %s22, 1
    %p71 = por %p69, %p70
    %p73 = scmp.ne.s32.totalorder %s56, %s72
    %p74 = scmp.eq.s32.totalorder %s22, 0
    %p75 = por %p73, %p74
    %s76 = ssub.s32 %s16, %s23
    %p77 = scmp.eq.s32.totalorder %s76, 0
    %s79 = sadd.s32 %s78, 1
    %s80 = scalar_select %p77, %s78, %s79
    %p83 = pneg %p77
    %p84 = scmp.eq.s32.totalorder %s16, 1
    %p85 = por %p83, %p84
    %p86 = scmp.ne.s32.totalorder %s78, %s81
    %p87 = scmp.eq.s32.totalorder %s16, 0
    %p88 = por %p86, %p87
    %p89 = scmp.ne.s32.totalorder %s78, %s81
    %p90 = scmp.eq.s32.totalorder %s21, 1
    %p91 = por %p89, %p90
    %p92 = scmp.ne.s32.totalorder %s81, %s82
    %p93 = scmp.eq.s32.totalorder %s21, 0
    %p94 = por %p92, %p93
    %p95 = scmp.ne.s32.totalorder %s81, %s82
    %p96 = scmp.eq.s32.totalorder %s22, 1
    %p97 = por %p95, %p96
    %p99 = scmp.ne.s32.totalorder %s82, %s98
    %p100 = scmp.eq.s32.totalorder %s22, 0
    %p101 = por %p99, %p100
    %s103 = sadd.s32 %s102, 1
    %p106 = scmp.eq.s32.totalorder %s16, 1
    %p107 = scmp.ne.s32.totalorder %s102, %s104
    %p108 = scmp.eq.s32.totalorder %s16, 0
    %p109 = por %p107, %p108
    %p110 = scmp.ne.s32.totalorder %s102, %s104
    %p111 = scmp.eq.s32.totalorder %s21, 1
    %p112 = por %p110, %p111
    %p113 = scmp.ne.s32.totalorder %s104, %s105
    %p114 = scmp.eq.s32.totalorder %s21, 0
    %p115 = por %p113, %p114
    %p116 = scmp.ne.s32.totalorder %s104, %s105
    %p117 = scmp.eq.s32.totalorder %s22, 1
    %p118 = por %p116, %p117
    %p120 = scmp.ne.s32.totalorder %s105, %s119
    %p121 = scmp.eq.s32.totalorder %s22, 0
    %p122 = por %p120, %p121
    %s124 = sadd.s32 %s123, 1
    %p127 = scmp.eq.s32.totalorder %s16, 1
    %p128 = scmp.ne.s32.totalorder %s123, %s125
    %p129 = scmp.eq.s32.totalorder %s16, 0
    %p130 = por %p128, %p129
    %p131 = scmp.ne.s32.totalorder %s123, %s125
    %p132 = scmp.eq.s32.totalorder %s21, 1
    %p133 = por %p131, %p132
    %p134 = scmp.ne.s32.totalorder %s125, %s126
    %p135 = scmp.eq.s32.totalorder %s21, 0
    %p136 = por %p134, %p135
    %p137 = scmp.ne.s32.totalorder %s125, %s126
    %p138 = scmp.eq.s32.totalorder %s22, 1
    %p139 = por %p137, %p138
    %p141 = scmp.ne.s32.totalorder %s126, %s140
    %p142 = scmp.eq.s32.totalorder %s22, 0
    %p143 = por %p141, %p142
    %s145 = sadd.s32 %s144, 1
    %p148 = scmp.eq.s32.totalorder %s16, 1
    %p149 = scmp.ne.s32.totalorder %s144, %s146
    %p150 = scmp.eq.s32.totalorder %s16, 0
    %p151 = por %p149, %p150
    %p152 = scmp.ne.s32.totalorder %s144, %s146
    %p153 = scmp.eq.s32.totalorder %s21, 1
    %p154 = por %p152, %p153
    %p155 = scmp.ne.s32.totalorder %s146, %s147
    %p156 = scmp.eq.s32.totalorder %s21, 0
    %p157 = por %p155, %p156
    %p158 = scmp.ne.s32.totalorder %s146, %s147
    %p159 = scmp.eq.s32.totalorder %s22, 1
    %p160 = por %p158, %p159
    %p162 = scmp.ne.s32.totalorder %s147, %s161
    %p163 = scmp.eq.s32.totalorder %s22, 0
    %p164 = por %p162, %p163
    %s166 = sadd.s32 %s165, 1
    %p169 = scmp.eq.s32.totalorder %s16, 1
    %p170 = scmp.ne.s32.totalorder %s165, %s167
    %p171 = scmp.eq.s32.totalorder %s16, 0
    %p172 = por %p170, %p171
    %p173 = scmp.ne.s32.totalorder %s165, %s167
    %p174 = scmp.eq.s32.totalorder %s21, 1
    %p175 = por %p173, %p174
    %p176 = scmp.ne.s32.totalorder %s167, %s168
    %p177 = scmp.eq.s32.totalorder %s21, 0
    %p178 = por %p176, %p177
    %p179 = scmp.ne.s32.totalorder %s167, %s168
    %p180 = scmp.eq.s32.totalorder %s22, 1
    %p181 = por %p179, %p180
    %p183 = scmp.ne.s32.totalorder %s168, %s182
    %p184 = scmp.eq.s32.totalorder %s22, 0
    %p185 = por %p183, %p184
    %s187 = sadd.s32 %s186, 1
    %p190 = scmp.eq.s32.totalorder %s16, 1
    %p191 = scmp.ne.s32.totalorder %s186, %s188
    %p192 = scmp.eq.s32.totalorder %s16, 0
    %p193 = por %p191, %p192
    %p194 = scmp.ne.s32.totalorder %s186, %s188
    %p195 = scmp.eq.s32.totalorder %s21, 1
    %p196 = por %p194, %p195
    %p197 = scmp.ne.s32.totalorder %s188, %s189
    %p198 = scmp.eq.s32.totalorder %s21, 0
    %p199 = por %p197, %p198
    %p200 = scmp.ne.s32.totalorder %s188, %s189
    %p201 = scmp.eq.s32.totalorder %s22, 1
    %p202 = por %p200, %p201
    %p204 = scmp.ne.s32.totalorder %s189, %s203
    %p205 = scmp.eq.s32.totalorder %s22, 0
    %p206 = por %p204, %p205
    %s208 = sadd.s32 %s207, 1
    %p211 = scmp.eq.s32.totalorder %s16, 1
    %p212 = scmp.ne.s32.totalorder %s207, %s209
    %p213 = scmp.eq.s32.totalorder %s16, 0
    %p214 = por %p212, %p213
    %p215 = scmp.ne.s32.totalorder %s207, %s209
    %p216 = scmp.eq.s32.totalorder %s21, 1
    %p217 = por %p215, %p216
    %p218 = scmp.ne.s32.totalorder %s209, %s210
    %p219 = scmp.eq.s32.totalorder %s21, 0
    %p220 = por %p218, %p219
    %p221 = scmp.ne.s32.totalorder %s209, %s210
    %p222 = scmp.eq.s32.totalorder %s22, 1
    %p223 = por %p221, %p222
    %p225 = scmp.ne.s32.totalorder %s210, %s224
    %p226 = scmp.eq.s32.totalorder %s22, 0
    %p227 = por %p225, %p226
    %s229 = sadd.s32 %s228, 1
    %p232 = scmp.eq.s32.totalorder %s16, 1
    %p233 = scmp.ne.s32.totalorder %s228, %s230
    %p234 = scmp.eq.s32.totalorder %s16, 0
    %p235 = por %p233, %p234
    %p236 = scmp.ne.s32.totalorder %s228, %s230
    %p237 = scmp.eq.s32.totalorder %s21, 1
    %p238 = por %p236, %p237
    %p239 = scmp.ne.s32.totalorder %s230, %s231
    %p240 = scmp.eq.s32.totalorder %s21, 0
    %p241 = por %p239, %p240
    %p242 = scmp.ne.s32.totalorder %s230, %s231
    %p243 = scmp.eq.s32.totalorder %s22, 1
    %p244 = por %p242, %p243
    %p246 = scmp.ne.s32.totalorder %s231, %s245
    %p247 = scmp.eq.s32.totalorder %s22, 0
    %p248 = por %p246, %p247
    %s249 = ssub.s32 %s16, %s23
    %p250 = scmp.eq.s32.totalorder %s249, 0
    %s252 = sadd.s32 %s251, 1
    %s253 = scalar_select %p250, %s251, %s252
    %p256 = pneg %p250
    %p257 = scmp.eq.s32.totalorder %s16, 1
    %p258 = por %p256, %p257
    %p259 = scmp.ne.s32.totalorder %s251, %s254
    %p260 = scmp.eq.s32.totalorder %s16, 0
    %p261 = por %p259, %p260
    %p262 = scmp.ne.s32.totalorder %s251, %s254
    %p263 = scmp.eq.s32.totalorder %s21, 1
    %p264 = por %p262, %p263
    %p265 = scmp.ne.s32.totalorder %s254, %s255
    %p266 = scmp.eq.s32.totalorder %s21, 0
    %p267 = por %p265, %p266
    %p268 = scmp.ne.s32.totalorder %s254, %s255
    %p269 = scmp.eq.s32.totalorder %s22, 1
    %p270 = por %p268, %p269
    %p272 = scmp.ne.s32.totalorder %s255, %s271
    %p273 = scmp.eq.s32.totalorder %s22, 0
    %p274 = por %p272, %p273
    %p275 = scmp.le.s32.totalorder 1, %s16
    %p276 = scmp.lt.s32.totalorder %s16, 3
    %p277 = pnand %p275, %p276
    %p278 = pneg %p277
    // Predicated region
    $region9: #{_forward_impl.10} parent=5 // pred_check
      _
    $region10: #{_forward_impl.10} parent=5 // pred_check_branch
      %280 = sbr.rel (%p277) target = $region12
    $region11: #{_forward_impl.10} parent=5 // pred_region
      %s281 = ssub.s32 %s16, 1
      // Predicated region
      $region13: #{_forward_impl.10} parent=11 // pred_check
        %p282 = pneg %p115
      $region14: #{_forward_impl.10} parent=11 // pred_check_branch
        %284 = sbr.rel (%p282) target = $region16
      $region15: #{_forward_impl.10} parent=11 // pred_region
        _
      $region16: #{_forward_impl.10} parent=11 // pred_fallthru
        _
      // Predicated region
      $region17: #{_forward_impl.10} parent=11 // pred_check
        %p285 = pneg %p136
      $region18: #{_forward_impl.10} parent=11 // pred_check_branch
        %287 = sbr.rel (%p285) target = $region20
      $region19: #{_forward_impl.10} parent=11 // pred_region
        _
      $region20: #{_forward_impl.10} parent=11 // pred_fallthru
        _
      // Predicated region
      $region21: #{_forward_impl.10} parent=11 // pred_check
        %p288 = pneg %p157
      $region22: #{_forward_impl.10} parent=11 // pred_check_branch
        %290 = sbr.rel (%p288) target = $region24
      $region23: #{_forward_impl.10} parent=11 // pred_region
        _
      $region24: #{_forward_impl.10} parent=11 // pred_fallthru
        _
      // Predicated region
      $region25: #{_forward_impl.10} parent=11 // pred_check
        %p291 = pneg %p178
      $region26: #{_forward_impl.10} parent=11 // pred_check_branch
        %293 = sbr.rel (%p291) target = $region28
      $region27: #{_forward_impl.10} parent=11 // pred_region
        _
      $region28: #{_forward_impl.10} parent=11 // pred_fallthru
        _
      // Predicated region
      $region29: #{_forward_impl.10} parent=11 // pred_check
        %p294 = pneg %p199
      $region30: #{_forward_impl.10} parent=11 // pred_check_branch
        %296 = sbr.rel (%p294) target = $region32
      $region31: #{_forward_impl.10} parent=11 // pred_region
        _
      $region32: #{_forward_impl.10} parent=11 // pred_fallthru
        _
      // Predicated region
      $region33: #{_forward_impl.10} parent=11 // pred_check
        %p297 = pneg %p220
      $region34: #{_forward_impl.10} parent=11 // pred_check_branch
        %299 = sbr.rel (%p297) target = $region36
      $region35: #{_forward_impl.10} parent=11 // pred_region
        _
      $region36: #{_forward_impl.10} parent=11 // pred_fallthru
        _
      // Predicated region
      $region37: #{_forward_impl.10} parent=11 // pred_check
        %p300 = pneg %p241
      $region38: #{_forward_impl.10} parent=11 // pred_check_branch
        %302 = sbr.rel (%p300) target = $region40
      $region39: #{_forward_impl.10} parent=11 // pred_region
        _
      $region40: #{_forward_impl.10} parent=11 // pred_fallthru
        _
    $region12: #{_forward_impl.10} parent=5 // pred_fallthru
      _
    %p303 = scmp.lt.s32.totalorder %s16, 2
    // Predicated region
    $region41: #{_forward_impl.10} parent=5 // pred_check
      %p304 = pneg %p303
    $region42: #{_forward_impl.10} parent=5 // pred_check_branch
      %306 = sbr.rel (%p304) target = $region44
    $region43: #{_forward_impl.10} parent=5 // pred_region
      // Predicated region
      $region45: #{_forward_impl.10} parent=43 // pred_check
        %p307 = pneg %p36
      $region46: #{_forward_impl.10} parent=43 // pred_check_branch
        %309 = sbr.rel (%p307) target = $region48
      $region47: #{_forward_impl.10} parent=43 // pred_region
        %p310 = scmp.lt.s32.totalorder %s16, 1
        %s311 = scalar_select %p310, %s16, 1
        %s312 = smul.addr %s311, 2
        %s313 = smul.addr %s312, 8
        %s314 = scalar_lea.vmem %s0, %s313
      $region48: #{_forward_impl.10} parent=43 // pred_fallthru
        _
      // Predicated region
      $region49: #{_forward_impl.10} parent=43 // pred_check
        %p315 = pneg %p62
      $region50: #{_forward_impl.10} parent=43 // pred_check_branch
        %317 = sbr.rel (%p315) target = $region52
      $region51: #{_forward_impl.10} parent=43 // pred_region
        %p318 = scmp.lt.s32.totalorder %s16, 1
        %s319 = scalar_select %p318, %s16, 1
        %s320 = smul.addr %s319, 2
        %s321 = smul.addr %s320, 8
        %s322 = scalar_lea.vmem %s1, %s321
      $region52: #{_forward_impl.10} parent=43 // pred_fallthru
        _
      // Predicated region
      $region53: #{_forward_impl.10} parent=43 // pred_check
        %p323 = pneg %p88
      $region54: #{_forward_impl.10} parent=43 // pred_check_branch
        %325 = sbr.rel (%p323) target = $region56
      $region55: #{_forward_impl.10} parent=43 // pred_region
        %p326 = scmp.lt.s32.totalorder %s16, 1
        %s327 = scalar_select %p326, %s16, 1
        %s328 = smul.addr %s327, 2
        %s329 = smul.addr %s328, 8
        %s330 = scalar_lea.vmem %s2, %s329
      $region56: #{_forward_impl.10} parent=43 // pred_fallthru
        _
    $region44: #{_forward_impl.10} parent=5 // pred_fallthru
      _
    %p331 = scmp.le.s32.totalorder 1, %s16
    %p332 = scmp.lt.s32.totalorder %s16, 3
    %p333 = pnand %p331, %p332
    %p334 = pneg %p333
    // Predicated region
    $region57: #{_forward_impl.10} parent=5 // pred_check
      _
    $region58: #{_forward_impl.10} parent=5 // pred_check_branch
      %336 = sbr.rel (%p333) target = $region60
    $region59: #{_forward_impl.10} parent=5 // pred_region
      %s337 = ssub.s32 %s16, 1
      %p338 = scmp.lt.s32.totalorder %s21, 1
      %s339 = scalar_select %p338, %s21, 1
      %s340 = smul.addr %s339, 2
      %s341 = smul.addr %s340, 8
      %s342 = scalar_lea.vmem %s0, %s341
      %p343 = pneg %p42
      %p344 = pneg %p39
      %p345 = scmp.lt.s32.totalorder %s21, 1
      %s346 = scalar_select %p345, %s21, 1
      %s347 = smul.addr %s346, 2
      %s348 = smul.addr %s347, 8
      %s349 = scalar_lea.vmem %s1, %s348
      %p350 = pneg %p68
      %p351 = pneg %p65
      %p352 = scmp.lt.s32.totalorder %s21, 1
      %s353 = scalar_select %p352, %s21, 1
      %s354 = smul.addr %s353, 2
      %s355 = smul.addr %s354, 8
      %s356 = scalar_lea.vmem %s2, %s355
      %p357 = pneg %p94
      %p358 = pneg %p91
      %p359 = pneg %p115
      %p360 = pneg %p112
      %p361 = pneg %p136
      %p362 = pneg %p133
      %p363 = pneg %p157
      %p364 = pneg %p154
      %p365 = pneg %p178
      %p366 = pneg %p175
      %p367 = pneg %p199
      %p368 = pneg %p196
      %p369 = pneg %p220
      %p370 = pneg %p217
      %p371 = pneg %p241
      %p372 = pneg %p238
      %p373 = pneg %p267
      %p374 = pneg %p264
      %p375 = scmp.lt.s32.totalorder %s21, 1
      %s376 = scalar_select %p375, %s21, 1
      %s377 = smul.addr %s376, 2
      %s378 = smul.addr %s377, 8
      %s379 = scalar_lea.vmem %s10, %s378
      %p380 = scmp.lt.s32.totalorder %s21, 1
      %s381 = scalar_select %p380, %s21, 1
      %s382 = smul.addr %s381, 2
      %s383 = smul.addr %s382, 8
      %s384 = scalar_lea.vmem %s0, %s383
      %p385 = scmp.lt.s32.totalorder %s21, 1
      %s386 = scalar_select %p385, %s21, 1
      %s387 = smul.addr %s386, 2
      %s388 = smul.addr %s387, 8
      %s389 = scalar_lea.vmem %s1, %s388
      %p390 = scmp.lt.s32.totalorder %s21, 1
      %s391 = scalar_select %p390, %s21, 1
      %s392 = smul.addr %s391, 2
      %s393 = smul.addr %s392, 8
      %s394 = scalar_lea.vmem %s2, %s393
      %p395 = scmp.lt.s32.totalorder %s21, 1
      %s396 = scalar_select %p395, %s21, 1
      %s397 = smul.addr %s396, 2
      %s398 = smul.addr %s397, 8
      %s399 = scalar_lea.vmem %s10, %s398
      %v400 = vld [vmem:[%s9] sm:$0x7]
      %v401 = vld [vmem:[%s384] sm:$0xff]
      %v402 = vld [vmem:[%s384 + $0x8] sm:$0xff]
      %v403 = vld [vmem:[%s389] sm:$0xff]
      %v404 = vld [vmem:[%s389 + $0x8] sm:$0xff]
      %v405 = vadd.f32 %v401, %v403
      %v406 = vadd.f32 %v402, %v404
      %v407 = vld [vmem:[%s394] sm:$0xff]
      %v408 = vld [vmem:[%s394 + $0x8] sm:$0xff]
      %v409 = vadd.f32 %v405, %v407
      %v410 = vadd.f32 %v406, %v408
      %v411 = vmul.f32 %v409, 0.57735026
      %v412 = vmul.f32 %v410, 0.57735026
      %vm413 = vcmp.ge.f32.partialorder %v411, 0.0
      %vm414 = vcmp.ge.f32.partialorder %v412, 0.0
      %s416 = vtos %v400
      %v417 = vstv %s416
      %v419 = vmul.f32 %v411, %v417
      %v420 = vmul.f32 %v412, %v417
      %v421 = vsel %vm413, %v411, %v419
      %v422 = vsel %vm414, %v412, %v420
      %425 = vrot.lane.b32.xlu0 %v421, 5
      %v426 = vpop.permute.xlu0 %425
      %427 = vrot.lane.b32.xlu0 %v422, 5
      %v428 = vpop.permute.xlu0 %427
      %vm431 = vcmask 105512
      %432 = vst.msk [vmem:[#allocation2] sm:$0xff] %vm431, %v426
      %433 = vst.msk [vmem:[#allocation2 + $0x8] sm:$0xff] %vm431, %v428
      %434 = vrot.lane.b32.xlu0 %v421, 4
      %v435 = vpop.permute.xlu0 %434
      %436 = vrot.lane.b32.xlu0 %v422, 4
      %v437 = vpop.permute.xlu0 %436
      %vm440 = vcmask 97312
      %441 = vst.msk [vmem:[#allocation2 + $0x10] sm:$0xff] %vm440, %v435
      %442 = vst.msk [vmem:[#allocation2 + $0x18] sm:$0xff] %vm440, %v437
      %443 = vrot.lane.b32.xlu0 %v421, 3
      %v444 = vpop.permute.xlu0 %443
      %445 = vrot.lane.b32.xlu0 %v422, 3
      %v446 = vpop.permute.xlu0 %445
      %vm449 = vcmask 89112
      %450 = vst.msk [vmem:[#allocation2 + $0x20] sm:$0xff] %vm449, %v444
      %451 = vst.msk [vmem:[#allocation2 + $0x28] sm:$0xff] %vm449, %v446
      %vm452 = vcmask 39968
      %453 = vst.msk [vmem:[#allocation2] sm:$0xff] %vm452, 0.0
      %454 = vst.msk [vmem:[#allocation2 + $0x8] sm:$0xff] %vm452, 0.0
      %vm455 = vcmask 97368
      %456 = vst.msk [vmem:[#allocation2 + $0x20] sm:$0xff] %vm455, 0.0
      %457 = vst.msk [vmem:[#allocation2 + $0x28] sm:$0xff] %vm455, 0.0
      %v458 = vld [vmem:[#allocation2] sm:$0xff]
      %v459 = vld [vmem:[#allocation2 + $0x8] sm:$0xff]
      %v460 = vld [vmem:[#allocation2 + $0x10] sm:$0xff]
      %v461 = vld [vmem:[#allocation2 + $0x18] sm:$0xff]
      %v462 = vld [vmem:[#allocation2 + $0x20] sm:$0xff]
      %v463 = vld [vmem:[#allocation2 + $0x28] sm:$0xff]
      %v464 = vld [vmem:[%s3] sm:$0xff]
      %v465 = vld [vmem:[%s3 + $0x8] sm:$0xff]
      %v466 = vld [vmem:[%s4] sm:$0xff]
      %v467 = vld [vmem:[%s4 + $0x8] sm:$0xff]
      %469 = vset.pattern.permute.xlu0 0
      %470 = vperm.xlu0 %469, %v466
      %v471 = vpop.permute.xlu0 %470
      %474 = vset.pattern.permute.xlu0 0
      %475 = vperm.xlu0 %474, %v467
      %v476 = vpop.permute.xlu0 %475
      %484 = vrot.lane.b32.xlu0 %v458, 124
      %v485 = vpop.permute.xlu0 %484
      %486 = vrot.lane.b32.xlu0 %v459, 124
      %v487 = vpop.permute.xlu0 %486
      %488 = vrot.lane.b32.xlu0 %v460, 124
      %v489 = vpop.permute.xlu0 %488
      %490 = vrot.lane.b32.xlu0 %v461, 124
      %v491 = vpop.permute.xlu0 %490
      %492 = vrot.lane.b32.xlu0 %v462, 124
      %v493 = vpop.permute.xlu0 %492
      %494 = vrot.lane.b32.xlu0 %v463, 124
      %v495 = vpop.permute.xlu0 %494
      %vm502 = vcmask 392192
      %v504 = vsel %vm502, %v464, 0
      %v507 = vsel %vm502, %v465, 0
      %509 = vmatprep.subr.mxu0 0.0
      %510 = vmatpush1.msra.mxu0 %v485
      %511 = vmatprep.subr.mxu0 0.0
      %512 = vmatpush1.msra.mxu0 %v487
      %513 = vmatprep.subr.mxu0 0.0
      %514 = vmatpush1.msra.mxu0 %v489
      %515 = vmatprep.subr.mxu0 0.0
      %516 = vmatpush1.msra.mxu0 %v491
      %517 = vmatprep.subr.mxu0 0.0
      %518 = vmatpush1.msra.mxu0 %v493
      %519 = vmatprep.subr.mxu0 0.0
      %520 = vmatpush1.msra.mxu0 %v495
      %521 = vmatprep.subr.mxu0 0.0
      %522 = vmatpush1.msra.mxu0 0.0
      %523 = vmatprep.subr.mxu0 0.0
      %524 = vmatpush1.msra.mxu0 0.0
      %525 = vmatprep.subr.mxu0 0.0
      %526 = vmatpush1.msra.mxu0 0.0
      %527 = vmatprep.subr.mxu0 0.0
      %528 = vmatpush1.msra.mxu0 0.0
      %529 = vmatprep.subr.mxu0 0.0
      %530 = vmatpush1.msra.mxu0 0.0
      %531 = vmatprep.subr.mxu0 0.0
      %532 = vmatpush1.msra.mxu0 0.0
      %533 = vmatprep.subr.mxu0 0.0
      %534 = vmatpush1.msra.mxu0 0.0
      %535 = vmatprep.subr.mxu0 0.0
      %536 = vmatpush1.msra.mxu0 0.0
      %537 = vmatprep.subr.mxu0 0.0
      %538 = vmatpush1.msra.mxu0 0.0
      %539 = vmatprep.subr.mxu0 0.0
      %540 = vmatpush1.msra.mxu0 0.0
      %541 = vmatprep.subr.mxu0 0.0
      %542 = vmatpush1.msra.mxu0 0.0
      %543 = vmatprep.subr.mxu0 0.0
      %544 = vmatpush1.msra.mxu0 0.0
      %545 = vmatprep.subr.mxu0 0.0
      %546 = vmatpush1.msra.mxu0 0.0
      %547 = vmatprep.subr.mxu0 0.0
      %548 = vmatpush1.msra.mxu0 0.0
      %549 = vmatprep.subr.mxu0 0.0
      %550 = vmatpush1.msra.mxu0 0.0
      %551 = vmatprep.subr.mxu0 0.0
      %552 = vmatpush1.msra.mxu0 0.0
      %553 = vmatprep.subr.mxu0 0.0
      %554 = vmatpush1.msra.mxu0 0.0
      %555 = vmatprep.subr.mxu0 0.0
      %556 = vmatpush1.msra.mxu0 0.0
      %557 = vmatprep.subr.mxu0 0.0
      %558 = vmatpush1.msra.mxu0 0.0
      %559 = vmatprep.subr.mxu0 0.0
      %560 = vmatpush1.msra.mxu0 0.0
      %561 = vmatprep.subr.mxu0 0.0
      %562 = vmatpush1.msra.mxu0 0.0
      %563 = vmatprep.subr.mxu0 0.0
      %564 = vmatpush1.msra.mxu0 0.0
      %565 = vmatprep.subr.mxu0 0.0
      %566 = vmatpush1.msra.mxu0 0.0
      %567 = vmatprep.subr.mxu0 0.0
      %568 = vmatpush1.msra.mxu0 0.0
      %569 = vmatprep.subr.mxu0 0.0
      %570 = vmatpush1.msra.mxu0 0.0
      %571 = vmatprep.subr.mxu0 0.0
      %572 = vmatpush1.msra.mxu0 0.0
      %573 = vmatprep.mubr.f32.mxu0 0.0
      %574 = vmatmul.mubr.f32.gmra.mrb[0].mxu0 %v504
      %v575 = vpop.f32.mrb[0].mxu0
      %v576 = vadd.f32 %v471, %v575
      %v577 = vpop.f32.mrb[0].mxu0
      %578 = vmatprep.mubr.f32.mxu0 0.0
      %579 = vmatmul.mubr.f32.gmra.mrb[0].mxu0 %v507
      %v580 = vpop.f32.mrb[0].mxu0
      %v581 = vadd.f32 %v476, %v580
      %v582 = vpop.f32.mrb[0].mxu0
      %583 = vdwg.mxu0
      %v584 = vadd.f32 %v411, %v576
      %v585 = vadd.f32 %v412, %v581
      %vm586 = vcmp.ge.f32.partialorder %v584, 0.0
      %vm587 = vcmp.ge.f32.partialorder %v585, 0.0
      %v588 = vrot.slane %v400, 1
      %s589 = vtos %v588
      %v590 = vstv %s589
      %v592 = vmul.f32 %v584, %v590
      %v593 = vmul.f32 %v585, %v590
      %v594 = vsel %vm586, %v584, %v592
      %v595 = vsel %vm587, %v585, %v593
      %598 = vrot.lane.b32.xlu0 %v594, 6
      %v599 = vpop.permute.xlu0 %598
      %600 = vrot.lane.b32.xlu0 %v595, 6
      %v601 = vpop.permute.xlu0 %600
      %vm604 = vcmask 113712
      %605 = vst.msk [vmem:[#allocation2] sm:$0xff] %vm604, %v599
      %606 = vst.msk [vmem:[#allocation2 + $0x8] sm:$0xff] %vm604, %v601
      %607 = vrot.lane.b32.xlu0 %v594, 4
      %v608 = vpop.permute.xlu0 %607
      %609 = vrot.lane.b32.xlu0 %v595, 4
      %v610 = vpop.permute.xlu0 %609
      %613 = vst.msk [vmem:[#allocation2 + $0x10] sm:$0xff] %vm440, %v608
      %614 = vst.msk [vmem:[#allocation2 + $0x18] sm:$0xff] %vm440, %v610
      %615 = vrot.lane.b32.xlu0 %v594, 2
      %v616 = vpop.permute.xlu0 %615
      %617 = vrot.lane.b32.xlu0 %v595, 2
      %v618 = vpop.permute.xlu0 %617
      %vm621 = vcmask 80912
      %622 = vst.msk [vmem:[#allocation2 + $0x20] sm:$0xff] %vm621, %v616
      %623 = vst.msk [vmem:[#allocation2 + $0x28] sm:$0xff] %vm621, %v618
      %vm624 = vcmask 48160
      %625 = vst.msk [vmem:[#allocation2] sm:$0xff] %vm624, 0.0
      %626 = vst.msk [vmem:[#allocation2 + $0x8] sm:$0xff] %vm624, 0.0
      %vm627 = vcmask 97360
      %628 = vst.msk [vmem:[#allocation2 + $0x20] sm:$0xff] %vm627, 0.0
      %629 = vst.msk [vmem:[#allocation2 + $0x28] sm:$0xff] %vm627, 0.0
      %v630 = vld [vmem:[#allocation2] sm:$0xff]
      %v631 = vld [vmem:[#allocation2 + $0x8] sm:$0xff]
      %v632 = vld [vmem:[#allocation2 + $0x10] sm:$0xff]
      %v633 = vld [vmem:[#allocation2 + $0x18] sm:$0xff]
      %v634 = vld [vmem:[#allocation2 + $0x20] sm:$0xff]
      %v635 = vld [vmem:[#allocation2 + $0x28] sm:$0xff]
      %v636 = vld [vmem:[%s5] sm:$0xff]
      %v637 = vld [vmem:[%s5 + $0x8] sm:$0xff]
      %v638 = vld [vmem:[%s6] sm:$0xff]
      %v639 = vld [vmem:[%s6 + $0x8] sm:$0xff]
      %641 = vset.pattern.permute.xlu0 0
      %642 = vperm.xlu0 %641, %v638
      %v643 = vpop.permute.xlu0 %642
      %646 = vset.pattern.permute.xlu0 0
      %647 = vperm.xlu0 %646, %v639
      %v648 = vpop.permute.xlu0 %647
      %656 = vrot.lane.b32.xlu0 %v630, 124
      %v657 = vpop.permute.xlu0 %656
      %658 = vrot.lane.b32.xlu0 %v631, 124
      %v659 = vpop.permute.xlu0 %658
      %660 = vrot.lane.b32.xlu0 %v632, 124
      %v661 = vpop.permute.xlu0 %660
      %662 = vrot.lane.b32.xlu0 %v633, 124
      %v663 = vpop.permute.xlu0 %662
      %664 = vrot.lane.b32.xlu0 %v634, 124
      %v665 = vpop.permute.xlu0 %664
      %666 = vrot.lane.b32.xlu0 %v635, 124
      %v667 = vpop.permute.xlu0 %666
      %v675 = vsel %vm502, %v636, 0
      %v678 = vsel %vm502, %v637, 0
      %680 = vmatprep.subr.mxu0 0.0
      %681 = vmatpush1.msra.mxu0 %v657
      %682 = vmatprep.subr.mxu0 0.0
      %683 = vmatpush1.msra.mxu0 %v659
      %684 = vmatprep.subr.mxu0 0.0
      %685 = vmatpush1.msra.mxu0 %v661
      %686 = vmatprep.subr.mxu0 0.0
      %687 = vmatpush1.msra.mxu0 %v663
      %688 = vmatprep.subr.mxu0 0.0
      %689 = vmatpush1.msra.mxu0 %v665
      %690 = vmatprep.subr.mxu0 0.0
      %691 = vmatpush1.msra.mxu0 %v667
      %692 = vmatprep.subr.mxu0 0.0
      %693 = vmatpush1.msra.mxu0 0.0
      %694 = vmatprep.subr.mxu0 0.0
      %695 = vmatpush1.msra.mxu0 0.0
      %696 = vmatprep.subr.mxu0 0.0
      %697 = vmatpush1.msra.mxu0 0.0
      %698 = vmatprep.subr.mxu0 0.0
      %699 = vmatpush1.msra.mxu0 0.0
      %700 = vmatprep.subr.mxu0 0.0
      %701 = vmatpush1.msra.mxu0 0.0
      %702 = vmatprep.subr.mxu0 0.0
      %703 = vmatpush1.msra.mxu0 0.0
      %704 = vmatprep.subr.mxu0 0.0
      %705 = vmatpush1.msra.mxu0 0.0
      %706 = vmatprep.subr.mxu0 0.0
      %707 = vmatpush1.msra.mxu0 0.0
      %708 = vmatprep.subr.mxu0 0.0
      %709 = vmatpush1.msra.mxu0 0.0
      %710 = vmatprep.subr.mxu0 0.0
      %711 = vmatpush1.msra.mxu0 0.0
      %712 = vmatprep.subr.mxu0 0.0
      %713 = vmatpush1.msra.mxu0 0.0
      %714 = vmatprep.subr.mxu0 0.0
      %715 = vmatpush1.msra.mxu0 0.0
      %716 = vmatprep.subr.mxu0 0.0
      %717 = vmatpush1.msra.mxu0 0.0
      %718 = vmatprep.subr.mxu0 0.0
      %719 = vmatpush1.msra.mxu0 0.0
      %720 = vmatprep.subr.mxu0 0.0
      %721 = vmatpush1.msra.mxu0 0.0
      %722 = vmatprep.subr.mxu0 0.0
      %723 = vmatpush1.msra.mxu0 0.0
      %724 = vmatprep.subr.mxu0 0.0
      %725 = vmatpush1.msra.mxu0 0.0
      %726 = vmatprep.subr.mxu0 0.0
      %727 = vmatpush1.msra.mxu0 0.0
      %728 = vmatprep.subr.mxu0 0.0
      %729 = vmatpush1.msra.mxu0 0.0
      %730 = vmatprep.subr.mxu0 0.0
      %731 = vmatpush1.msra.mxu0 0.0
      %732 = vmatprep.subr.mxu0 0.0
      %733 = vmatpush1.msra.mxu0 0.0
      %734 = vmatprep.subr.mxu0 0.0
      %735 = vmatpush1.msra.mxu0 0.0
      %736 = vmatprep.subr.mxu0 0.0
      %737 = vmatpush1.msra.mxu0 0.0
      %738 = vmatprep.subr.mxu0 0.0
      %739 = vmatpush1.msra.mxu0 0.0
      %740 = vmatprep.subr.mxu0 0.0
      %741 = vmatpush1.msra.mxu0 0.0
      %742 = vmatprep.subr.mxu0 0.0
      %743 = vmatpush1.msra.mxu0 0.0
      %744 = vmatprep.mubr.f32.mxu0 0.0
      %745 = vmatmul.mubr.f32.gmra.mrb[0].mxu0 %v675
      %v746 = vpop.f32.mrb[0].mxu0
      %v747 = vadd.f32 %v643, %v746
      %v748 = vpop.f32.mrb[0].mxu0
      %749 = vmatprep.mubr.f32.mxu0 0.0
      %750 = vmatmul.mubr.f32.gmra.mrb[0].mxu0 %v678
      %v751 = vpop.f32.mrb[0].mxu0
      %v752 = vadd.f32 %v648, %v751
      %v753 = vpop.f32.mrb[0].mxu0
      %754 = vdwg.mxu0
      %v755 = vadd.f32 %v584, %v747
      %v756 = vadd.f32 %v585, %v752
      %vm757 = vcmp.ge.f32.partialorder %v755, 0.0
      %vm758 = vcmp.ge.f32.partialorder %v756, 0.0
      %v759 = vrot.slane %v400, 2
      %s760 = vtos %v759
      %v761 = vstv %s760
      %v763 = vmul.f32 %v755, %v761
      %v764 = vmul.f32 %v756, %v761
      %v765 = vsel %vm757, %v755, %v763
      %v766 = vsel %vm758, %v756, %v764
      %769 = vrot.lane.b32.xlu0 %v765, 8
      %v770 = vpop.permute.xlu0 %769
      %771 = vrot.lane.b32.xlu0 %v766, 8
      %v772 = vpop.permute.xlu0 %771
      %vm775 = vcmask 130112
      %776 = vst.msk [vmem:[#allocation2] sm:$0xff] %vm775, %v770
      %777 = vst.msk [vmem:[#allocation2 + $0x8] sm:$0xff] %vm775, %v772
      %778 = vrot.lane.b32.xlu0 %v765, 4
      %v779 = vpop.permute.xlu0 %778
      %780 = vrot.lane.b32.xlu0 %v766, 4
      %v781 = vpop.permute.xlu0 %780
      %784 = vst.msk [vmem:[#allocation2 + $0x10] sm:$0xff] %vm440, %v779
      %785 = vst.msk [vmem:[#allocation2 + $0x18] sm:$0xff] %vm440, %v781
      %vm786 = vcmask 64512
      %787 = vst.msk [vmem:[#allocation2 + $0x20] sm:$0xff] %vm786, %v765
      %788 = vst.msk [vmem:[#allocation2 + $0x28] sm:$0xff] %vm786, %v766
      %vm789 = vcmask 64544
      %790 = vst.msk [vmem:[#allocation2] sm:$0xff] %vm789, 0.0
      %791 = vst.msk [vmem:[#allocation2 + $0x8] sm:$0xff] %vm789, 0.0
      %vm792 = vcmask 97344
      %793 = vst.msk [vmem:[#allocation2 + $0x20] sm:$0xff] %vm792, 0.0
      %794 = vst.msk [vmem:[#allocation2 + $0x28] sm:$0xff] %vm792, 0.0
      %v795 = vld [vmem:[#allocation2] sm:$0xff]
      %v796 = vld [vmem:[#allocation2 + $0x8] sm:$0xff]
      %v797 = vld [vmem:[#allocation2 + $0x10] sm:$0xff]
      %v798 = vld [vmem:[#allocation2 + $0x18] sm:$0xff]
      %v799 = vld [vmem:[#allocation2 + $0x20] sm:$0xff]
      %v800 = vld [vmem:[#allocation2 + $0x28] sm:$0xff]
      %v801 = vld [vmem:[%s7] sm:$0xff]
      %v802 = vld [vmem:[%s7 + $0x8] sm:$0xff]
      %v803 = vld [vmem:[%s8] sm:$0xff]
      %v804 = vld [vmem:[%s8 + $0x8] sm:$0xff]
      %806 = vset.pattern.permute.xlu0 0
      %807 = vperm.xlu0 %806, %v803
      %v808 = vpop.permute.xlu0 %807
      %811 = vset.pattern.permute.xlu0 0
      %812 = vperm.xlu0 %811, %v804
      %v813 = vpop.permute.xlu0 %812
      %821 = vrot.lane.b32.xlu0 %v795, 124
      %v822 = vpop.permute.xlu0 %821
      %823 = vrot.lane.b32.xlu0 %v796, 124
      %v824 = vpop.permute.xlu0 %823
      %825 = vrot.lane.b32.xlu0 %v797, 124
      %v826 = vpop.permute.xlu0 %825
      %827 = vrot.lane.b32.xlu0 %v798, 124
      %v828 = vpop.permute.xlu0 %827
      %829 = vrot.lane.b32.xlu0 %v799, 124
      %v830 = vpop.permute.xlu0 %829
      %831 = vrot.lane.b32.xlu0 %v800, 124
      %v832 = vpop.permute.xlu0 %831
      %v840 = vsel %vm502, %v801, 0
      %v843 = vsel %vm502, %v802, 0
      %845 = vmatprep.subr.mxu0 0.0
      %846 = vmatpush1.msra.mxu0 %v822
      %847 = vmatprep.subr.mxu0 0.0
      %848 = vmatpush1.msra.mxu0 %v824
      %849 = vmatprep.subr.mxu0 0.0
      %850 = vmatpush1.msra.mxu0 %v826
      %851 = vmatprep.subr.mxu0 0.0
      %852 = vmatpush1.msra.mxu0 %v828
      %853 = vmatprep.subr.mxu0 0.0
      %854 = vmatpush1.msra.mxu0 %v830
      %855 = vmatprep.subr.mxu0 0.0
      %856 = vmatpush1.msra.mxu0 %v832
      %857 = vmatprep.subr.mxu0 0.0
      %858 = vmatpush1.msra.mxu0 0.0
      %859 = vmatprep.subr.mxu0 0.0
      %860 = vmatpush1.msra.mxu0 0.0
      %861 = vmatprep.subr.mxu0 0.0
      %862 = vmatpush1.msra.mxu0 0.0
      %863 = vmatprep.subr.mxu0 0.0
      %864 = vmatpush1.msra.mxu0 0.0
      %865 = vmatprep.subr.mxu0 0.0
      %866 = vmatpush1.msra.mxu0 0.0
      %867 = vmatprep.subr.mxu0 0.0
      %868 = vmatpush1.msra.mxu0 0.0
      %869 = vmatprep.subr.mxu0 0.0
      %870 = vmatpush1.msra.mxu0 0.0
      %871 = vmatprep.subr.mxu0 0.0
      %872 = vmatpush1.msra.mxu0 0.0
      %873 = vmatprep.subr.mxu0 0.0
      %874 = vmatpush1.msra.mxu0 0.0
      %875 = vmatprep.subr.mxu0 0.0
      %876 = vmatpush1.msra.mxu0 0.0
      %877 = vmatprep.subr.mxu0 0.0
      %878 = vmatpush1.msra.mxu0 0.0
      %879 = vmatprep.subr.mxu0 0.0
      %880 = vmatpush1.msra.mxu0 0.0
      %881 = vmatprep.subr.mxu0 0.0
      %882 = vmatpush1.msra.mxu0 0.0
      %883 = vmatprep.subr.mxu0 0.0
      %884 = vmatpush1.msra.mxu0 0.0
      %885 = vmatprep.subr.mxu0 0.0
      %886 = vmatpush1.msra.mxu0 0.0
      %887 = vmatprep.subr.mxu0 0.0
      %888 = vmatpush1.msra.mxu0 0.0
      %889 = vmatprep.subr.mxu0 0.0
      %890 = vmatpush1.msra.mxu0 0.0
      %891 = vmatprep.subr.mxu0 0.0
      %892 = vmatpush1.msra.mxu0 0.0
      %893 = vmatprep.subr.mxu0 0.0
      %894 = vmatpush1.msra.mxu0 0.0
      %895 = vmatprep.subr.mxu0 0.0
      %896 = vmatpush1.msra.mxu0 0.0
      %897 = vmatprep.subr.mxu0 0.0
      %898 = vmatpush1.msra.mxu0 0.0
      %899 = vmatprep.subr.mxu0 0.0
      %900 = vmatpush1.msra.mxu0 0.0
      %901 = vmatprep.subr.mxu0 0.0
      %902 = vmatpush1.msra.mxu0 0.0
      %903 = vmatprep.subr.mxu0 0.0
      %904 = vmatpush1.msra.mxu0 0.0
      %905 = vmatprep.subr.mxu0 0.0
      %906 = vmatpush1.msra.mxu0 0.0
      %907 = vmatprep.subr.mxu0 0.0
      %908 = vmatpush1.msra.mxu0 0.0
      %909 = vmatprep.mubr.f32.mxu0 0.0
      %910 = vmatmul.mubr.f32.gmra.mrb[0].mxu0 %v840
      %v911 = vpop.f32.mrb[0].mxu0
      %v912 = vadd.f32 %v808, %v911
      %v913 = vpop.f32.mrb[0].mxu0
      %914 = vmatprep.mubr.f32.mxu0 0.0
      %915 = vmatmul.mubr.f32.gmra.mrb[0].mxu0 %v843
      %v916 = vpop.f32.mrb[0].mxu0
      %v917 = vadd.f32 %v813, %v916
      %v918 = vpop.f32.mrb[0].mxu0
      %919 = vdwg.mxu0
      %v920 = vadd.f32 %v755, %v912
      %v921 = vadd.f32 %v756, %v917
      %922 = vst.msk [vmem:[%s399] sm:$0xff] %vm786, %v920
      %923 = vst.msk [vmem:[%s399 + $0x8] sm:$0xff] %vm786, %v921
      %p924 = scmp.lt.s32.totalorder %s21, 1
      %s925 = scalar_select %p924, %s21, 1
      %s926 = smul.addr %s925, 2
      %s927 = smul.addr %s926, 8
      %s928 = scalar_lea.vmem %s10, %s927
      // Predicated region
      $region61: #{_forward_impl.10} parent=59 // pred_check
        %p929 = pneg %p264
      $region62: #{_forward_impl.10} parent=59 // pred_check_branch
        %931 = sbr.rel (%p929) target = $region64
      $region63: #{_forward_impl.10} parent=59 // pred_region
        _
      $region64: #{_forward_impl.10} parent=59 // pred_fallthru
        _
    $region60: #{_forward_impl.10} parent=5 // pred_fallthru
      _
    %p932 = scmp.le.s32.totalorder 2, %s16
    // Predicated region
    $region65: #{_forward_impl.10} parent=5 // pred_check
      %p933 = pneg %p932
    $region66: #{_forward_impl.10} parent=5 // pred_check_branch
      %935 = sbr.rel (%p933) target = $region68
    $region67: #{_forward_impl.10} parent=5 // pred_region
      %s936 = ssub.s32 %s16, 2
      // Predicated region
      $region69: #{_forward_impl.10} parent=67 // pred_check
        %p937 = pneg %p270
      $region70: #{_forward_impl.10} parent=67 // pred_check_branch
        %939 = sbr.rel (%p937) target = $region72
      $region71: #{_forward_impl.10} parent=67 // pred_region
        %p940 = scmp.lt.s32.totalorder %s22, 1
        %s941 = scalar_select %p940, %s22, 1
        %s942 = smul.addr %s941, 2
        %s943 = smul.addr %s942, 8
        %s944 = scalar_lea.vmem %s10, %s943
      $region72: #{_forward_impl.10} parent=67 // pred_fallthru
        _
    $region68: #{_forward_impl.10} parent=5 // pred_fallthru
      _
  $region6: #{_forward_impl.10} parent=0 // loop_footer
    %s20 = sadd.s32 1, %s16
  $region7: #{_forward_impl.10} parent=0 // loop_footer_branch
    %15 = sbr.rel target = $region3
  $region8: #{_forward_impl.10} parent=0 // loop_exit
    _

// kernel: _forward_impl.11
$region0: #{_forward_impl.11}
  #allocation0 [shape = 'u32[]', space=smem, size = 0x4, offset = 0x4, fixed_abs, tag = 'smem constant byte address 0x4 - core index']
  #allocation1 [shape = 'u32[144,128]{1,0:T(1,128)}', space=vmem, size = 0x12000, scoped, tag = 'internal scratch']
  %s0 = inlined_call_operand.vmem [shape: f32[8,2,24], index: 0, kind: input, shape index: {}]
  %s1 = inlined_call_operand.vmem [shape: f32[8,2,24], index: 1, kind: input, shape index: {}]
  %s2 = inlined_call_operand.vmem [shape: f32[8,24], index: 2, kind: input, shape index: {}]
  %s3 = inlined_call_operand.vmem [shape: f32[8,24], index: 3, kind: input, shape index: {}]
  %s4 = inlined_call_operand.vmem [shape: f32[1,8], index: 4, kind: input, shape index: {}]
  %s5 = inlined_call_operand.vmem [shape: f32[1,8], index: 5, kind: input, shape index: {}]
  %s6 = inlined_call_operand.vmem [shape: f32[8,2,16], index: 6, kind: output, shape index: {}]
  %s7 = sld [smem:[#allocation0]]
  $region41: #{_forward_impl.11} parent=0
    _
  %s9 = ssub.s32 1, %s7
  %s10 = scalar_select 0, %s9, %s7
  // Predicated region
  $region2: #{_forward_impl.11} parent=0 // pred_check
    _
  $region3: #{_forward_impl.11} parent=0 // pred_check_branch
    %12 = sbr.rel (0) target = $region5
  $region4: #{_forward_impl.11} parent=0 // pred_region
    _
  $region5: #{_forward_impl.11} parent=0 // pred_fallthru
    _
  // Predicated region
  $region6: #{_forward_impl.11} parent=0 // pred_check
    _
  $region7: #{_forward_impl.11} parent=0 // pred_check_branch
    %14 = sbr.rel (0) target = $region9
  $region8: #{_forward_impl.11} parent=0 // pred_region
    _
  $region9: #{_forward_impl.11} parent=0 // pred_fallthru
    _
  // Predicated region
  $region10: #{_forward_impl.11} parent=0 // pred_check
    _
  $region11: #{_forward_impl.11} parent=0 // pred_check_branch
    %16 = sbr.rel (0) target = $region13
  $region12: #{_forward_impl.11} parent=0 // pred_region
    _
  $region13: #{_forward_impl.11} parent=0 // pred_fallthru
    _
  // Predicated region
  $region14: #{_forward_impl.11} parent=0 // pred_check
    _
  $region15: #{_forward_impl.11} parent=0 // pred_check_branch
    %18 = sbr.rel (0) target = $region17
  $region16: #{_forward_impl.11} parent=0 // pred_region
    _
  $region17: #{_forward_impl.11} parent=0 // pred_fallthru
    _
  // Predicated region
  $region18: #{_forward_impl.11} parent=0 // pred_check
    _
  $region19: #{_forward_impl.11} parent=0 // pred_check_branch
    %20 = sbr.rel (0) target = $region21
  $region20: #{_forward_impl.11} parent=0 // pred_region
    _
  $region21: #{_forward_impl.11} parent=0 // pred_fallthru
    _
  // Predicated region
  $region22: #{_forward_impl.11} parent=0 // pred_check
    _
  $region23: #{_forward_impl.11} parent=0 // pred_check_branch
    %22 = sbr.rel (0) target = $region25
  $region24: #{_forward_impl.11} parent=0 // pred_region
    _
  $region25: #{_forward_impl.11} parent=0 // pred_fallthru
    _
  %v23 = vld [vmem:[%s2] sm:$0xff]
  %v24 = vld [vmem:[%s3] sm:$0xff]
  %v25 = vld [vmem:[%s4] sm:$0x1]
  %v26 = vld [vmem:[%s5] sm:$0x1]
  loop: start=0, step=1, limit=8
  $region26: #{_forward_impl.11} parent=0 // loop_pre_header
    _
  $region27: #{_forward_impl.11} parent=0 // loop_header
    %s28 = sphi 0, %s32
    %p29 = scmp.ge.s32.totalorder %s28, 8
    %v33 = vphi 0.0, %v227
    %v34 = vphi 0.0, %v262
  $region28: #{_forward_impl.11} parent=0 // loop_header_branch
    %31 = sbr.rel (%p29) target = $region32
  $region29: #{_forward_impl.11} parent=0 // loop_body
    %s35 = ssub.s32 7, %s28
    %s36 = smul.u32 %s28, 2
    %s37 = scalar_lea.vmem %s0, %s36
    %v38 = vld [vmem:[%s37] sm:$0x3]
    %s39 = smul.u32 %s35, 2
    %s40 = scalar_lea.vmem %s1, %s39
    %v41 = vld [vmem:[%s40] sm:$0x3]
    %43 = vrot.lane.b32.xlu0 %v33, 120
    %v44 = vpop.permute.xlu0 %43
    %vm45 = vcmask 64512
    %v46 = vsel %vm45, %v44, 0
    %48 = vmatprep.subr.mxu0 0.0
    %49 = vmatpush1.msra.mxu0 %v23
    %50 = vmatprep.subr.mxu0 0.0
    %51 = vmatpush1.msra.mxu0 0.0
    %52 = vmatprep.subr.mxu0 0.0
    %53 = vmatpush1.msra.mxu0 0.0
    %54 = vmatprep.subr.mxu0 0.0
    %55 = vmatpush1.msra.mxu0 0.0
    %56 = vmatprep.subr.mxu0 0.0
    %57 = vmatpush1.msra.mxu0 0.0
    %58 = vmatprep.subr.mxu0 0.0
    %59 = vmatpush1.msra.mxu0 0.0
    %60 = vmatprep.subr.mxu0 0.0
    %61 = vmatpush1.msra.mxu0 0.0
    %62 = vmatprep.subr.mxu0 0.0
    %63 = vmatpush1.msra.mxu0 0.0
    %64 = vmatprep.subr.mxu0 0.0
    %65 = vmatpush1.msra.mxu0 0.0
    %66 = vmatprep.subr.mxu0 0.0
    %67 = vmatpush1.msra.mxu0 0.0
    %68 = vmatprep.subr.mxu0 0.0
    %69 = vmatpush1.msra.mxu0 0.0
    %70 = vmatprep.subr.mxu0 0.0
    %71 = vmatpush1.msra.mxu0 0.0
    %72 = vmatprep.subr.mxu0 0.0
    %73 = vmatpush1.msra.mxu0 0.0
    %74 = vmatprep.subr.mxu0 0.0
    %75 = vmatpush1.msra.mxu0 0.0
    %76 = vmatprep.subr.mxu0 0.0
    %77 = vmatpush1.msra.mxu0 0.0
    %78 = vmatprep.subr.mxu0 0.0
    %79 = vmatpush1.msra.mxu0 0.0
    %80 = vmatprep.subr.mxu0 0.0
    %81 = vmatpush1.msra.mxu0 0.0
    %82 = vmatprep.subr.mxu0 0.0
    %83 = vmatpush1.msra.mxu0 0.0
    %84 = vmatprep.subr.mxu0 0.0
    %85 = vmatpush1.msra.mxu0 0.0
    %86 = vmatprep.subr.mxu0 0.0
    %87 = vmatpush1.msra.mxu0 0.0
    %88 = vmatprep.subr.mxu0 0.0
    %89 = vmatpush1.msra.mxu0 0.0
    %90 = vmatprep.subr.mxu0 0.0
    %91 = vmatpush1.msra.mxu0 0.0
    %92 = vmatprep.subr.mxu0 0.0
    %93 = vmatpush1.msra.mxu0 0.0
    %94 = vmatprep.subr.mxu0 0.0
    %95 = vmatpush1.msra.mxu0 0.0
    %96 = vmatprep.subr.mxu0 0.0
    %97 = vmatpush1.msra.mxu0 0.0
    %98 = vmatprep.subr.mxu0 0.0
    %99 = vmatpush1.msra.mxu0 0.0
    %100 = vmatprep.subr.mxu0 0.0
    %101 = vmatpush1.msra.mxu0 0.0
    %102 = vmatprep.subr.mxu0 0.0
    %103 = vmatpush1.msra.mxu0 0.0
    %104 = vmatprep.subr.mxu0 0.0
    %105 = vmatpush1.msra.mxu0 0.0
    %106 = vmatprep.subr.mxu0 0.0
    %107 = vmatpush1.msra.mxu0 0.0
    %108 = vmatprep.subr.mxu0 0.0
    %109 = vmatpush1.msra.mxu0 0.0
    %110 = vmatprep.subr.mxu0 0.0
    %111 = vmatpush1.msra.mxu0 0.0
    %112 = vmatprep.mubr.f32.mxu0 0.0
    %113 = vmatmul.mubr.f32.gmra.mrb[0].mxu0 %v46
    %v114 = vpop.f32.mrb[0].mxu0
    %v115 = vadd.f32 0.0, %v114
    %v116 = vpop.f32.mrb[0].mxu0
    %117 = vdwg.mxu0
    %119 = vrot.lane.b32.xlu0 %v34, 120
    %v120 = vpop.permute.xlu0 %119
    %v121 = vsel %vm45, %v120, 0
    %123 = vmatprep.subr.mxu0 0.0
    %124 = vmatpush1.msra.mxu0 %v24
    %125 = vmatprep.subr.mxu0 0.0
    %126 = vmatpush1.msra.mxu0 0.0
    %127 = vmatprep.subr.mxu0 0.0
    %128 = vmatpush1.msra.mxu0 0.0
    %129 = vmatprep.subr.mxu0 0.0
    %130 = vmatpush1.msra.mxu0 0.0
    %131 = vmatprep.subr.mxu0 0.0
    %132 = vmatpush1.msra.mxu0 0.0
    %133 = vmatprep.subr.mxu0 0.0
    %134 = vmatpush1.msra.mxu0 0.0
    %135 = vmatprep.subr.mxu0 0.0
    %136 = vmatpush1.msra.mxu0 0.0
    %137 = vmatprep.subr.mxu0 0.0
    %138 = vmatpush1.msra.mxu0 0.0
    %139 = vmatprep.subr.mxu0 0.0
    %140 = vmatpush1.msra.mxu0 0.0
    %141 = vmatprep.subr.mxu0 0.0
    %142 = vmatpush1.msra.mxu0 0.0
    %143 = vmatprep.subr.mxu0 0.0
    %144 = vmatpush1.msra.mxu0 0.0
    %145 = vmatprep.subr.mxu0 0.0
    %146 = vmatpush1.msra.mxu0 0.0
    %147 = vmatprep.subr.mxu0 0.0
    %148 = vmatpush1.msra.mxu0 0.0
    %149 = vmatprep.subr.mxu0 0.0
    %150 = vmatpush1.msra.mxu0 0.0
    %151 = vmatprep.subr.mxu0 0.0
    %152 = vmatpush1.msra.mxu0 0.0
    %153 = vmatprep.subr.mxu0 0.0
    %154 = vmatpush1.msra.mxu0 0.0
    %155 = vmatprep.subr.mxu0 0.0
    %156 = vmatpush1.msra.mxu0 0.0
    %157 = vmatprep.subr.mxu0 0.0
    %158 = vmatpush1.msra.mxu0 0.0
    %159 = vmatprep.subr.mxu0 0.0
    %160 = vmatpush1.msra.mxu0 0.0
    %161 = vmatprep.subr.mxu0 0.0
    %162 = vmatpush1.msra.mxu0 0.0
    %163 = vmatprep.subr.mxu0 0.0
    %164 = vmatpush1.msra.mxu0 0.0
    %165 = vmatprep.subr.mxu0 0.0
    %166 = vmatpush1.msra.mxu0 0.0
    %167 = vmatprep.subr.mxu0 0.0
    %168 = vmatpush1.msra.mxu0 0.0
    %169 = vmatprep.subr.mxu0 0.0
    %170 = vmatpush1.msra.mxu0 0.0
    %171 = vmatprep.subr.mxu0 0.0
    %172 = vmatpush1.msra.mxu0 0.0
    %173 = vmatprep.subr.mxu0 0.0
    %174 = vmatpush1.msra.mxu0 0.0
    %175 = vmatprep.subr.mxu0 0.0
    %176 = vmatpush1.msra.mxu0 0.0
    %177 = vmatprep.subr.mxu0 0.0
    %178 = vmatpush1.msra.mxu0 0.0
    %179 = vmatprep.subr.mxu0 0.0
    %180 = vmatpush1.msra.mxu0 0.0
    %181 = vmatprep.subr.mxu0 0.0
    %182 = vmatpush1.msra.mxu0 0.0
    %183 = vmatprep.subr.mxu0 0.0
    %184 = vmatpush1.msra.mxu0 0.0
    %185 = vmatprep.subr.mxu0 0.0
    %186 = vmatpush1.msra.mxu0 0.0
    %187 = vmatprep.mubr.f32.mxu0 0.0
    %188 = vmatmul.mubr.f32.gmra.mrb[0].mxu0 %v121
    %v189 = vpop.f32.mrb[0].mxu0
    %v190 = vadd.f32 0.0, %v189
    %v191 = vpop.f32.mrb[0].mxu0
    %192 = vdwg.mxu0
    %v193 = vadd.f32 %v38, %v115
    %v194 = vxor.u32 %v193, 2147483648
    %v195 = vmul.f32 %v194, 1.442695
    %v196 = vpow.pop %v195
    %v197 = vadd.f32 %v196, 1.0
    %v198 = vrcp.pop %v197
    %v199 = vmul.f32 1.0, %v198
    %v201 = vlaneseq
    %v202 = vshrl.u32 %v201, 7
    %v203 = vsub.s32 0, %v202
    %v204 = vrot.slane %v25, %v203
    %205 = vrot.lane.b32.xlu0 %v204, 16
    %v206 = vpop.permute.xlu0 %205
    %v208 = vadd.f32 %v115, %v206
    %210 = vrot.lane.b32.xlu0 %v208, 112
    %v211 = vpop.permute.xlu0 %210
    %v213 = vmul.f32 %v199, %v211
    %215 = vrot.lane.b32.xlu0 %v213, 16
    %v216 = vpop.permute.xlu0 %215
    %v218 = vadd.f32 %v38, %v216
    %v219 = vtanh.pop %v218
    %v220 = vsub.f32 1.0, %v199
    %222 = vrot.lane.b32.xlu0 %v219, 120
    %v223 = vpop.permute.xlu0 %222
    %v225 = vmul.f32 %v220, %v223
    %v226 = vmul.f32 %v199, %v33
    %v227 = vadd.f32 %v225, %v226
    %v228 = vadd.f32 %v41, %v190
    %v229 = vxor.u32 %v228, 2147483648
    %v230 = vmul.f32 %v229, 1.442695
    %v231 = vpow.pop %v230
    %v232 = vadd.f32 %v231, 1.0
    %v233 = vrcp.pop %v232
    %v234 = vmul.f32 1.0, %v233
    %v236 = vlaneseq
    %v237 = vshrl.u32 %v236, 7
    %v238 = vsub.s32 0, %v237
    %v239 = vrot.slane %v26, %v238
    %240 = vrot.lane.b32.xlu0 %v239, 16
    %v241 = vpop.permute.xlu0 %240
    %v243 = vadd.f32 %v190, %v241
    %245 = vrot.lane.b32.xlu0 %v243, 112
    %v246 = vpop.permute.xlu0 %245
    %v248 = vmul.f32 %v234, %v246
    %250 = vrot.lane.b32.xlu0 %v248, 16
    %v251 = vpop.permute.xlu0 %250
    %v253 = vadd.f32 %v41, %v251
    %v254 = vtanh.pop %v253
    %v255 = vsub.f32 1.0, %v234
    %257 = vrot.lane.b32.xlu0 %v254, 120
    %v258 = vpop.permute.xlu0 %257
    %v260 = vmul.f32 %v255, %v258
    %v261 = vmul.f32 %v234, %v34
    %v262 = vadd.f32 %v260, %v261
    %264 = vrot.lane.b32.xlu0 %v227, 120
    %v265 = vpop.permute.xlu0 %264
    %s267 = scalar_lea.vmem %s6, %s36
    %vm268 = vcmask 58368
    %269 = vst.msk [vmem:[%s267] sm:$0x3] %vm268, %v265
    %s270 = scalar_lea.vmem %s6, %s39
    %vm271 = vcmask 123968
    %272 = vst.msk [vmem:[%s270] sm:$0x3] %vm271, %v262
  $region30: #{_forward_impl.11} parent=0 // loop_footer
    %s32 = sadd.s32 1, %s28
  $region31: #{_forward_impl.11} parent=0 // loop_footer_branch
    %27 = sbr.rel target = $region27
  $region32: #{_forward_impl.11} parent=0 // loop_exit
    _
  // Predicated region
  $region33: #{_forward_impl.11} parent=0 // pred_check
    _
  $region34: #{_forward_impl.11} parent=0 // pred_check_branch
    %274 = sbr.rel (0) target = $region36
  $region35: #{_forward_impl.11} parent=0 // pred_region
    _
  $region36: #{_forward_impl.11} parent=0 // pred_fallthru
    _
  // Predicated region
  $region37: #{_forward_impl.11} parent=0 // pred_check
    _
  $region38: #{_forward_impl.11} parent=0 // pred_check_branch
    %276 = sbr.rel (0) target = $region40
  $region39: #{_forward_impl.11} parent=0 // pred_region
    _
  $region40: #{_forward_impl.11} parent=0 // pred_fallthru
    _

// kernel: _forward_impl.13
$region0: #{_forward_impl.13}
  #allocation0 [shape = 'u32[]', space=smem, size = 0x4, offset = 0x4, fixed_abs, tag = 'smem constant byte address 0x4 - core index']
  #allocation1 [shape = 'u32[144,128]{1,0:T(1,128)}', space=vmem, size = 0x12000, scoped, tag = 'internal scratch']
  #allocation2 [shape = 'f32[48,16]{1,0:T(8,128)}', space=vmem, size = 0x6000, scoped, tag = 'scratch operand']
  %s0 = inlined_call_operand.vmem [shape: f32[2,16,8], index: 0, kind: input, shape index: {}]
  %s1 = inlined_call_operand.vmem [shape: f32[16,48], index: 1, kind: input, shape index: {}]
  %s2 = inlined_call_operand.vmem [shape: f32[16,1], index: 2, kind: input, shape index: {}]
  %s3 = inlined_call_operand.vmem [shape: f32[16,48], index: 3, kind: input, shape index: {}]
  %s4 = inlined_call_operand.vmem [shape: f32[16,1], index: 4, kind: input, shape index: {}]
  %s5 = inlined_call_operand.vmem [shape: f32[16,48], index: 5, kind: input, shape index: {}]
  %s6 = inlined_call_operand.vmem [shape: f32[16,1], index: 6, kind: input, shape index: {}]
  %s7 = inlined_call_operand.vmem [shape: f32[3,1], index: 7, kind: input, shape index: {}]
  %s8 = inlined_call_operand.vmem [shape: f32[2,16,8], index: 8, kind: output, shape index: {}]
  %s9 = sld [smem:[#allocation0]]
  $region65: #{_forward_impl.13} parent=0
    _
  %s11 = ssub.s32 1, %s9
  %s12 = scalar_select 0, %s11, %s9
  loop: start=0, step=1, limit=4
  $region2: #{_forward_impl.13} parent=0 // loop_pre_header
    _
  $region3: #{_forward_impl.13} parent=0 // loop_header
    %s14 = sphi 0, %s18
    %p15 = scmp.ge.s32.totalorder %s14, 4
    %s24 = sphi 0, %s26
    %s27 = sphi 0, %s24
    %s28 = sphi 0, %s27
    %s44 = sphi 0, %s28
    %s48 = sphi 0, %s48
    %s50 = sphi 0, %s48
    %s51 = sphi 0, %s50
    %s65 = sphi 0, %s51
    %s69 = sphi 0, %s69
    %s71 = sphi 0, %s69
    %s72 = sphi 0, %s71
    %s86 = sphi 0, %s72
    %s90 = sphi 0, %s90
    %s92 = sphi 0, %s90
    %s93 = sphi 0, %s92
    %s107 = sphi 0, %s93
    %s111 = sphi 0, %s111
    %s113 = sphi 0, %s111
    %s114 = sphi 0, %s113
    %s128 = sphi 0, %s114
    %s132 = sphi 0, %s132
    %s134 = sphi 0, %s132
    %s135 = sphi 0, %s134
    %s149 = sphi 0, %s135
    %s153 = sphi 0, %s153
    %s155 = sphi 0, %s153
    %s156 = sphi 0, %s155
    %s170 = sphi 0, %s156
    %s174 = sphi 0, %s174
    %s176 = sphi 0, %s174
    %s177 = sphi 0, %s176
    %s191 = sphi 0, %s177
    %s197 = sphi 0, %s199
    %s200 = sphi 0, %s197
    %s201 = sphi 0, %s200
    %s217 = sphi 0, %s201
  $region4: #{_forward_impl.13} parent=0 // loop_header_branch
    %17 = sbr.rel (%p15) target = $region8
  $region5: #{_forward_impl.13} parent=0 // loop_body
    %s19 = ssub.s32 %s14, 1
    %s20 = ssub.s32 %s14, 2
    %s21 = sadd.s32 %s14, 1
    %s22 = ssub.s32 %s14, %s21
    %p23 = scmp.eq.s32.totalorder %s22, 0
    %s25 = sadd.s32 %s24, 1
    %s26 = scalar_select %p23, %s24, %s25
    %p29 = pneg %p23
    %p30 = scmp.eq.s32.totalorder %s14, 1
    %p31 = por %p29, %p30
    %p32 = scmp.ne.s32.totalorder %s24, %s27
    %p33 = scmp.eq.s32.totalorder %s14, 0
    %p34 = por %p32, %p33
    %p35 = scmp.ne.s32.totalorder %s24, %s27
    %p36 = scmp.eq.s32.totalorder %s19, 1
    %p37 = por %p35, %p36
    %p38 = scmp.ne.s32.totalorder %s27, %s28
    %p39 = scmp.eq.s32.totalorder %s19, 0
    %p40 = por %p38, %p39
    %p41 = scmp.ne.s32.totalorder %s27, %s28
    %p42 = scmp.eq.s32.totalorder %s20, 1
    %p43 = por %p41, %p42
    %p45 = scmp.ne.s32.totalorder %s28, %s44
    %p46 = scmp.eq.s32.totalorder %s20, 0
    %p47 = por %p45, %p46
    %s49 = sadd.s32 %s48, 1
    %p52 = scmp.eq.s32.totalorder %s14, 1
    %p53 = scmp.ne.s32.totalorder %s48, %s50
    %p54 = scmp.eq.s32.totalorder %s14, 0
    %p55 = por %p53, %p54
    %p56 = scmp.ne.s32.totalorder %s48, %s50
    %p57 = scmp.eq.s32.totalorder %s19, 1
    %p58 = por %p56, %p57
    %p59 = scmp.ne.s32.totalorder %s50, %s51
    %p60 = scmp.eq.s32.totalorder %s19, 0
    %p61 = por %p59, %p60
    %p62 = scmp.ne.s32.totalorder %s50, %s51
    %p63 = scmp.eq.s32.totalorder %s20, 1
    %p64 = por %p62, %p63
    %p66 = scmp.ne.s32.totalorder %s51, %s65
    %p67 = scmp.eq.s32.totalorder %s20, 0
    %p68 = por %p66, %p67
    %s70 = sadd.s32 %s69, 1
    %p73 = scmp.eq.s32.totalorder %s14, 1
    %p74 = scmp.ne.s32.totalorder %s69, %s71
    %p75 = scmp.eq.s32.totalorder %s14, 0
    %p76 = por %p74, %p75
    %p77 = scmp.ne.s32.totalorder %s69, %s71
    %p78 = scmp.eq.s32.totalorder %s19, 1
    %p79 = por %p77, %p78
    %p80 = scmp.ne.s32.totalorder %s71, %s72
    %p81 = scmp.eq.s32.totalorder %s19, 0
    %p82 = por %p80, %p81
    %p83 = scmp.ne.s32.totalorder %s71, %s72
    %p84 = scmp.eq.s32.totalorder %s20, 1
    %p85 = por %p83, %p84
    %p87 = scmp.ne.s32.totalorder %s72, %s86
    %p88 = scmp.eq.s32.totalorder %s20, 0
    %p89 = por %p87, %p88
    %s91 = sadd.s32 %s90, 1
    %p94 = scmp.eq.s32.totalorder %s14, 1
    %p95 = scmp.ne.s32.totalorder %s90, %s92
    %p96 = scmp.eq.s32.totalorder %s14, 0
    %p97 = por %p95, %p96
    %p98 = scmp.ne.s32.totalorder %s90, %s92
    %p99 = scmp.eq.s32.totalorder %s19, 1
    %p100 = por %p98, %p99
    %p101 = scmp.ne.s32.totalorder %s92, %s93
    %p102 = scmp.eq.s32.totalorder %s19, 0
    %p103 = por %p101, %p102
    %p104 = scmp.ne.s32.totalorder %s92, %s93
    %p105 = scmp.eq.s32.totalorder %s20, 1
    %p106 = por %p104, %p105
    %p108 = scmp.ne.s32.totalorder %s93, %s107
    %p109 = scmp.eq.s32.totalorder %s20, 0
    %p110 = por %p108, %p109
    %s112 = sadd.s32 %s111, 1
    %p115 = scmp.eq.s32.totalorder %s14, 1
    %p116 = scmp.ne.s32.totalorder %s111, %s113
    %p117 = scmp.eq.s32.totalorder %s14, 0
    %p118 = por %p116, %p117
    %p119 = scmp.ne.s32.totalorder %s111, %s113
    %p120 = scmp.eq.s32.totalorder %s19, 1
    %p121 = por %p119, %p120
    %p122 = scmp.ne.s32.totalorder %s113, %s114
    %p123 = scmp.eq.s32.totalorder %s19, 0
    %p124 = por %p122, %p123
    %p125 = scmp.ne.s32.totalorder %s113, %s114
    %p126 = scmp.eq.s32.totalorder %s20, 1
    %p127 = por %p125, %p126
    %p129 = scmp.ne.s32.totalorder %s114, %s128
    %p130 = scmp.eq.s32.totalorder %s20, 0
    %p131 = por %p129, %p130
    %s133 = sadd.s32 %s132, 1
    %p136 = scmp.eq.s32.totalorder %s14, 1
    %p137 = scmp.ne.s32.totalorder %s132, %s134
    %p138 = scmp.eq.s32.totalorder %s14, 0
    %p139 = por %p137, %p138
    %p140 = scmp.ne.s32.totalorder %s132, %s134
    %p141 = scmp.eq.s32.totalorder %s19, 1
    %p142 = por %p140, %p141
    %p143 = scmp.ne.s32.totalorder %s134, %s135
    %p144 = scmp.eq.s32.totalorder %s19, 0
    %p145 = por %p143, %p144
    %p146 = scmp.ne.s32.totalorder %s134, %s135
    %p147 = scmp.eq.s32.totalorder %s20, 1
    %p148 = por %p146, %p147
    %p150 = scmp.ne.s32.totalorder %s135, %s149
    %p151 = scmp.eq.s32.totalorder %s20, 0
    %p152 = por %p150, %p151
    %s154 = sadd.s32 %s153, 1
    %p157 = scmp.eq.s32.totalorder %s14, 1
    %p158 = scmp.ne.s32.totalorder %s153, %s155
    %p159 = scmp.eq.s32.totalorder %s14, 0
    %p160 = por %p158, %p159
    %p161 = scmp.ne.s32.totalorder %s153, %s155
    %p162 = scmp.eq.s32.totalorder %s19, 1
    %p163 = por %p161, %p162
    %p164 = scmp.ne.s32.totalorder %s155, %s156
    %p165 = scmp.eq.s32.totalorder %s19, 0
    %p166 = por %p164, %p165
    %p167 = scmp.ne.s32.totalorder %s155, %s156
    %p168 = scmp.eq.s32.totalorder %s20, 1
    %p169 = por %p167, %p168
    %p171 = scmp.ne.s32.totalorder %s156, %s170
    %p172 = scmp.eq.s32.totalorder %s20, 0
    %p173 = por %p171, %p172
    %s175 = sadd.s32 %s174, 1
    %p178 = scmp.eq.s32.totalorder %s14, 1
    %p179 = scmp.ne.s32.totalorder %s174, %s176
    %p180 = scmp.eq.s32.totalorder %s14, 0
    %p181 = por %p179, %p180
    %p182 = scmp.ne.s32.totalorder %s174, %s176
    %p183 = scmp.eq.s32.totalorder %s19, 1
    %p184 = por %p182, %p183
    %p185 = scmp.ne.s32.totalorder %s176, %s177
    %p186 = scmp.eq.s32.totalorder %s19, 0
    %p187 = por %p185, %p186
    %p188 = scmp.ne.s32.totalorder %s176, %s177
    %p189 = scmp.eq.s32.totalorder %s20, 1
    %p190 = por %p188, %p189
    %p192 = scmp.ne.s32.totalorder %s177, %s191
    %p193 = scmp.eq.s32.totalorder %s20, 0
    %p194 = por %p192, %p193
    %s195 = ssub.s32 %s14, %s21
    %p196 = scmp.eq.s32.totalorder %s195, 0
    %s198 = sadd.s32 %s197, 1
    %s199 = scalar_select %p196, %s197, %s198
    %p202 = pneg %p196
    %p203 = scmp.eq.s32.totalorder %s14, 1
    %p204 = por %p202, %p203
    %p205 = scmp.ne.s32.totalorder %s197, %s200
    %p206 = scmp.eq.s32.totalorder %s14, 0
    %p207 = por %p205, %p206
    %p208 = scmp.ne.s32.totalorder %s197, %s200
    %p209 = scmp.eq.s32.totalorder %s19, 1
    %p210 = por %p208, %p209
    %p211 = scmp.ne.s32.totalorder %s200, %s201
    %p212 = scmp.eq.s32.totalorder %s19, 0
    %p213 = por %p211, %p212
    %p214 = scmp.ne.s32.totalorder %s200, %s201
    %p215 = scmp.eq.s32.totalorder %s20, 1
    %p216 = por %p214, %p215
    %p218 = scmp.ne.s32.totalorder %s201, %s217
    %p219 = scmp.eq.s32.totalorder %s20, 0
    %p220 = por %p218, %p219
    %p221 = scmp.le.s32.totalorder 1, %s14
    %p222 = scmp.lt.s32.totalorder %s14, 3
    %p223 = pnand %p221, %p222
    %p224 = pneg %p223
    // Predicated region
    $region9: #{_forward_impl.13} parent=5 // pred_check
      _
    $region10: #{_forward_impl.13} parent=5 // pred_check_branch
      %226 = sbr.rel (%p223) target = $region12
    $region11: #{_forward_impl.13} parent=5 // pred_region
      %s227 = ssub.s32 %s14, 1
      // Predicated region
      $region13: #{_forward_impl.13} parent=11 // pred_check
        %p228 = pneg %p61
      $region14: #{_forward_impl.13} parent=11 // pred_check_branch
        %230 = sbr.rel (%p228) target = $region16
      $region15: #{_forward_impl.13} parent=11 // pred_region
        _
      $region16: #{_forward_impl.13} parent=11 // pred_fallthru
        _
      // Predicated region
      $region17: #{_forward_impl.13} parent=11 // pred_check
        %p231 = pneg %p82
      $region18: #{_forward_impl.13} parent=11 // pred_check_branch
        %233 = sbr.rel (%p231) target = $region20
      $region19: #{_forward_impl.13} parent=11 // pred_region
        _
      $region20: #{_forward_impl.13} parent=11 // pred_fallthru
        _
      // Predicated region
      $region21: #{_forward_impl.13} parent=11 // pred_check
        %p234 = pneg %p103
      $region22: #{_forward_impl.13} parent=11 // pred_check_branch
        %236 = sbr.rel (%p234) target = $region24
      $region23: #{_forward_impl.13} parent=11 // pred_region
        _
      $region24: #{_forward_impl.13} parent=11 // pred_fallthru
        _
      // Predicated region
      $region25: #{_forward_impl.13} parent=11 // pred_check
        %p237 = pneg %p124
      $region26: #{_forward_impl.13} parent=11 // pred_check_branch
        %239 = sbr.rel (%p237) target = $region28
      $region27: #{_forward_impl.13} parent=11 // pred_region
        _
      $region28: #{_forward_impl.13} parent=11 // pred_fallthru
        _
      // Predicated region
      $region29: #{_forward_impl.13} parent=11 // pred_check
        %p240 = pneg %p145
      $region30: #{_forward_impl.13} parent=11 // pred_check_branch
        %242 = sbr.rel (%p240) target = $region32
      $region31: #{_forward_impl.13} parent=11 // pred_region
        _
      $region32: #{_forward_impl.13} parent=11 // pred_fallthru
        _
      // Predicated region
      $region33: #{_forward_impl.13} parent=11 // pred_check
        %p243 = pneg %p166
      $region34: #{_forward_impl.13} parent=11 // pred_check_branch
        %245 = sbr.rel (%p243) target = $region36
      $region35: #{_forward_impl.13} parent=11 // pred_region
        _
      $region36: #{_forward_impl.13} parent=11 // pred_fallthru
        _
      // Predicated region
      $region37: #{_forward_impl.13} parent=11 // pred_check
        %p246 = pneg %p187
      $region38: #{_forward_impl.13} parent=11 // pred_check_branch
        %248 = sbr.rel (%p246) target = $region40
      $region39: #{_forward_impl.13} parent=11 // pred_region
        _
      $region40: #{_forward_impl.13} parent=11 // pred_fallthru
        _
    $region12: #{_forward_impl.13} parent=5 // pred_fallthru
      _
    %p249 = scmp.lt.s32.totalorder %s14, 2
    // Predicated region
    $region41: #{_forward_impl.13} parent=5 // pred_check
      %p250 = pneg %p249
    $region42: #{_forward_impl.13} parent=5 // pred_check_branch
      %252 = sbr.rel (%p250) target = $region44
    $region43: #{_forward_impl.13} parent=5 // pred_region
      // Predicated region
      $region45: #{_forward_impl.13} parent=43 // pred_check
        %p253 = pneg %p34
      $region46: #{_forward_impl.13} parent=43 // pred_check_branch
        %255 = sbr.rel (%p253) target = $region48
      $region47: #{_forward_impl.13} parent=43 // pred_region
        %p256 = scmp.lt.s32.totalorder %s14, 1
        %s257 = scalar_select %p256, %s14, 1
        %s258 = smul.addr %s257, 2
        %s259 = smul.addr %s258, 8
        %s260 = scalar_lea.vmem %s0, %s259
      $region48: #{_forward_impl.13} parent=43 // pred_fallthru
        _
    $region44: #{_forward_impl.13} parent=5 // pred_fallthru
      _
    %p261 = scmp.le.s32.totalorder 1, %s14
    %p262 = scmp.lt.s32.totalorder %s14, 3
    %p263 = pnand %p261, %p262
    %p264 = pneg %p263
    // Predicated region
    $region49: #{_forward_impl.13} parent=5 // pred_check
      _
    $region50: #{_forward_impl.13} parent=5 // pred_check_branch
      %266 = sbr.rel (%p263) target = $region52
    $region51: #{_forward_impl.13} parent=5 // pred_region
      %s267 = ssub.s32 %s14, 1
      %p268 = scmp.lt.s32.totalorder %s19, 1
      %s269 = scalar_select %p268, %s19, 1
      %s270 = smul.addr %s269, 2
      %s271 = smul.addr %s270, 8
      %s272 = scalar_lea.vmem %s0, %s271
      %p273 = pneg %p40
      %p274 = pneg %p37
      %p275 = pneg %p61
      %p276 = pneg %p58
      %p277 = pneg %p82
      %p278 = pneg %p79
      %p279 = pneg %p103
      %p280 = pneg %p100
      %p281 = pneg %p124
      %p282 = pneg %p121
      %p283 = pneg %p145
      %p284 = pneg %p142
      %p285 = pneg %p166
      %p286 = pneg %p163
      %p287 = pneg %p187
      %p288 = pneg %p184
      %p289 = pneg %p213
      %p290 = pneg %p210
      %p291 = scmp.lt.s32.totalorder %s19, 1
      %s292 = scalar_select %p291, %s19, 1
      %s293 = smul.addr %s292, 2
      %s294 = smul.addr %s293, 8
      %s295 = scalar_lea.vmem %s8, %s294
      %p296 = scmp.lt.s32.totalorder %s19, 1
      %s297 = scalar_select %p296, %s19, 1
      %s298 = smul.addr %s297, 2
      %s299 = smul.addr %s298, 8
      %s300 = scalar_lea.vmem %s0, %s299
      %p301 = scmp.lt.s32.totalorder %s19, 1
      %s302 = scalar_select %p301, %s19, 1
      %s303 = smul.addr %s302, 2
      %s304 = smul.addr %s303, 8
      %s305 = scalar_lea.vmem %s8, %s304
      %v306 = vld [vmem:[%s7] sm:$0x7]
      %v307 = vld [vmem:[%s300] sm:$0xff]
      %v308 = vld [vmem:[%s300 + $0x8] sm:$0xff]
      %vm309 = vcmp.ge.f32.partialorder %v307, 0.0
      %vm310 = vcmp.ge.f32.partialorder %v308, 0.0
      %s312 = vtos %v306
      %v313 = vstv %s312
      %v315 = vmul.f32 %v307, %v313
      %v316 = vmul.f32 %v308, %v313
      %v317 = vsel %vm309, %v307, %v315
      %v318 = vsel %vm310, %v308, %v316
      %321 = vrot.lane.b32.xlu0 %v317, 5
      %v322 = vpop.permute.xlu0 %321
      %323 = vrot.lane.b32.xlu0 %v318, 5
      %v324 = vpop.permute.xlu0 %323
      %vm327 = vcmask 105512
      %328 = vst.msk [vmem:[#allocation2] sm:$0xff] %vm327, %v322
      %329 = vst.msk [vmem:[#allocation2 + $0x8] sm:$0xff] %vm327, %v324
      %330 = vrot.lane.b32.xlu0 %v317, 4
      %v331 = vpop.permute.xlu0 %330
      %332 = vrot.lane.b32.xlu0 %v318, 4
      %v333 = vpop.permute.xlu0 %332
      %vm336 = vcmask 97312
      %337 = vst.msk [vmem:[#allocation2 + $0x10] sm:$0xff] %vm336, %v331
      %338 = vst.msk [vmem:[#allocation2 + $0x18] sm:$0xff] %vm336, %v333
      %339 = vrot.lane.b32.xlu0 %v317, 3
      %v340 = vpop.permute.xlu0 %339
      %341 = vrot.lane.b32.xlu0 %v318, 3
      %v342 = vpop.permute.xlu0 %341
      %vm345 = vcmask 89112
      %346 = vst.msk [vmem:[#allocation2 + $0x20] sm:$0xff] %vm345, %v340
      %347 = vst.msk [vmem:[#allocation2 + $0x28] sm:$0xff] %vm345, %v342
      %vm348 = vcmask 39968
      %349 = vst.msk [vmem:[#allocation2] sm:$0xff] %vm348, 0.0
      %350 = vst.msk [vmem:[#allocation2 + $0x8] sm:$0xff] %vm348, 0.0
      %vm351 = vcmask 97368
      %352 = vst.msk [vmem:[#allocation2 + $0x20] sm:$0xff] %vm351, 0.0
      %353 = vst.msk [vmem:[#allocation2 + $0x28] sm:$0xff] %vm351, 0.0
      %v354 = vld [vmem:[#allocation2] sm:$0xff]
      %v355 = vld [vmem:[#allocation2 + $0x8] sm:$0xff]
      %v356 = vld [vmem:[#allocation2 + $0x10] sm:$0xff]
      %v357 = vld [vmem:[#allocation2 + $0x18] sm:$0xff]
      %v358 = vld [vmem:[#allocation2 + $0x20] sm:$0xff]
      %v359 = vld [vmem:[#allocation2 + $0x28] sm:$0xff]
      %v360 = vld [vmem:[%s1] sm:$0xff]
      %v361 = vld [vmem:[%s1 + $0x8] sm:$0xff]
      %v362 = vld [vmem:[%s2] sm:$0xff]
      %v363 = vld [vmem:[%s2 + $0x8] sm:$0xff]
      %365 = vset.pattern.permute.xlu0 0
      %366 = vperm.xlu0 %365, %v362
      %v367 = vpop.permute.xlu0 %366
      %370 = vset.pattern.permute.xlu0 0
      %371 = vperm.xlu0 %370, %v363
      %v372 = vpop.permute.xlu0 %371
      %380 = vrot.lane.b32.xlu0 %v354, 124
      %v381 = vpop.permute.xlu0 %380
      %382 = vrot.lane.b32.xlu0 %v355, 124
      %v383 = vpop.permute.xlu0 %382
      %384 = vrot.lane.b32.xlu0 %v356, 124
      %v385 = vpop.permute.xlu0 %384
      %386 = vrot.lane.b32.xlu0 %v357, 124
      %v387 = vpop.permute.xlu0 %386
      %388 = vrot.lane.b32.xlu0 %v358, 124
      %v389 = vpop.permute.xlu0 %388
      %390 = vrot.lane.b32.xlu0 %v359, 124
      %v391 = vpop.permute.xlu0 %390
      %vm398 = vcmask 392192
      %v400 = vsel %vm398, %v360, 0
      %v403 = vsel %vm398, %v361, 0
      %405 = vmatprep.subr.mxu0 0.0
      %406 = vmatpush1.msra.mxu0 %v381
      %407 = vmatprep.subr.mxu0 0.0
      %408 = vmatpush1.msra.mxu0 %v383
      %409 = vmatprep.subr.mxu0 0.0
      %410 = vmatpush1.msra.mxu0 %v385
      %411 = vmatprep.subr.mxu0 0.0
      %412 = vmatpush1.msra.mxu0 %v387
      %413 = vmatprep.subr.mxu0 0.0
      %414 = vmatpush1.msra.mxu0 %v389
      %415 = vmatprep.subr.mxu0 0.0
      %416 = vmatpush1.msra.mxu0 %v391
      %417 = vmatprep.subr.mxu0 0.0
      %418 = vmatpush1.msra.mxu0 0.0
      %419 = vmatprep.subr.mxu0 0.0
      %420 = vmatpush1.msra.mxu0 0.0
      %421 = vmatprep.subr.mxu0 0.0
      %422 = vmatpush1.msra.mxu0 0.0
      %423 = vmatprep.subr.mxu0 0.0
      %424 = vmatpush1.msra.mxu0 0.0
      %425 = vmatprep.subr.mxu0 0.0
      %426 = vmatpush1.msra.mxu0 0.0
      %427 = vmatprep.subr.mxu0 0.0
      %428 = vmatpush1.msra.mxu0 0.0
      %429 = vmatprep.subr.mxu0 0.0
      %430 = vmatpush1.msra.mxu0 0.0
      %431 = vmatprep.subr.mxu0 0.0
      %432 = vmatpush1.msra.mxu0 0.0
      %433 = vmatprep.subr.mxu0 0.0
      %434 = vmatpush1.msra.mxu0 0.0
      %435 = vmatprep.subr.mxu0 0.0
      %436 = vmatpush1.msra.mxu0 0.0
      %437 = vmatprep.subr.mxu0 0.0
      %438 = vmatpush1.msra.mxu0 0.0
      %439 = vmatprep.subr.mxu0 0.0
      %440 = vmatpush1.msra.mxu0 0.0
      %441 = vmatprep.subr.mxu0 0.0
      %442 = vmatpush1.msra.mxu0 0.0
      %443 = vmatprep.subr.mxu0 0.0
      %444 = vmatpush1.msra.mxu0 0.0
      %445 = vmatprep.subr.mxu0 0.0
      %446 = vmatpush1.msra.mxu0 0.0
      %447 = vmatprep.subr.mxu0 0.0
      %448 = vmatpush1.msra.mxu0 0.0
      %449 = vmatprep.subr.mxu0 0.0
      %450 = vmatpush1.msra.mxu0 0.0
      %451 = vmatprep.subr.mxu0 0.0
      %452 = vmatpush1.msra.mxu0 0.0
      %453 = vmatprep.subr.mxu0 0.0
      %454 = vmatpush1.msra.mxu0 0.0
      %455 = vmatprep.subr.mxu0 0.0
      %456 = vmatpush1.msra.mxu0 0.0
      %457 = vmatprep.subr.mxu0 0.0
      %458 = vmatpush1.msra.mxu0 0.0
      %459 = vmatprep.subr.mxu0 0.0
      %460 = vmatpush1.msra.mxu0 0.0
      %461 = vmatprep.subr.mxu0 0.0
      %462 = vmatpush1.msra.mxu0 0.0
      %463 = vmatprep.subr.mxu0 0.0
      %464 = vmatpush1.msra.mxu0 0.0
      %465 = vmatprep.subr.mxu0 0.0
      %466 = vmatpush1.msra.mxu0 0.0
      %467 = vmatprep.subr.mxu0 0.0
      %468 = vmatpush1.msra.mxu0 0.0
      %469 = vmatprep.mubr.f32.mxu0 0.0
      %470 = vmatmul.mubr.f32.gmra.mrb[0].mxu0 %v400
      %v471 = vpop.f32.mrb[0].mxu0
      %v472 = vadd.f32 %v367, %v471
      %v473 = vpop.f32.mrb[0].mxu0
      %474 = vmatprep.mubr.f32.mxu0 0.0
      %475 = vmatmul.mubr.f32.gmra.mrb[0].mxu0 %v403
      %v476 = vpop.f32.mrb[0].mxu0
      %v477 = vadd.f32 %v372, %v476
      %v478 = vpop.f32.mrb[0].mxu0
      %479 = vdwg.mxu0
      %v480 = vadd.f32 %v307, %v472
      %v481 = vadd.f32 %v308, %v477
      %vm482 = vcmp.ge.f32.partialorder %v480, 0.0
      %vm483 = vcmp.ge.f32.partialorder %v481, 0.0
      %v484 = vrot.slane %v306, 1
      %s485 = vtos %v484
      %v486 = vstv %s485
      %v488 = vmul.f32 %v480, %v486
      %v489 = vmul.f32 %v481, %v486
      %v490 = vsel %vm482, %v480, %v488
      %v491 = vsel %vm483, %v481, %v489
      %494 = vrot.lane.b32.xlu0 %v490, 6
      %v495 = vpop.permute.xlu0 %494
      %496 = vrot.lane.b32.xlu0 %v491, 6
      %v497 = vpop.permute.xlu0 %496
      %vm500 = vcmask 113712
      %501 = vst.msk [vmem:[#allocation2] sm:$0xff] %vm500, %v495
      %502 = vst.msk [vmem:[#allocation2 + $0x8] sm:$0xff] %vm500, %v497
      %503 = vrot.lane.b32.xlu0 %v490, 4
      %v504 = vpop.permute.xlu0 %503
      %505 = vrot.lane.b32.xlu0 %v491, 4
      %v506 = vpop.permute.xlu0 %505
      %509 = vst.msk [vmem:[#allocation2 + $0x10] sm:$0xff] %vm336, %v504
      %510 = vst.msk [vmem:[#allocation2 + $0x18] sm:$0xff] %vm336, %v506
      %511 = vrot.lane.b32.xlu0 %v490, 2
      %v512 = vpop.permute.xlu0 %511
      %513 = vrot.lane.b32.xlu0 %v491, 2
      %v514 = vpop.permute.xlu0 %513
      %vm517 = vcmask 80912
      %518 = vst.msk [vmem:[#allocation2 + $0x20] sm:$0xff] %vm517, %v512
      %519 = vst.msk [vmem:[#allocation2 + $0x28] sm:$0xff] %vm517, %v514
      %vm520 = vcmask 48160
      %521 = vst.msk [vmem:[#allocation2] sm:$0xff] %vm520, 0.0
      %522 = vst.msk [vmem:[#allocation2 + $0x8] sm:$0xff] %vm520, 0.0
      %vm523 = vcmask 97360
      %524 = vst.msk [vmem:[#allocation2 + $0x20] sm:$0xff] %vm523, 0.0
      %525 = vst.msk [vmem:[#allocation2 + $0x28] sm:$0xff] %vm523, 0.0
      %v526 = vld [vmem:[#allocation2] sm:$0xff]
      %v527 = vld [vmem:[#allocation2 + $0x8] sm:$0xff]
      %v528 = vld [vmem:[#allocation2 + $0x10] sm:$0xff]
      %v529 = vld [vmem:[#allocation2 + $0x18] sm:$0xff]
      %v530 = vld [vmem:[#allocation2 + $0x20] sm:$0xff]
      %v531 = vld [vmem:[#allocation2 + $0x28] sm:$0xff]
      %v532 = vld [vmem:[%s3] sm:$0xff]
      %v533 = vld [vmem:[%s3 + $0x8] sm:$0xff]
      %v534 = vld [vmem:[%s4] sm:$0xff]
      %v535 = vld [vmem:[%s4 + $0x8] sm:$0xff]
      %537 = vset.pattern.permute.xlu0 0
      %538 = vperm.xlu0 %537, %v534
      %v539 = vpop.permute.xlu0 %538
      %542 = vset.pattern.permute.xlu0 0
      %543 = vperm.xlu0 %542, %v535
      %v544 = vpop.permute.xlu0 %543
      %552 = vrot.lane.b32.xlu0 %v526, 124
      %v553 = vpop.permute.xlu0 %552
      %554 = vrot.lane.b32.xlu0 %v527, 124
      %v555 = vpop.permute.xlu0 %554
      %556 = vrot.lane.b32.xlu0 %v528, 124
      %v557 = vpop.permute.xlu0 %556
      %558 = vrot.lane.b32.xlu0 %v529, 124
      %v559 = vpop.permute.xlu0 %558
      %560 = vrot.lane.b32.xlu0 %v530, 124
      %v561 = vpop.permute.xlu0 %560
      %562 = vrot.lane.b32.xlu0 %v531, 124
      %v563 = vpop.permute.xlu0 %562
      %v571 = vsel %vm398, %v532, 0
      %v574 = vsel %vm398, %v533, 0
      %576 = vmatprep.subr.mxu0 0.0
      %577 = vmatpush1.msra.mxu0 %v553
      %578 = vmatprep.subr.mxu0 0.0
      %579 = vmatpush1.msra.mxu0 %v555
      %580 = vmatprep.subr.mxu0 0.0
      %581 = vmatpush1.msra.mxu0 %v557
      %582 = vmatprep.subr.mxu0 0.0
      %583 = vmatpush1.msra.mxu0 %v559
      %584 = vmatprep.subr.mxu0 0.0
      %585 = vmatpush1.msra.mxu0 %v561
      %586 = vmatprep.subr.mxu0 0.0
      %587 = vmatpush1.msra.mxu0 %v563
      %588 = vmatprep.subr.mxu0 0.0
      %589 = vmatpush1.msra.mxu0 0.0
      %590 = vmatprep.subr.mxu0 0.0
      %591 = vmatpush1.msra.mxu0 0.0
      %592 = vmatprep.subr.mxu0 0.0
      %593 = vmatpush1.msra.mxu0 0.0
      %594 = vmatprep.subr.mxu0 0.0
      %595 = vmatpush1.msra.mxu0 0.0
      %596 = vmatprep.subr.mxu0 0.0
      %597 = vmatpush1.msra.mxu0 0.0
      %598 = vmatprep.subr.mxu0 0.0
      %599 = vmatpush1.msra.mxu0 0.0
      %600 = vmatprep.subr.mxu0 0.0
      %601 = vmatpush1.msra.mxu0 0.0
      %602 = vmatprep.subr.mxu0 0.0
      %603 = vmatpush1.msra.mxu0 0.0
      %604 = vmatprep.subr.mxu0 0.0
      %605 = vmatpush1.msra.mxu0 0.0
      %606 = vmatprep.subr.mxu0 0.0
      %607 = vmatpush1.msra.mxu0 0.0
      %608 = vmatprep.subr.mxu0 0.0
      %609 = vmatpush1.msra.mxu0 0.0
      %610 = vmatprep.subr.mxu0 0.0
      %611 = vmatpush1.msra.mxu0 0.0
      %612 = vmatprep.subr.mxu0 0.0
      %613 = vmatpush1.msra.mxu0 0.0
      %614 = vmatprep.subr.mxu0 0.0
      %615 = vmatpush1.msra.mxu0 0.0
      %616 = vmatprep.subr.mxu0 0.0
      %617 = vmatpush1.msra.mxu0 0.0
      %618 = vmatprep.subr.mxu0 0.0
      %619 = vmatpush1.msra.mxu0 0.0
      %620 = vmatprep.subr.mxu0 0.0
      %621 = vmatpush1.msra.mxu0 0.0
      %622 = vmatprep.subr.mxu0 0.0
      %623 = vmatpush1.msra.mxu0 0.0
      %624 = vmatprep.subr.mxu0 0.0
      %625 = vmatpush1.msra.mxu0 0.0
      %626 = vmatprep.subr.mxu0 0.0
      %627 = vmatpush1.msra.mxu0 0.0
      %628 = vmatprep.subr.mxu0 0.0
      %629 = vmatpush1.msra.mxu0 0.0
      %630 = vmatprep.subr.mxu0 0.0
      %631 = vmatpush1.msra.mxu0 0.0
      %632 = vmatprep.subr.mxu0 0.0
      %633 = vmatpush1.msra.mxu0 0.0
      %634 = vmatprep.subr.mxu0 0.0
      %635 = vmatpush1.msra.mxu0 0.0
      %636 = vmatprep.subr.mxu0 0.0
      %637 = vmatpush1.msra.mxu0 0.0
      %638 = vmatprep.subr.mxu0 0.0
      %639 = vmatpush1.msra.mxu0 0.0
      %640 = vmatprep.mubr.f32.mxu0 0.0
      %641 = vmatmul.mubr.f32.gmra.mrb[0].mxu0 %v571
      %v642 = vpop.f32.mrb[0].mxu0
      %v643 = vadd.f32 %v539, %v642
      %v644 = vpop.f32.mrb[0].mxu0
      %645 = vmatprep.mubr.f32.mxu0 0.0
      %646 = vmatmul.mubr.f32.gmra.mrb[0].mxu0 %v574
      %v647 = vpop.f32.mrb[0].mxu0
      %v648 = vadd.f32 %v544, %v647
      %v649 = vpop.f32.mrb[0].mxu0
      %650 = vdwg.mxu0
      %v651 = vadd.f32 %v480, %v643
      %v652 = vadd.f32 %v481, %v648
      %vm653 = vcmp.ge.f32.partialorder %v651, 0.0
      %vm654 = vcmp.ge.f32.partialorder %v652, 0.0
      %v655 = vrot.slane %v306, 2
      %s656 = vtos %v655
      %v657 = vstv %s656
      %v659 = vmul.f32 %v651, %v657
      %v660 = vmul.f32 %v652, %v657
      %v661 = vsel %vm653, %v651, %v659
      %v662 = vsel %vm654, %v652, %v660
      %665 = vrot.lane.b32.xlu0 %v661, 8
      %v666 = vpop.permute.xlu0 %665
      %667 = vrot.lane.b32.xlu0 %v662, 8
      %v668 = vpop.permute.xlu0 %667
      %vm671 = vcmask 130112
      %672 = vst.msk [vmem:[#allocation2] sm:$0xff] %vm671, %v666
      %673 = vst.msk [vmem:[#allocation2 + $0x8] sm:$0xff] %vm671, %v668
      %674 = vrot.lane.b32.xlu0 %v661, 4
      %v675 = vpop.permute.xlu0 %674
      %676 = vrot.lane.b32.xlu0 %v662, 4
      %v677 = vpop.permute.xlu0 %676
      %680 = vst.msk [vmem:[#allocation2 + $0x10] sm:$0xff] %vm336, %v675
      %681 = vst.msk [vmem:[#allocation2 + $0x18] sm:$0xff] %vm336, %v677
      %vm682 = vcmask 64512
      %683 = vst.msk [vmem:[#allocation2 + $0x20] sm:$0xff] %vm682, %v661
      %684 = vst.msk [vmem:[#allocation2 + $0x28] sm:$0xff] %vm682, %v662
      %vm685 = vcmask 64544
      %686 = vst.msk [vmem:[#allocation2] sm:$0xff] %vm685, 0.0
      %687 = vst.msk [vmem:[#allocation2 + $0x8] sm:$0xff] %vm685, 0.0
      %vm688 = vcmask 97344
      %689 = vst.msk [vmem:[#allocation2 + $0x20] sm:$0xff] %vm688, 0.0
      %690 = vst.msk [vmem:[#allocation2 + $0x28] sm:$0xff] %vm688, 0.0
      %v691 = vld [vmem:[#allocation2] sm:$0xff]
      %v692 = vld [vmem:[#allocation2 + $0x8] sm:$0xff]
      %v693 = vld [vmem:[#allocation2 + $0x10] sm:$0xff]
      %v694 = vld [vmem:[#allocation2 + $0x18] sm:$0xff]
      %v695 = vld [vmem:[#allocation2 + $0x20] sm:$0xff]
      %v696 = vld [vmem:[#allocation2 + $0x28] sm:$0xff]
      %v697 = vld [vmem:[%s5] sm:$0xff]
      %v698 = vld [vmem:[%s5 + $0x8] sm:$0xff]
      %v699 = vld [vmem:[%s6] sm:$0xff]
      %v700 = vld [vmem:[%s6 + $0x8] sm:$0xff]
      %702 = vset.pattern.permute.xlu0 0
      %703 = vperm.xlu0 %702, %v699
      %v704 = vpop.permute.xlu0 %703
      %707 = vset.pattern.permute.xlu0 0
      %708 = vperm.xlu0 %707, %v700
      %v709 = vpop.permute.xlu0 %708
      %717 = vrot.lane.b32.xlu0 %v691, 124
      %v718 = vpop.permute.xlu0 %717
      %719 = vrot.lane.b32.xlu0 %v692, 124
      %v720 = vpop.permute.xlu0 %719
      %721 = vrot.lane.b32.xlu0 %v693, 124
      %v722 = vpop.permute.xlu0 %721
      %723 = vrot.lane.b32.xlu0 %v694, 124
      %v724 = vpop.permute.xlu0 %723
      %725 = vrot.lane.b32.xlu0 %v695, 124
      %v726 = vpop.permute.xlu0 %725
      %727 = vrot.lane.b32.xlu0 %v696, 124
      %v728 = vpop.permute.xlu0 %727
      %v736 = vsel %vm398, %v697, 0
      %v739 = vsel %vm398, %v698, 0
      %741 = vmatprep.subr.mxu0 0.0
      %742 = vmatpush1.msra.mxu0 %v718
      %743 = vmatprep.subr.mxu0 0.0
      %744 = vmatpush1.msra.mxu0 %v720
      %745 = vmatprep.subr.mxu0 0.0
      %746 = vmatpush1.msra.mxu0 %v722
      %747 = vmatprep.subr.mxu0 0.0
      %748 = vmatpush1.msra.mxu0 %v724
      %749 = vmatprep.subr.mxu0 0.0
      %750 = vmatpush1.msra.mxu0 %v726
      %751 = vmatprep.subr.mxu0 0.0
      %752 = vmatpush1.msra.mxu0 %v728
      %753 = vmatprep.subr.mxu0 0.0
      %754 = vmatpush1.msra.mxu0 0.0
      %755 = vmatprep.subr.mxu0 0.0
      %756 = vmatpush1.msra.mxu0 0.0
      %757 = vmatprep.subr.mxu0 0.0
      %758 = vmatpush1.msra.mxu0 0.0
      %759 = vmatprep.subr.mxu0 0.0
      %760 = vmatpush1.msra.mxu0 0.0
      %761 = vmatprep.subr.mxu0 0.0
      %762 = vmatpush1.msra.mxu0 0.0
      %763 = vmatprep.subr.mxu0 0.0
      %764 = vmatpush1.msra.mxu0 0.0
      %765 = vmatprep.subr.mxu0 0.0
      %766 = vmatpush1.msra.mxu0 0.0
      %767 = vmatprep.subr.mxu0 0.0
      %768 = vmatpush1.msra.mxu0 0.0
      %769 = vmatprep.subr.mxu0 0.0
      %770 = vmatpush1.msra.mxu0 0.0
      %771 = vmatprep.subr.mxu0 0.0
      %772 = vmatpush1.msra.mxu0 0.0
      %773 = vmatprep.subr.mxu0 0.0
      %774 = vmatpush1.msra.mxu0 0.0
      %775 = vmatprep.subr.mxu0 0.0
      %776 = vmatpush1.msra.mxu0 0.0
      %777 = vmatprep.subr.mxu0 0.0
      %778 = vmatpush1.msra.mxu0 0.0
      %779 = vmatprep.subr.mxu0 0.0
      %780 = vmatpush1.msra.mxu0 0.0
      %781 = vmatprep.subr.mxu0 0.0
      %782 = vmatpush1.msra.mxu0 0.0
      %783 = vmatprep.subr.mxu0 0.0
      %784 = vmatpush1.msra.mxu0 0.0
      %785 = vmatprep.subr.mxu0 0.0
      %786 = vmatpush1.msra.mxu0 0.0
      %787 = vmatprep.subr.mxu0 0.0
      %788 = vmatpush1.msra.mxu0 0.0
      %789 = vmatprep.subr.mxu0 0.0
      %790 = vmatpush1.msra.mxu0 0.0
      %791 = vmatprep.subr.mxu0 0.0
      %792 = vmatpush1.msra.mxu0 0.0
      %793 = vmatprep.subr.mxu0 0.0
      %794 = vmatpush1.msra.mxu0 0.0
      %795 = vmatprep.subr.mxu0 0.0
      %796 = vmatpush1.msra.mxu0 0.0
      %797 = vmatprep.subr.mxu0 0.0
      %798 = vmatpush1.msra.mxu0 0.0
      %799 = vmatprep.subr.mxu0 0.0
      %800 = vmatpush1.msra.mxu0 0.0
      %801 = vmatprep.subr.mxu0 0.0
      %802 = vmatpush1.msra.mxu0 0.0
      %803 = vmatprep.subr.mxu0 0.0
      %804 = vmatpush1.msra.mxu0 0.0
      %805 = vmatprep.mubr.f32.mxu0 0.0
      %806 = vmatmul.mubr.f32.gmra.mrb[0].mxu0 %v736
      %v807 = vpop.f32.mrb[0].mxu0
      %v808 = vadd.f32 %v704, %v807
      %v809 = vpop.f32.mrb[0].mxu0
      %810 = vmatprep.mubr.f32.mxu0 0.0
      %811 = vmatmul.mubr.f32.gmra.mrb[0].mxu0 %v739
      %v812 = vpop.f32.mrb[0].mxu0
      %v813 = vadd.f32 %v709, %v812
      %v814 = vpop.f32.mrb[0].mxu0
      %815 = vdwg.mxu0
      %v816 = vadd.f32 %v651, %v808
      %v817 = vadd.f32 %v652, %v813
      %818 = vst.msk [vmem:[%s305] sm:$0xff] %vm682, %v816
      %819 = vst.msk [vmem:[%s305 + $0x8] sm:$0xff] %vm682, %v817
      %p820 = scmp.lt.s32.totalorder %s19, 1
      %s821 = scalar_select %p820, %s19, 1
      %s822 = smul.addr %s821, 2
      %s823 = smul.addr %s822, 8
      %s824 = scalar_lea.vmem %s8, %s823
      // Predicated region
      $region53: #{_forward_impl.13} parent=51 // pred_check
        %p825 = pneg %p210
      $region54: #{_forward_impl.13} parent=51 // pred_check_branch
        %827 = sbr.rel (%p825) target = $region56
      $region55: #{_forward_impl.13} parent=51 // pred_region
        _
      $region56: #{_forward_impl.13} parent=51 // pred_fallthru
        _
    $region52: #{_forward_impl.13} parent=5 // pred_fallthru
      _
    %p828 = scmp.le.s32.totalorder 2, %s14
    // Predicated region
    $region57: #{_forward_impl.13} parent=5 // pred_check
      %p829 = pneg %p828
    $region58: #{_forward_impl.13} parent=5 // pred_check_branch
      %831 = sbr.rel (%p829) target = $region60
    $region59: #{_forward_impl.13} parent=5 // pred_region
      %s832 = ssub.s32 %s14, 2
      // Predicated region
      $region61: #{_forward_impl.13} parent=59 // pred_check
        %p833 = pneg %p216
      $region62: #{_forward_impl.13} parent=59 // pred_check_branch
        %835 = sbr.rel (%p833) target = $region64
      $region63: #{_forward_impl.13} parent=59 // pred_region
        %p836 = scmp.lt.s32.totalorder %s20, 1
        %s837 = scalar_select %p836, %s20, 1
        %s838 = smul.addr %s837, 2
        %s839 = smul.addr %s838, 8
        %s840 = scalar_lea.vmem %s8, %s839
      $region64: #{_forward_impl.13} parent=59 // pred_fallthru
        _
    $region60: #{_forward_impl.13} parent=5 // pred_fallthru
      _
  $region6: #{_forward_impl.13} parent=0 // loop_footer
    %s18 = sadd.s32 1, %s14
  $region7: #{_forward_impl.13} parent=0 // loop_footer_branch
    %13 = sbr.rel target = $region3
  $region8: #{_forward_impl.13} parent=0 // loop_exit
    _

</llo_original>
